<compile_context>
chip_gen: v7x
topology: tpu7x:2x2x1
jax: 0.10.0
libtpu: 0.0.40
codegen_flags: <defaults>
</compile_context>

<pallas_src>
import functools
import math

import numpy as np
import jax
import jax.numpy as jnp
from jax import lax
from jax.experimental import pallas as pl
from jax.experimental.pallas import tpu as pltpu


# ----------------------------------------------------------------------------
# Fused Pallas kernel
# ----------------------------------------------------------------------------
def _gru_cell(gi, gh, h, H):
    """PyTorch GRU cell update given precomputed gate pre-activations."""
    r = jax.nn.sigmoid(gi[:, 0:H] + gh[:, 0:H])
    z = jax.nn.sigmoid(gi[:, H:2 * H] + gh[:, H:2 * H])
    n = jnp.tanh(gi[:, 2 * H:3 * H] + r * gh[:, 2 * H:3 * H])
    return (1.0 - z) * n + z * h


def fused_bigru_kernel(
        x_ref,                                   # (T*B, Din)   time-major flattened input
        w0_ih, w0_hh, b0_ih, b0_hh,              # (2,Din,3H) (2,H,3H) (2,1,3H) (2,1,3H)
        w1_ihf, w1_ihb, w1_hh, b1_ih, b1_hh,     # (2,H,3H) x3, (2,1,3H) x2
        fc_w, fc_b,                              # (2,H,1), (1,1)
        out_ref,                                 # (T*B, 1)
        gi_f, gi_b, hf_sc, hb_sc,                # VMEM scratch
        *, T, B, H):
    f32 = jnp.float32

    def recurrence(Whf, bhf, Whb, bhb):
        """Run fwd+bwd GRU recurrences over the gi_* scratches, write hf_sc/hb_sc."""
        h_f = jnp.zeros((B, H), f32)
        h_b = jnp.zeros((B, H), f32)
        # T is static and small: unroll at trace time (static slice starts, full
        # scheduler visibility; equivalent to lax.fori_loop(..., unroll=True)).
        for t in range(T):
            tb = T - 1 - t
            gh_f = jnp.dot(h_f, Whf, preferred_element_type=f32) + bhf
            gh_b = jnp.dot(h_b, Whb, preferred_element_type=f32) + bhb
            h_f = _gru_cell(gi_f[pl.ds(t * B, B), :], gh_f, h_f, H)
            h_b = _gru_cell(gi_b[pl.ds(tb * B, B), :], gh_b, h_b, H)
            hf_sc[pl.ds(t * B, B), :] = h_f
            hb_sc[pl.ds(tb * B, B), :] = h_b

    # ---------------- layer 0 ----------------
    # Input projections hoisted out of the recurrence: one (T*B,Din)x(Din,3H) matmul
    # per direction, biases folded in once.
    x = x_ref[...]
    gi_f[...] = jnp.dot(x, w0_ih[0], preferred_element_type=f32) + b0_ih[0]
    gi_b[...] = jnp.dot(x, w0_ih[1], preferred_element_type=f32) + b0_ih[1]
    recurrence(w0_hh[0][...] if False else w0_hh[0], b0_hh[0],
               w0_hh[1], b0_hh[1])

    # ---------------- layer 1 ----------------
    # Layer-0 outputs stay in VMEM; its concat with the bwd half is expressed as two
    # matmuls against the split halves of W_ih (no in-kernel concatenate).
    hf0 = hf_sc[...]
    hb0 = hb_sc[...]
    gi_f[...] = (jnp.dot(hf0, w1_ihf[0], preferred_element_type=f32)
                 + jnp.dot(hb0, w1_ihb[0], preferred_element_type=f32) + b1_ih[0])
    gi_b[...] = (jnp.dot(hf0, w1_ihf[1], preferred_element_type=f32)
                 + jnp.dot(hb0, w1_ihb[1], preferred_element_type=f32) + b1_ih[1])
    recurrence(w1_hh[0], b1_hh[0], w1_hh[1], b1_hh[1])

    # ---------------- FC(2H -> 1) + tanh epilogue ----------------
    y = (jnp.dot(hf_sc[...], fc_w[0], preferred_element_type=f32)
         + jnp.dot(hb_sc[...], fc_w[1], preferred_element_type=f32)
         + fc_b[...])
    out_ref[...] = jnp.tanh(y)          # single bulk store


# ----------------------------------------------------------------------------
# Wrapper around pallas_call
# ----------------------------------------------------------------------------
def bidirectional_gru_model(x, params):
    """x: (B, T, input_size) -> (B, T, 1); matches the PyTorch module semantics."""
    B, T, Din = x.shape
    H = params["w0_hh"].shape[1]

    # Single boundary transpose: time-major, flattened to (T*B, Din).
    x_tm = jnp.transpose(x, (1, 0, 2)).reshape(T * B, Din).astype(jnp.float32)

    vmem = pl.BlockSpec(memory_space=pltpu.MemorySpace.VMEM)
    kernel = functools.partial(fused_bigru_kernel, T=T, B=B, H=H)

    y = pl.pallas_call(
        kernel,
        out_shape=jax.ShapeDtypeStruct((T * B, 1), jnp.float32),
        in_specs=[vmem] * 12,
        out_specs=vmem,
        scratch_shapes=[
            pltpu.VMEM((T * B, 3 * H), jnp.float32),   # gi (fwd) — reused across layers
            pltpu.VMEM((T * B, 3 * H), jnp.float32),   # gi (bwd)
            pltpu.VMEM((T * B, H), jnp.float32),       # hidden states (fwd)
            pltpu.VMEM((T * B, H), jnp.float32),       # hidden states (bwd)
        ],
    )(x_tm,
      params["w0_ih"], params["w0_hh"], params["b0_ih"], params["b0_hh"],
      params["w1_ihf"], params["w1_ihb"], params["w1_hh"],
      params["b1_ih"], params["b1_hh"],
      params["fc_w"], params["fc_b"])

    return jnp.transpose(y.reshape(T, B, 1), (1, 0, 2))     # (B, T, 1)


# ----------------------------------------------------------------------------
# Deterministic parameter init (same shapes / init ranges as nn.GRU + nn.Linear),
# packed into the kernel's layout: weights pre-transposed to (in, 3H), directions
# stacked on a leading axis, layer-1 / FC input weights split into fwd/bwd halves.
# ----------------------------------------------------------------------------
def init_params(key, input_size, hidden_size):
    H = hidden_size
    k = 1.0 / math.sqrt(H)
    keys = iter(jax.random.split(key, 18))

    def uni(kk, shape, bound):
        return jax.random.uniform(kk, shape, jnp.float32, -bound, bound)

    w0_ih, w0_hh, b0_ih, b0_hh = [], [], [], []
    for _ in range(2):  # fwd, bwd
        w0_ih.append(uni(next(keys), (3 * H, input_size), k).T)   # (Din, 3H)
        w0_hh.append(uni(next(keys), (3 * H, H), k).T)            # (H, 3H)
        b0_ih.append(uni(next(keys), (3 * H,), k).reshape(1, -1))
        b0_hh.append(uni(next(keys), (3 * H,), k).reshape(1, -1))

    w1_ihf, w1_ihb, w1_hh, b1_ih, b1_hh = [], [], [], [], []
    for _ in range(2):  # fwd, bwd
        w_ih_t = uni(next(keys), (3 * H, 2 * H), k).T             # (2H, 3H)
        w1_ihf.append(w_ih_t[:H])                                 # rows for fwd features
        w1_ihb.append(w_ih_t[H:])                                 # rows for bwd features
        w1_hh.append(uni(next(keys), (3 * H, H), k).T)
        b1_ih.append(uni(next(keys), (3 * H,), k).reshape(1, -1))
        b1_hh.append(uni(next(keys), (3 * H,), k).reshape(1, -1))

    kf = 1.0 / math.sqrt(2 * H)
    fc_w_t = uni(next(keys), (1, 2 * H), kf).T                    # (2H, 1)
    fc_b = uni(next(keys), (1,), kf)

    return {
        "w0_ih": jnp.stack(w0_ih), "w0_hh": jnp.stack(w0_hh),
        "b0_ih": jnp.stack(b0_ih), "b0_hh": jnp.stack(b0_hh),
        "w1_ihf": jnp.stack(w1_ihf), "w1_ihb": jnp.stack(w1_ihb),
        "w1_hh": jnp.stack(w1_hh),
        "b1_ih": jnp.stack(b1_ih), "b1_hh": jnp.stack(b1_hh),
        "fc_w": jnp.stack([fc_w_t[:H], fc_w_t[H:]]),              # (2, H, 1)
        "fc_b": fc_b.reshape(1, 1),
    }


# ----------------------------------------------------------------------------
# Pure-JAX reference (identical math, PyTorch GRU semantics) for correctness check
# ----------------------------------------------------------------------------
def ref_model(x, p):
    B, T, _ = x.shape
    H = p["w0_hh"].shape[1]
    x_tm = jnp.transpose(x, (1, 0, 2)).astype(jnp.float32)       # (T, B, Din)

    def run_dir(gi_all, w_hh, b_hh, reverse):
        if reverse:
            gi_all = gi_all[::-1]

        def step(h, gi):
            gh = h @ w_hh + b_hh
            r = jax.nn.sigmoid(gi[:, :H] + gh[:, :H])
            z = jax.nn.sigmoid(gi[:, H:2 * H] + gh[:, H:2 * H])
            n = jnp.tanh(gi[:, 2 * H:] + r * gh[:, 2 * H:])
            h = (1.0 - z) * n + z * h
            return h, h

        _, outs = lax.scan(step, jnp.zeros((B, H), jnp.float32), gi_all)
        return outs[::-1] if reverse else outs

    gi_f = jnp.einsum("tbd,dg->tbg", x_tm, p["w0_ih"][0]) + p["b0_ih"][0]
    gi_b = jnp.einsum("tbd,dg->tbg", x_tm, p["w0_ih"][1]) + p["b0_ih"][1]
    hf = run_dir(gi_f, p["w0_hh"][0], p["b0_hh"][0], False)
    hb = run_dir(gi_b, p["w0_hh"][1], p["b0_hh"][1], True)

    gi_f = (jnp.einsum("tbh,hg->tbg", hf, p["w1_ihf"][0])
            + jnp.einsum("tbh,hg->tbg", hb, p["w1_ihb"][0]) + p["b1_ih"][0])
    gi_b = (jnp.einsum("tbh,hg->tbg", hf, p["w1_ihf"][1])
            + jnp.einsum("tbh,hg->tbg", hb, p["w1_ihb"][1]) + p["b1_ih"][1])
    h1f = run_dir(gi_f, p["w1_hh"][0], p["b1_hh"][0], False)
    h1b = run_dir(gi_b, p["w1_hh"][1], p["b1_hh"][1], True)

    y = jnp.tanh(jnp.einsum("tbh,ho->tbo", h1f, p["fc_w"][0])
                 + jnp.einsum("tbh,ho->tbo", h1b, p["fc_w"][1]) + p["fc_b"])
    return jnp.transpose(y, (1, 0, 2))                           # (B, T, 1)


# ----------------------------------------------------------------------------
if __name__ == "__main__":
    B, T, INPUT_SIZE, HIDDEN_SIZE = 2, 8, 16, 32

    key = jax.random.PRNGKey(0)
    key, pkey, xkey = jax.random.split(key, 3)
    params = init_params(pkey, INPUT_SIZE, HIDDEN_SIZE)
    x = jax.random.normal(xkey, (B, T, INPUT_SIZE), jnp.float32)

    out = jax.block_until_ready(bidirectional_gru_model(x, params))
    ref = jax.block_until_ready(ref_model(x, params))

    assert out.shape == (B, T, 1), out.shape
    np.testing.assert_allclose(np.asarray(out), np.asarray(ref), rtol=1e-2, atol=1e-2)

    # TODO(synk): optionally pad H/3H to 128 lanes and split fwd/bwd across v7x's two
    # TensorCores via a grid axis once real (larger) shapes are known.
    print("KERNEL_OK")
</pallas_src>

<mosaic_0001>
module attributes {stable_mosaic.version = 11 : i64} {
  func.func @fused_bigru_kernel(%arg0: memref<16x16xf32, #tpu.memory_space<vmem>>, %arg1: memref<2x16x96xf32, #tpu.memory_space<vmem>>, %arg2: memref<2x32x96xf32, #tpu.memory_space<vmem>>, %arg3: memref<2x1x96xf32, #tpu.memory_space<vmem>>, %arg4: memref<2x1x96xf32, #tpu.memory_space<vmem>>, %arg5: memref<2x32x96xf32, #tpu.memory_space<vmem>>, %arg6: memref<2x32x96xf32, #tpu.memory_space<vmem>>, %arg7: memref<2x32x96xf32, #tpu.memory_space<vmem>>, %arg8: memref<2x1x96xf32, #tpu.memory_space<vmem>>, %arg9: memref<2x1x96xf32, #tpu.memory_space<vmem>>, %arg10: memref<2x32x1xf32, #tpu.memory_space<vmem>>, %arg11: memref<1x1xf32, #tpu.memory_space<vmem>>, %arg12: memref<16x1xf32, #tpu.memory_space<vmem>>, %arg13: memref<16x96xf32, #tpu.memory_space<vmem>>, %arg14: memref<16x96xf32, #tpu.memory_space<vmem>>, %arg15: memref<16x32xf32, #tpu.memory_space<vmem>>, %arg16: memref<16x32xf32, #tpu.memory_space<vmem>>) attributes {dimension_semantics = [], scalar_prefetch = 0 : i64, scratch_operands = 4 : i64, tpu.core_type = #tpu.core_type<tc>} {
    %c0 = arith.constant 0 : index
    %c0_0 = arith.constant 0 : index
    %0 = vector.load %arg0[%c0, %c0_0] : memref<16x16xf32, #tpu.memory_space<vmem>>, vector<16x16xf32>
    %c0_1 = arith.constant 0 : index
    %c0_2 = arith.constant 0 : index
    %c0_3 = arith.constant 0 : index
    %1 = vector.load %arg1[%c0_1, %c0_2, %c0_3] : memref<2x16x96xf32, #tpu.memory_space<vmem>>, vector<1x16x96xf32>
    %2 = vector.shape_cast %1 : vector<1x16x96xf32> to vector<16x96xf32>
    %cst = arith.constant dense<0.000000e+00> : vector<16x96xf32>
    %3 = tpu.matmul %0, %2, %cst {dimension_numbers = #tpu.dot_dimension_numbers<[1], [0], [0], [1], [0, 0, 1, 1], [], []>} : vector<16x16xf32>, vector<16x96xf32>, vector<16x96xf32> -> vector<16x96xf32>
    %c0_4 = arith.constant 0 : index
    %c0_5 = arith.constant 0 : index
    %c0_6 = arith.constant 0 : index
    %4 = vector.load %arg3[%c0_4, %c0_5, %c0_6] : memref<2x1x96xf32, #tpu.memory_space<vmem>>, vector<1x1x96xf32>
    %5 = vector.shape_cast %4 : vector<1x1x96xf32> to vector<1x96xf32>
    %6 = vector.broadcast %5 : vector<1x96xf32> to vector<16x96xf32>
    %7 = arith.addf %3, %6 : vector<16x96xf32>
    %c0_7 = arith.constant 0 : index
    %c0_8 = arith.constant 0 : index
    %8 = vector.load %arg13[%c0_7, %c0_8] : memref<16x96xf32, #tpu.memory_space<vmem>>, vector<16x96xf32>
    tpu.vector_store %arg13[%c0_7, %c0_8], %7 {strides = array<i32>} : memref<16x96xf32, #tpu.memory_space<vmem>>, vector<16x96xf32>,
    %c1 = arith.constant 1 : index
    %c0_9 = arith.constant 0 : index
    %c0_10 = arith.constant 0 : index
    %9 = vector.load %arg1[%c1, %c0_9, %c0_10] : memref<2x16x96xf32, #tpu.memory_space<vmem>>, vector<1x16x96xf32>
    %10 = vector.shape_cast %9 : vector<1x16x96xf32> to vector<16x96xf32>
    %cst_11 = arith.constant dense<0.000000e+00> : vector<16x96xf32>
    %11 = tpu.matmul %0, %10, %cst_11 {dimension_numbers = #tpu.dot_dimension_numbers<[1], [0], [0], [1], [0, 0, 1, 1], [], []>} : vector<16x16xf32>, vector<16x96xf32>, vector<16x96xf32> -> vector<16x96xf32>
    %c1_12 = arith.constant 1 : index
    %c0_13 = arith.constant 0 : index
    %c0_14 = arith.constant 0 : index
    %12 = vector.load %arg3[%c1_12, %c0_13, %c0_14] : memref<2x1x96xf32, #tpu.memory_space<vmem>>, vector<1x1x96xf32>
    %13 = vector.shape_cast %12 : vector<1x1x96xf32> to vector<1x96xf32>
    %14 = vector.broadcast %13 : vector<1x96xf32> to vector<16x96xf32>
    %15 = arith.addf %11, %14 : vector<16x96xf32>
    %c0_15 = arith.constant 0 : index
    %c0_16 = arith.constant 0 : index
    %16 = vector.load %arg14[%c0_15, %c0_16] : memref<16x96xf32, #tpu.memory_space<vmem>>, vector<16x96xf32>
    tpu.vector_store %arg14[%c0_15, %c0_16], %15 {strides = array<i32>} : memref<16x96xf32, #tpu.memory_space<vmem>>, vector<16x96xf32>,
    %c0_17 = arith.constant 0 : index
    %c0_18 = arith.constant 0 : index
    %c0_19 = arith.constant 0 : index
    %17 = vector.load %arg2[%c0_17, %c0_18, %c0_19] : memref<2x32x96xf32, #tpu.memory_space<vmem>>, vector<1x32x96xf32>
    %18 = vector.shape_cast %17 : vector<1x32x96xf32> to vector<32x96xf32>
    %c0_20 = arith.constant 0 : index
    %c0_21 = arith.constant 0 : index
    %c0_22 = arith.constant 0 : index
    %19 = vector.load %arg4[%c0_20, %c0_21, %c0_22] : memref<2x1x96xf32, #tpu.memory_space<vmem>>, vector<1x1x96xf32>
    %20 = vector.shape_cast %19 : vector<1x1x96xf32> to vector<1x96xf32>
    %c1_23 = arith.constant 1 : index
    %c0_24 = arith.constant 0 : index
    %c0_25 = arith.constant 0 : index
    %21 = vector.load %arg2[%c1_23, %c0_24, %c0_25] : memref<2x32x96xf32, #tpu.memory_space<vmem>>, vector<1x32x96xf32>
    %22 = vector.shape_cast %21 : vector<1x32x96xf32> to vector<32x96xf32>
    %c1_26 = arith.constant 1 : index
    %c0_27 = arith.constant 0 : index
    %c0_28 = arith.constant 0 : index
    %23 = vector.load %arg4[%c1_26, %c0_27, %c0_28] : memref<2x1x96xf32, #tpu.memory_space<vmem>>, vector<1x1x96xf32>
    %24 = vector.shape_cast %23 : vector<1x1x96xf32> to vector<1x96xf32>
    %cst_29 = arith.constant 0.000000e+00 : f32
    %25 = vector.broadcast %cst_29 : f32 to vector<2x32xf32>
    %cst_30 = arith.constant 0.000000e+00 : f32
    %26 = vector.broadcast %cst_30 : f32 to vector<2x32xf32>
    %cst_31 = arith.constant dense<0.000000e+00> : vector<2x96xf32>
    %27 = tpu.matmul %25, %18, %cst_31 {dimension_numbers = #tpu.dot_dimension_numbers<[1], [0], [0], [1], [0, 0, 1, 1], [], []>} : vector<2x32xf32>, vector<32x96xf32>, vector<2x96xf32> -> vector<2x96xf32>
    %28 = vector.broadcast %20 : vector<1x96xf32> to vector<2x96xf32>
    %29 = arith.addf %27, %28 : vector<2x96xf32>
    %cst_32 = arith.constant dense<0.000000e+00> : vector<2x96xf32>
    %30 = tpu.matmul %26, %22, %cst_32 {dimension_numbers = #tpu.dot_dimension_numbers<[1], [0], [0], [1], [0, 0, 1, 1], [], []>} : vector<2x32xf32>, vector<32x96xf32>, vector<2x96xf32> -> vector<2x96xf32>
    %31 = vector.broadcast %24 : vector<1x96xf32> to vector<2x96xf32>
    %32 = arith.addf %30, %31 : vector<2x96xf32>
    %c0_33 = arith.constant 0 : index
    %c0_34 = arith.constant 0 : index
    %33 = vector.load %arg13[%c0_33, %c0_34] : memref<16x96xf32, #tpu.memory_space<vmem>>, vector<2x96xf32>
    %34 = vector.extract_strided_slice %33 {offsets = [0, 0], sizes = [2, 32], strides = [1, 1]} : vector<2x96xf32> to vector<2x32xf32>
    %35 = vector.extract_strided_slice %29 {offsets = [0, 0], sizes = [2, 32], strides = [1, 1]} : vector<2x96xf32> to vector<2x32xf32>
    %36 = arith.addf %34, %35 : vector<2x32xf32>
    %37 = arith.negf %36 : vector<2x32xf32>
    %38 = math.exp %37 : vector<2x32xf32>
    %cst_35 = arith.constant 1.000000e+00 : f32
    %39 = vector.broadcast %cst_35 : f32 to vector<2x32xf32>
    %40 = arith.addf %39, %38 : vector<2x32xf32>
    %41 = arith.divf %39, %40 : vector<2x32xf32>
    %42 = vector.extract_strided_slice %33 {offsets = [0, 32], sizes = [2, 32], strides = [1, 1]} : vector<2x96xf32> to vector<2x32xf32>
    %43 = vector.extract_strided_slice %29 {offsets = [0, 32], sizes = [2, 32], strides = [1, 1]} : vector<2x96xf32> to vector<2x32xf32>
    %44 = arith.addf %42, %43 : vector<2x32xf32>
    %45 = arith.negf %44 : vector<2x32xf32>
    %46 = math.exp %45 : vector<2x32xf32>
    %cst_36 = arith.constant 1.000000e+00 : f32
    %47 = vector.broadcast %cst_36 : f32 to vector<2x32xf32>
    %48 = arith.addf %47, %46 : vector<2x32xf32>
    %49 = arith.divf %47, %48 : vector<2x32xf32>
    %50 = vector.extract_strided_slice %33 {offsets = [0, 64], sizes = [2, 32], strides = [1, 1]} : vector<2x96xf32> to vector<2x32xf32>
    %51 = vector.extract_strided_slice %29 {offsets = [0, 64], sizes = [2, 32], strides = [1, 1]} : vector<2x96xf32> to vector<2x32xf32>
    %52 = arith.mulf %41, %51 : vector<2x32xf32>
    %53 = arith.addf %50, %52 : vector<2x32xf32>
    %54 = math.tanh %53 : vector<2x32xf32>
    %cst_37 = arith.constant 1.000000e+00 : f32
    %55 = vector.broadcast %cst_37 : f32 to vector<2x32xf32>
    %56 = arith.subf %55, %49 : vector<2x32xf32>
    %57 = arith.mulf %56, %54 : vector<2x32xf32>
    %58 = arith.mulf %49, %25 : vector<2x32xf32>
    %59 = arith.addf %57, %58 : vector<2x32xf32>
    %c14 = arith.constant 14 : index
    %c0_38 = arith.constant 0 : index
    %60 = vector.load %arg14[%c14, %c0_38] : memref<16x96xf32, #tpu.memory_space<vmem>>, vector<2x96xf32>
    %61 = vector.extract_strided_slice %60 {offsets = [0, 0], sizes = [2, 32], strides = [1, 1]} : vector<2x96xf32> to vector<2x32xf32>
    %62 = vector.extract_strided_slice %32 {offsets = [0, 0], sizes = [2, 32], strides = [1, 1]} : vector<2x96xf32> to vector<2x32xf32>
    %63 = arith.addf %61, %62 : vector<2x32xf32>
    %64 = arith.negf %63 : vector<2x32xf32>
    %65 = math.exp %64 : vector<2x32xf32>
    %cst_39 = arith.constant 1.000000e+00 : f32
    %66 = vector.broadcast %cst_39 : f32 to vector<2x32xf32>
    %67 = arith.addf %66, %65 : vector<2x32xf32>
    %68 = arith.divf %66, %67 : vector<2x32xf32>
    %69 = vector.extract_strided_slice %60 {offsets = [0, 32], sizes = [2, 32], strides = [1, 1]} : vector<2x96xf32> to vector<2x32xf32>
    %70 = vector.extract_strided_slice %32 {offsets = [0, 32], sizes = [2, 32], strides = [1, 1]} : vector<2x96xf32> to vector<2x32xf32>
    %71 = arith.addf %69, %70 : vector<2x32xf32>
    %72 = arith.negf %71 : vector<2x32xf32>
    %73 = math.exp %72 : vector<2x32xf32>
    %cst_40 = arith.constant 1.000000e+00 : f32
    %74 = vector.broadcast %cst_40 : f32 to vector<2x32xf32>
    %75 = arith.addf %74, %73 : vector<2x32xf32>
    %76 = arith.divf %74, %75 : vector<2x32xf32>
    %77 = vector.extract_strided_slice %60 {offsets = [0, 64], sizes = [2, 32], strides = [1, 1]} : vector<2x96xf32> to vector<2x32xf32>
    %78 = vector.extract_strided_slice %32 {offsets = [0, 64], sizes = [2, 32], strides = [1, 1]} : vector<2x96xf32> to vector<2x32xf32>
    %79 = arith.mulf %68, %78 : vector<2x32xf32>
    %80 = arith.addf %77, %79 : vector<2x32xf32>
    %81 = math.tanh %80 : vector<2x32xf32>
    %cst_41 = arith.constant 1.000000e+00 : f32
    %82 = vector.broadcast %cst_41 : f32 to vector<2x32xf32>
    %83 = arith.subf %82, %76 : vector<2x32xf32>
    %84 = arith.mulf %83, %81 : vector<2x32xf32>
    %85 = arith.mulf %76, %26 : vector<2x32xf32>
    %86 = arith.addf %84, %85 : vector<2x32xf32>
    %c0_42 = arith.constant 0 : index
    %c0_43 = arith.constant 0 : index
    %87 = vector.load %arg15[%c0_42, %c0_43] : memref<16x32xf32, #tpu.memory_space<vmem>>, vector<2x32xf32>
    tpu.vector_store %arg15[%c0_42, %c0_43], %59 {strides = array<i32>} : memref<16x32xf32, #tpu.memory_space<vmem>>, vector<2x32xf32>,
    %c14_44 = arith.constant 14 : index
    %c0_45 = arith.constant 0 : index
    %88 = vector.load %arg16[%c14_44, %c0_45] : memref<16x32xf32, #tpu.memory_space<vmem>>, vector<2x32xf32>
    tpu.vector_store %arg16[%c14_44, %c0_45], %86 {strides = array<i32>} : memref<16x32xf32, #tpu.memory_space<vmem>>, vector<2x32xf32>,
    %cst_46 = arith.constant dense<0.000000e+00> : vector<2x96xf32>
    %89 = tpu.matmul %59, %18, %cst_46 {dimension_numbers = #tpu.dot_dimension_numbers<[1], [0], [0], [1], [0, 0, 1, 1], [], []>} : vector<2x32xf32>, vector<32x96xf32>, vector<2x96xf32> -> vector<2x96xf32>
    %90 = vector.broadcast %20 : vector<1x96xf32> to vector<2x96xf32>
    %91 = arith.addf %89, %90 : vector<2x96xf32>
    %cst_47 = arith.constant dense<0.000000e+00> : vector<2x96xf32>
    %92 = tpu.matmul %86, %22, %cst_47 {dimension_numbers = #tpu.dot_dimension_numbers<[1], [0], [0], [1], [0, 0, 1, 1], [], []>} : vector<2x32xf32>, vector<32x96xf32>, vector<2x96xf32> -> vector<2x96xf32>
    %93 = vector.broadcast %24 : vector<1x96xf32> to vector<2x96xf32>
    %94 = arith.addf %92, %93 : vector<2x96xf32>
    %c2 = arith.constant 2 : index
    %c0_48 = arith.constant 0 : index
    %95 = vector.load %arg13[%c2, %c0_48] : memref<16x96xf32, #tpu.memory_space<vmem>>, vector<2x96xf32>
    %96 = vector.extract_strided_slice %95 {offsets = [0, 0], sizes = [2, 32], strides = [1, 1]} : vector<2x96xf32> to vector<2x32xf32>
    %97 = vector.extract_strided_slice %91 {offsets = [0, 0], sizes = [2, 32], strides = [1, 1]} : vector<2x96xf32> to vector<2x32xf32>
    %98 = arith.addf %96, %97 : vector<2x32xf32>
    %99 = arith.negf %98 : vector<2x32xf32>
    %100 = math.exp %99 : vector<2x32xf32>
    %cst_49 = arith.constant 1.000000e+00 : f32
    %101 = vector.broadcast %cst_49 : f32 to vector<2x32xf32>
    %102 = arith.addf %101, %100 : vector<2x32xf32>
    %103 = arith.divf %101, %102 : vector<2x32xf32>
    %104 = vector.extract_strided_slice %95 {offsets = [0, 32], sizes = [2, 32], strides = [1, 1]} : vector<2x96xf32> to vector<2x32xf32>
    %105 = vector.extract_strided_slice %91 {offsets = [0, 32], sizes = [2, 32], strides = [1, 1]} : vector<2x96xf32> to vector<2x32xf32>
    %106 = arith.addf %104, %105 : vector<2x32xf32>
    %107 = arith.negf %106 : vector<2x32xf32>
    %108 = math.exp %107 : vector<2x32xf32>
    %cst_50 = arith.constant 1.000000e+00 : f32
    %109 = vector.broadcast %cst_50 : f32 to vector<2x32xf32>
    %110 = arith.addf %109, %108 : vector<2x32xf32>
    %111 = arith.divf %109, %110 : vector<2x32xf32>
    %112 = vector.extract_strided_slice %95 {offsets = [0, 64], sizes = [2, 32], strides = [1, 1]} : vector<2x96xf32> to vector<2x32xf32>
    %113 = vector.extract_strided_slice %91 {offsets = [0, 64], sizes = [2, 32], strides = [1, 1]} : vector<2x96xf32> to vector<2x32xf32>
    %114 = arith.mulf %103, %113 : vector<2x32xf32>
    %115 = arith.addf %112, %114 : vector<2x32xf32>
    %116 = math.tanh %115 : vector<2x32xf32>
    %cst_51 = arith.constant 1.000000e+00 : f32
    %117 = vector.broadcast %cst_51 : f32 to vector<2x32xf32>
    %118 = arith.subf %117, %111 : vector<2x32xf32>
    %119 = arith.mulf %118, %116 : vector<2x32xf32>
    %120 = arith.mulf %111, %59 : vector<2x32xf32>
    %121 = arith.addf %119, %120 : vector<2x32xf32>
    %c12 = arith.constant 12 : index
    %c0_52 = arith.constant 0 : index
    %122 = vector.load %arg14[%c12, %c0_52] : memref<16x96xf32, #tpu.memory_space<vmem>>, vector<2x96xf32>
    %123 = vector.extract_strided_slice %122 {offsets = [0, 0], sizes = [2, 32], strides = [1, 1]} : vector<2x96xf32> to vector<2x32xf32>
    %124 = vector.extract_strided_slice %94 {offsets = [0, 0], sizes = [2, 32], strides = [1, 1]} : vector<2x96xf32> to vector<2x32xf32>
    %125 = arith.addf %123, %124 : vector<2x32xf32>
    %126 = arith.negf %125 : vector<2x32xf32>
    %127 = math.exp %126 : vector<2x32xf32>
    %cst_53 = arith.constant 1.000000e+00 : f32
    %128 = vector.broadcast %cst_53 : f32 to vector<2x32xf32>
    %129 = arith.addf %128, %127 : vector<2x32xf32>
    %130 = arith.divf %128, %129 : vector<2x32xf32>
    %131 = vector.extract_strided_slice %122 {offsets = [0, 32], sizes = [2, 32], strides = [1, 1]} : vector<2x96xf32> to vector<2x32xf32>
    %132 = vector.extract_strided_slice %94 {offsets = [0, 32], sizes = [2, 32], strides = [1, 1]} : vector<2x96xf32> to vector<2x32xf32>
    %133 = arith.addf %131, %132 : vector<2x32xf32>
    %134 = arith.negf %133 : vector<2x32xf32>
    %135 = math.exp %134 : vector<2x32xf32>
    %cst_54 = arith.constant 1.000000e+00 : f32
    %136 = vector.broadcast %cst_54 : f32 to vector<2x32xf32>
    %137 = arith.addf %136, %135 : vector<2x32xf32>
    %138 = arith.divf %136, %137 : vector<2x32xf32>
    %139 = vector.extract_strided_slice %122 {offsets = [0, 64], sizes = [2, 32], strides = [1, 1]} : vector<2x96xf32> to vector<2x32xf32>
    %140 = vector.extract_strided_slice %94 {offsets = [0, 64], sizes = [2, 32], strides = [1, 1]} : vector<2x96xf32> to vector<2x32xf32>
    %141 = arith.mulf %130, %140 : vector<2x32xf32>
    %142 = arith.addf %139, %141 : vector<2x32xf32>
    %143 = math.tanh %142 : vector<2x32xf32>
    %cst_55 = arith.constant 1.000000e+00 : f32
    %144 = vector.broadcast %cst_55 : f32 to vector<2x32xf32>
    %145 = arith.subf %144, %138 : vector<2x32xf32>
    %146 = arith.mulf %145, %143 : vector<2x32xf32>
    %147 = arith.mulf %138, %86 : vector<2x32xf32>
    %148 = arith.addf %146, %147 : vector<2x32xf32>
    %c2_56 = arith.constant 2 : index
    %c0_57 = arith.constant 0 : index
    %149 = vector.load %arg15[%c2_56, %c0_57] : memref<16x32xf32, #tpu.memory_space<vmem>>, vector<2x32xf32>
    tpu.vector_store %arg15[%c2_56, %c0_57], %121 {strides = array<i32>} : memref<16x32xf32, #tpu.memory_space<vmem>>, vector<2x32xf32>,
    %c12_58 = arith.constant 12 : index
    %c0_59 = arith.constant 0 : index
    %150 = vector.load %arg16[%c12_58, %c0_59] : memref<16x32xf32, #tpu.memory_space<vmem>>, vector<2x32xf32>
    tpu.vector_store %arg16[%c12_58, %c0_59], %148 {strides = array<i32>} : memref<16x32xf32, #tpu.memory_space<vmem>>, vector<2x32xf32>,
    %cst_60 = arith.constant dense<0.000000e+00> : vector<2x96xf32>
    %151 = tpu.matmul %121, %18, %cst_60 {dimension_numbers = #tpu.dot_dimension_numbers<[1], [0], [0], [1], [0, 0, 1, 1], [], []>} : vector<2x32xf32>, vector<32x96xf32>, vector<2x96xf32> -> vector<2x96xf32>
    %152 = vector.broadcast %20 : vector<1x96xf32> to vector<2x96xf32>
    %153 = arith.addf %151, %152 : vector<2x96xf32>
    %cst_61 = arith.constant dense<0.000000e+00> : vector<2x96xf32>
    %154 = tpu.matmul %148, %22, %cst_61 {dimension_numbers = #tpu.dot_dimension_numbers<[1], [0], [0], [1], [0, 0, 1, 1], [], []>} : vector<2x32xf32>, vector<32x96xf32>, vector<2x96xf32> -> vector<2x96xf32>
    %155 = vector.broadcast %24 : vector<1x96xf32> to vector<2x96xf32>
    %156 = arith.addf %154, %155 : vector<2x96xf32>
    %c4 = arith.constant 4 : index
    %c0_62 = arith.constant 0 : index
    %157 = vector.load %arg13[%c4, %c0_62] : memref<16x96xf32, #tpu.memory_space<vmem>>, vector<2x96xf32>
    %158 = vector.extract_strided_slice %157 {offsets = [0, 0], sizes = [2, 32], strides = [1, 1]} : vector<2x96xf32> to vector<2x32xf32>
    %159 = vector.extract_strided_slice %153 {offsets = [0, 0], sizes = [2, 32], strides = [1, 1]} : vector<2x96xf32> to vector<2x32xf32>
    %160 = arith.addf %158, %159 : vector<2x32xf32>
    %161 = arith.negf %160 : vector<2x32xf32>
    %162 = math.exp %161 : vector<2x32xf32>
    %cst_63 = arith.constant 1.000000e+00 : f32
    %163 = vector.broadcast %cst_63 : f32 to vector<2x32xf32>
    %164 = arith.addf %163, %162 : vector<2x32xf32>
    %165 = arith.divf %163, %164 : vector<2x32xf32>
    %166 = vector.extract_strided_slice %157 {offsets = [0, 32], sizes = [2, 32], strides = [1, 1]} : vector<2x96xf32> to vector<2x32xf32>
    %167 = vector.extract_strided_slice %153 {offsets = [0, 32], sizes = [2, 32], strides = [1, 1]} : vector<2x96xf32> to vector<2x32xf32>
    %168 = arith.addf %166, %167 : vector<2x32xf32>
    %169 = arith.negf %168 : vector<2x32xf32>
    %170 = math.exp %169 : vector<2x32xf32>
    %cst_64 = arith.constant 1.000000e+00 : f32
    %171 = vector.broadcast %cst_64 : f32 to vector<2x32xf32>
    %172 = arith.addf %171, %170 : vector<2x32xf32>
    %173 = arith.divf %171, %172 : vector<2x32xf32>
    %174 = vector.extract_strided_slice %157 {offsets = [0, 64], sizes = [2, 32], strides = [1, 1]} : vector<2x96xf32> to vector<2x32xf32>
    %175 = vector.extract_strided_slice %153 {offsets = [0, 64], sizes = [2, 32], strides = [1, 1]} : vector<2x96xf32> to vector<2x32xf32>
    %176 = arith.mulf %165, %175 : vector<2x32xf32>
    %177 = arith.addf %174, %176 : vector<2x32xf32>
    %178 = math.tanh %177 : vector<2x32xf32>
    %cst_65 = arith.constant 1.000000e+00 : f32
    %179 = vector.broadcast %cst_65 : f32 to vector<2x32xf32>
    %180 = arith.subf %179, %173 : vector<2x32xf32>
    %181 = arith.mulf %180, %178 : vector<2x32xf32>
    %182 = arith.mulf %173, %121 : vector<2x32xf32>
    %183 = arith.addf %181, %182 : vector<2x32xf32>
    %c10 = arith.constant 10 : index
    %c0_66 = arith.constant 0 : index
    %184 = vector.load %arg14[%c10, %c0_66] : memref<16x96xf32, #tpu.memory_space<vmem>>, vector<2x96xf32>
    %185 = vector.extract_strided_slice %184 {offsets = [0, 0], sizes = [2, 32], strides = [1, 1]} : vector<2x96xf32> to vector<2x32xf32>
    %186 = vector.extract_strided_slice %156 {offsets = [0, 0], sizes = [2, 32], strides = [1, 1]} : vector<2x96xf32> to vector<2x32xf32>
    %187 = arith.addf %185, %186 : vector<2x32xf32>
    %188 = arith.negf %187 : vector<2x32xf32>
    %189 = math.exp %188 : vector<2x32xf32>
    %cst_67 = arith.constant 1.000000e+00 : f32
    %190 = vector.broadcast %cst_67 : f32 to vector<2x32xf32>
    %191 = arith.addf %190, %189 : vector<2x32xf32>
    %192 = arith.divf %190, %191 : vector<2x32xf32>
    %193 = vector.extract_strided_slice %184 {offsets = [0, 32], sizes = [2, 32], strides = [1, 1]} : vector<2x96xf32> to vector<2x32xf32>
    %194 = vector.extract_strided_slice %156 {offsets = [0, 32], sizes = [2, 32], strides = [1, 1]} : vector<2x96xf32> to vector<2x32xf32>
    %195 = arith.addf %193, %194 : vector<2x32xf32>
    %196 = arith.negf %195 : vector<2x32xf32>
    %197 = math.exp %196 : vector<2x32xf32>
    %cst_68 = arith.constant 1.000000e+00 : f32
    %198 = vector.broadcast %cst_68 : f32 to vector<2x32xf32>
    %199 = arith.addf %198, %197 : vector<2x32xf32>
    %200 = arith.divf %198, %199 : vector<2x32xf32>
    %201 = vector.extract_strided_slice %184 {offsets = [0, 64], sizes = [2, 32], strides = [1, 1]} : vector<2x96xf32> to vector<2x32xf32>
    %202 = vector.extract_strided_slice %156 {offsets = [0, 64], sizes = [2, 32], strides = [1, 1]} : vector<2x96xf32> to vector<2x32xf32>
    %203 = arith.mulf %192, %202 : vector<2x32xf32>
    %204 = arith.addf %201, %203 : vector<2x32xf32>
    %205 = math.tanh %204 : vector<2x32xf32>
    %cst_69 = arith.constant 1.000000e+00 : f32
    %206 = vector.broadcast %cst_69 : f32 to vector<2x32xf32>
    %207 = arith.subf %206, %200 : vector<2x32xf32>
    %208 = arith.mulf %207, %205 : vector<2x32xf32>
    %209 = arith.mulf %200, %148 : vector<2x32xf32>
    %210 = arith.addf %208, %209 : vector<2x32xf32>
    %c4_70 = arith.constant 4 : index
    %c0_71 = arith.constant 0 : index
    %211 = vector.load %arg15[%c4_70, %c0_71] : memref<16x32xf32, #tpu.memory_space<vmem>>, vector<2x32xf32>
    tpu.vector_store %arg15[%c4_70, %c0_71], %183 {strides = array<i32>} : memref<16x32xf32, #tpu.memory_space<vmem>>, vector<2x32xf32>,
    %c10_72 = arith.constant 10 : index
    %c0_73 = arith.constant 0 : index
    %212 = vector.load %arg16[%c10_72, %c0_73] : memref<16x32xf32, #tpu.memory_space<vmem>>, vector<2x32xf32>
    tpu.vector_store %arg16[%c10_72, %c0_73], %210 {strides = array<i32>} : memref<16x32xf32, #tpu.memory_space<vmem>>, vector<2x32xf32>,
    %cst_74 = arith.constant dense<0.000000e+00> : vector<2x96xf32>
    %213 = tpu.matmul %183, %18, %cst_74 {dimension_numbers = #tpu.dot_dimension_numbers<[1], [0], [0], [1], [0, 0, 1, 1], [], []>} : vector<2x32xf32>, vector<32x96xf32>, vector<2x96xf32> -> vector<2x96xf32>
    %214 = vector.broadcast %20 : vector<1x96xf32> to vector<2x96xf32>
    %215 = arith.addf %213, %214 : vector<2x96xf32>
    %cst_75 = arith.constant dense<0.000000e+00> : vector<2x96xf32>
    %216 = tpu.matmul %210, %22, %cst_75 {dimension_numbers = #tpu.dot_dimension_numbers<[1], [0], [0], [1], [0, 0, 1, 1], [], []>} : vector<2x32xf32>, vector<32x96xf32>, vector<2x96xf32> -> vector<2x96xf32>
    %217 = vector.broadcast %24 : vector<1x96xf32> to vector<2x96xf32>
    %218 = arith.addf %216, %217 : vector<2x96xf32>
    %c6 = arith.constant 6 : index
    %c0_76 = arith.constant 0 : index
    %219 = vector.load %arg13[%c6, %c0_76] : memref<16x96xf32, #tpu.memory_space<vmem>>, vector<2x96xf32>
    %220 = vector.extract_strided_slice %219 {offsets = [0, 0], sizes = [2, 32], strides = [1, 1]} : vector<2x96xf32> to vector<2x32xf32>
    %221 = vector.extract_strided_slice %215 {offsets = [0, 0], sizes = [2, 32], strides = [1, 1]} : vector<2x96xf32> to vector<2x32xf32>
    %222 = arith.addf %220, %221 : vector<2x32xf32>
    %223 = arith.negf %222 : vector<2x32xf32>
    %224 = math.exp %223 : vector<2x32xf32>
    %cst_77 = arith.constant 1.000000e+00 : f32
    %225 = vector.broadcast %cst_77 : f32 to vector<2x32xf32>
    %226 = arith.addf %225, %224 : vector<2x32xf32>
    %227 = arith.divf %225, %226 : vector<2x32xf32>
    %228 = vector.extract_strided_slice %219 {offsets = [0, 32], sizes = [2, 32], strides = [1, 1]} : vector<2x96xf32> to vector<2x32xf32>
    %229 = vector.extract_strided_slice %215 {offsets = [0, 32], sizes = [2, 32], strides = [1, 1]} : vector<2x96xf32> to vector<2x32xf32>
    %230 = arith.addf %228, %229 : vector<2x32xf32>
    %231 = arith.negf %230 : vector<2x32xf32>
    %232 = math.exp %231 : vector<2x32xf32>
    %cst_78 = arith.constant 1.000000e+00 : f32
    %233 = vector.broadcast %cst_78 : f32 to vector<2x32xf32>
    %234 = arith.addf %233, %232 : vector<2x32xf32>
    %235 = arith.divf %233, %234 : vector<2x32xf32>
    %236 = vector.extract_strided_slice %219 {offsets = [0, 64], sizes = [2, 32], strides = [1, 1]} : vector<2x96xf32> to vector<2x32xf32>
    %237 = vector.extract_strided_slice %215 {offsets = [0, 64], sizes = [2, 32], strides = [1, 1]} : vector<2x96xf32> to vector<2x32xf32>
    %238 = arith.mulf %227, %237 : vector<2x32xf32>
    %239 = arith.addf %236, %238 : vector<2x32xf32>
    %240 = math.tanh %239 : vector<2x32xf32>
    %cst_79 = arith.constant 1.000000e+00 : f32
    %241 = vector.broadcast %cst_79 : f32 to vector<2x32xf32>
    %242 = arith.subf %241, %235 : vector<2x32xf32>
    %243 = arith.mulf %242, %240 : vector<2x32xf32>
    %244 = arith.mulf %235, %183 : vector<2x32xf32>
    %245 = arith.addf %243, %244 : vector<2x32xf32>
    %c8 = arith.constant 8 : index
    %c0_80 = arith.constant 0 : index
    %246 = vector.load %arg14[%c8, %c0_80] : memref<16x96xf32, #tpu.memory_space<vmem>>, vector<2x96xf32>
    %247 = vector.extract_strided_slice %246 {offsets = [0, 0], sizes = [2, 32], strides = [1, 1]} : vector<2x96xf32> to vector<2x32xf32>
    %248 = vector.extract_strided_slice %218 {offsets = [0, 0], sizes = [2, 32], strides = [1, 1]} : vector<2x96xf32> to vector<2x32xf32>
    %249 = arith.addf %247, %248 : vector<2x32xf32>
    %250 = arith.negf %249 : vector<2x32xf32>
    %251 = math.exp %250 : vector<2x32xf32>
    %cst_81 = arith.constant 1.000000e+00 : f32
    %252 = vector.broadcast %cst_81 : f32 to vector<2x32xf32>
    %253 = arith.addf %252, %251 : vector<2x32xf32>
    %254 = arith.divf %252, %253 : vector<2x32xf32>
    %255 = vector.extract_strided_slice %246 {offsets = [0, 32], sizes = [2, 32], strides = [1, 1]} : vector<2x96xf32> to vector<2x32xf32>
    %256 = vector.extract_strided_slice %218 {offsets = [0, 32], sizes = [2, 32], strides = [1, 1]} : vector<2x96xf32> to vector<2x32xf32>
    %257 = arith.addf %255, %256 : vector<2x32xf32>
    %258 = arith.negf %257 : vector<2x32xf32>
    %259 = math.exp %258 : vector<2x32xf32>
    %cst_82 = arith.constant 1.000000e+00 : f32
    %260 = vector.broadcast %cst_82 : f32 to vector<2x32xf32>
    %261 = arith.addf %260, %259 : vector<2x32xf32>
    %262 = arith.divf %260, %261 : vector<2x32xf32>
    %263 = vector.extract_strided_slice %246 {offsets = [0, 64], sizes = [2, 32], strides = [1, 1]} : vector<2x96xf32> to vector<2x32xf32>
    %264 = vector.extract_strided_slice %218 {offsets = [0, 64], sizes = [2, 32], strides = [1, 1]} : vector<2x96xf32> to vector<2x32xf32>
    %265 = arith.mulf %254, %264 : vector<2x32xf32>
    %266 = arith.addf %263, %265 : vector<2x32xf32>
    %267 = math.tanh %266 : vector<2x32xf32>
    %cst_83 = arith.constant 1.000000e+00 : f32
    %268 = vector.broadcast %cst_83 : f32 to vector<2x32xf32>
    %269 = arith.subf %268, %262 : vector<2x32xf32>
    %270 = arith.mulf %269, %267 : vector<2x32xf32>
    %271 = arith.mulf %262, %210 : vector<2x32xf32>
    %272 = arith.addf %270, %271 : vector<2x32xf32>
    %c6_84 = arith.constant 6 : index
    %c0_85 = arith.constant 0 : index
    %273 = vector.load %arg15[%c6_84, %c0_85] : memref<16x32xf32, #tpu.memory_space<vmem>>, vector<2x32xf32>
    tpu.vector_store %arg15[%c6_84, %c0_85], %245 {strides = array<i32>} : memref<16x32xf32, #tpu.memory_space<vmem>>, vector<2x32xf32>,
    %c8_86 = arith.constant 8 : index
    %c0_87 = arith.constant 0 : index
    %274 = vector.load %arg16[%c8_86, %c0_87] : memref<16x32xf32, #tpu.memory_space<vmem>>, vector<2x32xf32>
    tpu.vector_store %arg16[%c8_86, %c0_87], %272 {strides = array<i32>} : memref<16x32xf32, #tpu.memory_space<vmem>>, vector<2x32xf32>,
    %cst_88 = arith.constant dense<0.000000e+00> : vector<2x96xf32>
    %275 = tpu.matmul %245, %18, %cst_88 {dimension_numbers = #tpu.dot_dimension_numbers<[1], [0], [0], [1], [0, 0, 1, 1], [], []>} : vector<2x32xf32>, vector<32x96xf32>, vector<2x96xf32> -> vector<2x96xf32>
    %276 = vector.broadcast %20 : vector<1x96xf32> to vector<2x96xf32>
    %277 = arith.addf %275, %276 : vector<2x96xf32>
    %cst_89 = arith.constant dense<0.000000e+00> : vector<2x96xf32>
    %278 = tpu.matmul %272, %22, %cst_89 {dimension_numbers = #tpu.dot_dimension_numbers<[1], [0], [0], [1], [0, 0, 1, 1], [], []>} : vector<2x32xf32>, vector<32x96xf32>, vector<2x96xf32> -> vector<2x96xf32>
    %279 = vector.broadcast %24 : vector<1x96xf32> to vector<2x96xf32>
    %280 = arith.addf %278, %279 : vector<2x96xf32>
    %c8_90 = arith.constant 8 : index
    %c0_91 = arith.constant 0 : index
    %281 = vector.load %arg13[%c8_90, %c0_91] : memref<16x96xf32, #tpu.memory_space<vmem>>, vector<2x96xf32>
    %282 = vector.extract_strided_slice %281 {offsets = [0, 0], sizes = [2, 32], strides = [1, 1]} : vector<2x96xf32> to vector<2x32xf32>
    %283 = vector.extract_strided_slice %277 {offsets = [0, 0], sizes = [2, 32], strides = [1, 1]} : vector<2x96xf32> to vector<2x32xf32>
    %284 = arith.addf %282, %283 : vector<2x32xf32>
    %285 = arith.negf %284 : vector<2x32xf32>
    %286 = math.exp %285 : vector<2x32xf32>
    %cst_92 = arith.constant 1.000000e+00 : f32
    %287 = vector.broadcast %cst_92 : f32 to vector<2x32xf32>
    %288 = arith.addf %287, %286 : vector<2x32xf32>
    %289 = arith.divf %287, %288 : vector<2x32xf32>
    %290 = vector.extract_strided_slice %281 {offsets = [0, 32], sizes = [2, 32], strides = [1, 1]} : vector<2x96xf32> to vector<2x32xf32>
    %291 = vector.extract_strided_slice %277 {offsets = [0, 32], sizes = [2, 32], strides = [1, 1]} : vector<2x96xf32> to vector<2x32xf32>
    %292 = arith.addf %290, %291 : vector<2x32xf32>
    %293 = arith.negf %292 : vector<2x32xf32>
    %294 = math.exp %293 : vector<2x32xf32>
    %cst_93 = arith.constant 1.000000e+00 : f32
    %295 = vector.broadcast %cst_93 : f32 to vector<2x32xf32>
    %296 = arith.addf %295, %294 : vector<2x32xf32>
    %297 = arith.divf %295, %296 : vector<2x32xf32>
    %298 = vector.extract_strided_slice %281 {offsets = [0, 64], sizes = [2, 32], strides = [1, 1]} : vector<2x96xf32> to vector<2x32xf32>
    %299 = vector.extract_strided_slice %277 {offsets = [0, 64], sizes = [2, 32], strides = [1, 1]} : vector<2x96xf32> to vector<2x32xf32>
    %300 = arith.mulf %289, %299 : vector<2x32xf32>
    %301 = arith.addf %298, %300 : vector<2x32xf32>
    %302 = math.tanh %301 : vector<2x32xf32>
    %cst_94 = arith.constant 1.000000e+00 : f32
    %303 = vector.broadcast %cst_94 : f32 to vector<2x32xf32>
    %304 = arith.subf %303, %297 : vector<2x32xf32>
    %305 = arith.mulf %304, %302 : vector<2x32xf32>
    %306 = arith.mulf %297, %245 : vector<2x32xf32>
    %307 = arith.addf %305, %306 : vector<2x32xf32>
    %c6_95 = arith.constant 6 : index
    %c0_96 = arith.constant 0 : index
    %308 = vector.load %arg14[%c6_95, %c0_96] : memref<16x96xf32, #tpu.memory_space<vmem>>, vector<2x96xf32>
    %309 = vector.extract_strided_slice %308 {offsets = [0, 0], sizes = [2, 32], strides = [1, 1]} : vector<2x96xf32> to vector<2x32xf32>
    %310 = vector.extract_strided_slice %280 {offsets = [0, 0], sizes = [2, 32], strides = [1, 1]} : vector<2x96xf32> to vector<2x32xf32>
    %311 = arith.addf %309, %310 : vector<2x32xf32>
    %312 = arith.negf %311 : vector<2x32xf32>
    %313 = math.exp %312 : vector<2x32xf32>
    %cst_97 = arith.constant 1.000000e+00 : f32
    %314 = vector.broadcast %cst_97 : f32 to vector<2x32xf32>
    %315 = arith.addf %314, %313 : vector<2x32xf32>
    %316 = arith.divf %314, %315 : vector<2x32xf32>
    %317 = vector.extract_strided_slice %308 {offsets = [0, 32], sizes = [2, 32], strides = [1, 1]} : vector<2x96xf32> to vector<2x32xf32>
    %318 = vector.extract_strided_slice %280 {offsets = [0, 32], sizes = [2, 32], strides = [1, 1]} : vector<2x96xf32> to vector<2x32xf32>
    %319 = arith.addf %317, %318 : vector<2x32xf32>
    %320 = arith.negf %319 : vector<2x32xf32>
    %321 = math.exp %320 : vector<2x32xf32>
    %cst_98 = arith.constant 1.000000e+00 : f32
    %322 = vector.broadcast %cst_98 : f32 to vector<2x32xf32>
    %323 = arith.addf %322, %321 : vector<2x32xf32>
    %324 = arith.divf %322, %323 : vector<2x32xf32>
    %325 = vector.extract_strided_slice %308 {offsets = [0, 64], sizes = [2, 32], strides = [1, 1]} : vector<2x96xf32> to vector<2x32xf32>
    %326 = vector.extract_strided_slice %280 {offsets = [0, 64], sizes = [2, 32], strides = [1, 1]} : vector<2x96xf32> to vector<2x32xf32>
    %327 = arith.mulf %316, %326 : vector<2x32xf32>
    %328 = arith.addf %325, %327 : vector<2x32xf32>
    %329 = math.tanh %328 : vector<2x32xf32>
    %cst_99 = arith.constant 1.000000e+00 : f32
    %330 = vector.broadcast %cst_99 : f32 to vector<2x32xf32>
    %331 = arith.subf %330, %324 : vector<2x32xf32>
    %332 = arith.mulf %331, %329 : vector<2x32xf32>
    %333 = arith.mulf %324, %272 : vector<2x32xf32>
    %334 = arith.addf %332, %333 : vector<2x32xf32>
    %c8_100 = arith.constant 8 : index
    %c0_101 = arith.constant 0 : index
    %335 = vector.load %arg15[%c8_100, %c0_101] : memref<16x32xf32, #tpu.memory_space<vmem>>, vector<2x32xf32>
    tpu.vector_store %arg15[%c8_100, %c0_101], %307 {strides = array<i32>} : memref<16x32xf32, #tpu.memory_space<vmem>>, vector<2x32xf32>,
    %c6_102 = arith.constant 6 : index
    %c0_103 = arith.constant 0 : index
    %336 = vector.load %arg16[%c6_102, %c0_103] : memref<16x32xf32, #tpu.memory_space<vmem>>, vector<2x32xf32>
    tpu.vector_store %arg16[%c6_102, %c0_103], %334 {strides = array<i32>} : memref<16x32xf32, #tpu.memory_space<vmem>>, vector<2x32xf32>,
    %cst_104 = arith.constant dense<0.000000e+00> : vector<2x96xf32>
    %337 = tpu.matmul %307, %18, %cst_104 {dimension_numbers = #tpu.dot_dimension_numbers<[1], [0], [0], [1], [0, 0, 1, 1], [], []>} : vector<2x32xf32>, vector<32x96xf32>, vector<2x96xf32> -> vector<2x96xf32>
    %338 = vector.broadcast %20 : vector<1x96xf32> to vector<2x96xf32>
    %339 = arith.addf %337, %338 : vector<2x96xf32>
    %cst_105 = arith.constant dense<0.000000e+00> : vector<2x96xf32>
    %340 = tpu.matmul %334, %22, %cst_105 {dimension_numbers = #tpu.dot_dimension_numbers<[1], [0], [0], [1], [0, 0, 1, 1], [], []>} : vector<2x32xf32>, vector<32x96xf32>, vector<2x96xf32> -> vector<2x96xf32>
    %341 = vector.broadcast %24 : vector<1x96xf32> to vector<2x96xf32>
    %342 = arith.addf %340, %341 : vector<2x96xf32>
    %c10_106 = arith.constant 10 : index
    %c0_107 = arith.constant 0 : index
    %343 = vector.load %arg13[%c10_106, %c0_107] : memref<16x96xf32, #tpu.memory_space<vmem>>, vector<2x96xf32>
    %344 = vector.extract_strided_slice %343 {offsets = [0, 0], sizes = [2, 32], strides = [1, 1]} : vector<2x96xf32> to vector<2x32xf32>
    %345 = vector.extract_strided_slice %339 {offsets = [0, 0], sizes = [2, 32], strides = [1, 1]} : vector<2x96xf32> to vector<2x32xf32>
    %346 = arith.addf %344, %345 : vector<2x32xf32>
    %347 = arith.negf %346 : vector<2x32xf32>
    %348 = math.exp %347 : vector<2x32xf32>
    %cst_108 = arith.constant 1.000000e+00 : f32
    %349 = vector.broadcast %cst_108 : f32 to vector<2x32xf32>
    %350 = arith.addf %349, %348 : vector<2x32xf32>
    %351 = arith.divf %349, %350 : vector<2x32xf32>
    %352 = vector.extract_strided_slice %343 {offsets = [0, 32], sizes = [2, 32], strides = [1, 1]} : vector<2x96xf32> to vector<2x32xf32>
    %353 = vector.extract_strided_slice %339 {offsets = [0, 32], sizes = [2, 32], strides = [1, 1]} : vector<2x96xf32> to vector<2x32xf32>
    %354 = arith.addf %352, %353 : vector<2x32xf32>
    %355 = arith.negf %354 : vector<2x32xf32>
    %356 = math.exp %355 : vector<2x32xf32>
    %cst_109 = arith.constant 1.000000e+00 : f32
    %357 = vector.broadcast %cst_109 : f32 to vector<2x32xf32>
    %358 = arith.addf %357, %356 : vector<2x32xf32>
    %359 = arith.divf %357, %358 : vector<2x32xf32>
    %360 = vector.extract_strided_slice %343 {offsets = [0, 64], sizes = [2, 32], strides = [1, 1]} : vector<2x96xf32> to vector<2x32xf32>
    %361 = vector.extract_strided_slice %339 {offsets = [0, 64], sizes = [2, 32], strides = [1, 1]} : vector<2x96xf32> to vector<2x32xf32>
    %362 = arith.mulf %351, %361 : vector<2x32xf32>
    %363 = arith.addf %360, %362 : vector<2x32xf32>
    %364 = math.tanh %363 : vector<2x32xf32>
    %cst_110 = arith.constant 1.000000e+00 : f32
    %365 = vector.broadcast %cst_110 : f32 to vector<2x32xf32>
    %366 = arith.subf %365, %359 : vector<2x32xf32>
    %367 = arith.mulf %366, %364 : vector<2x32xf32>
    %368 = arith.mulf %359, %307 : vector<2x32xf32>
    %369 = arith.addf %367, %368 : vector<2x32xf32>
    %c4_111 = arith.constant 4 : index
    %c0_112 = arith.constant 0 : index
    %370 = vector.load %arg14[%c4_111, %c0_112] : memref<16x96xf32, #tpu.memory_space<vmem>>, vector<2x96xf32>
    %371 = vector.extract_strided_slice %370 {offsets = [0, 0], sizes = [2, 32], strides = [1, 1]} : vector<2x96xf32> to vector<2x32xf32>
    %372 = vector.extract_strided_slice %342 {offsets = [0, 0], sizes = [2, 32], strides = [1, 1]} : vector<2x96xf32> to vector<2x32xf32>
    %373 = arith.addf %371, %372 : vector<2x32xf32>
    %374 = arith.negf %373 : vector<2x32xf32>
    %375 = math.exp %374 : vector<2x32xf32>
    %cst_113 = arith.constant 1.000000e+00 : f32
    %376 = vector.broadcast %cst_113 : f32 to vector<2x32xf32>
    %377 = arith.addf %376, %375 : vector<2x32xf32>
    %378 = arith.divf %376, %377 : vector<2x32xf32>
    %379 = vector.extract_strided_slice %370 {offsets = [0, 32], sizes = [2, 32], strides = [1, 1]} : vector<2x96xf32> to vector<2x32xf32>
    %380 = vector.extract_strided_slice %342 {offsets = [0, 32], sizes = [2, 32], strides = [1, 1]} : vector<2x96xf32> to vector<2x32xf32>
    %381 = arith.addf %379, %380 : vector<2x32xf32>
    %382 = arith.negf %381 : vector<2x32xf32>
    %383 = math.exp %382 : vector<2x32xf32>
    %cst_114 = arith.constant 1.000000e+00 : f32
    %384 = vector.broadcast %cst_114 : f32 to vector<2x32xf32>
    %385 = arith.addf %384, %383 : vector<2x32xf32>
    %386 = arith.divf %384, %385 : vector<2x32xf32>
    %387 = vector.extract_strided_slice %370 {offsets = [0, 64], sizes = [2, 32], strides = [1, 1]} : vector<2x96xf32> to vector<2x32xf32>
    %388 = vector.extract_strided_slice %342 {offsets = [0, 64], sizes = [2, 32], strides = [1, 1]} : vector<2x96xf32> to vector<2x32xf32>
    %389 = arith.mulf %378, %388 : vector<2x32xf32>
    %390 = arith.addf %387, %389 : vector<2x32xf32>
    %391 = math.tanh %390 : vector<2x32xf32>
    %cst_115 = arith.constant 1.000000e+00 : f32
    %392 = vector.broadcast %cst_115 : f32 to vector<2x32xf32>
    %393 = arith.subf %392, %386 : vector<2x32xf32>
    %394 = arith.mulf %393, %391 : vector<2x32xf32>
    %395 = arith.mulf %386, %334 : vector<2x32xf32>
    %396 = arith.addf %394, %395 : vector<2x32xf32>
    %c10_116 = arith.constant 10 : index
    %c0_117 = arith.constant 0 : index
    %397 = vector.load %arg15[%c10_116, %c0_117] : memref<16x32xf32, #tpu.memory_space<vmem>>, vector<2x32xf32>
    tpu.vector_store %arg15[%c10_116, %c0_117], %369 {strides = array<i32>} : memref<16x32xf32, #tpu.memory_space<vmem>>, vector<2x32xf32>,
    %c4_118 = arith.constant 4 : index
    %c0_119 = arith.constant 0 : index
    %398 = vector.load %arg16[%c4_118, %c0_119] : memref<16x32xf32, #tpu.memory_space<vmem>>, vector<2x32xf32>
    tpu.vector_store %arg16[%c4_118, %c0_119], %396 {strides = array<i32>} : memref<16x32xf32, #tpu.memory_space<vmem>>, vector<2x32xf32>,
    %cst_120 = arith.constant dense<0.000000e+00> : vector<2x96xf32>
    %399 = tpu.matmul %369, %18, %cst_120 {dimension_numbers = #tpu.dot_dimension_numbers<[1], [0], [0], [1], [0, 0, 1, 1], [], []>} : vector<2x32xf32>, vector<32x96xf32>, vector<2x96xf32> -> vector<2x96xf32>
    %400 = vector.broadcast %20 : vector<1x96xf32> to vector<2x96xf32>
    %401 = arith.addf %399, %400 : vector<2x96xf32>
    %cst_121 = arith.constant dense<0.000000e+00> : vector<2x96xf32>
    %402 = tpu.matmul %396, %22, %cst_121 {dimension_numbers = #tpu.dot_dimension_numbers<[1], [0], [0], [1], [0, 0, 1, 1], [], []>} : vector<2x32xf32>, vector<32x96xf32>, vector<2x96xf32> -> vector<2x96xf32>
    %403 = vector.broadcast %24 : vector<1x96xf32> to vector<2x96xf32>
    %404 = arith.addf %402, %403 : vector<2x96xf32>
    %c12_122 = arith.constant 12 : index
    %c0_123 = arith.constant 0 : index
    %405 = vector.load %arg13[%c12_122, %c0_123] : memref<16x96xf32, #tpu.memory_space<vmem>>, vector<2x96xf32>
    %406 = vector.extract_strided_slice %405 {offsets = [0, 0], sizes = [2, 32], strides = [1, 1]} : vector<2x96xf32> to vector<2x32xf32>
    %407 = vector.extract_strided_slice %401 {offsets = [0, 0], sizes = [2, 32], strides = [1, 1]} : vector<2x96xf32> to vector<2x32xf32>
    %408 = arith.addf %406, %407 : vector<2x32xf32>
    %409 = arith.negf %408 : vector<2x32xf32>
    %410 = math.exp %409 : vector<2x32xf32>
    %cst_124 = arith.constant 1.000000e+00 : f32
    %411 = vector.broadcast %cst_124 : f32 to vector<2x32xf32>
    %412 = arith.addf %411, %410 : vector<2x32xf32>
    %413 = arith.divf %411, %412 : vector<2x32xf32>
    %414 = vector.extract_strided_slice %405 {offsets = [0, 32], sizes = [2, 32], strides = [1, 1]} : vector<2x96xf32> to vector<2x32xf32>
    %415 = vector.extract_strided_slice %401 {offsets = [0, 32], sizes = [2, 32], strides = [1, 1]} : vector<2x96xf32> to vector<2x32xf32>
    %416 = arith.addf %414, %415 : vector<2x32xf32>
    %417 = arith.negf %416 : vector<2x32xf32>
    %418 = math.exp %417 : vector<2x32xf32>
    %cst_125 = arith.constant 1.000000e+00 : f32
    %419 = vector.broadcast %cst_125 : f32 to vector<2x32xf32>
    %420 = arith.addf %419, %418 : vector<2x32xf32>
    %421 = arith.divf %419, %420 : vector<2x32xf32>
    %422 = vector.extract_strided_slice %405 {offsets = [0, 64], sizes = [2, 32], strides = [1, 1]} : vector<2x96xf32> to vector<2x32xf32>
    %423 = vector.extract_strided_slice %401 {offsets = [0, 64], sizes = [2, 32], strides = [1, 1]} : vector<2x96xf32> to vector<2x32xf32>
    %424 = arith.mulf %413, %423 : vector<2x32xf32>
    %425 = arith.addf %422, %424 : vector<2x32xf32>
    %426 = math.tanh %425 : vector<2x32xf32>
    %cst_126 = arith.constant 1.000000e+00 : f32
    %427 = vector.broadcast %cst_126 : f32 to vector<2x32xf32>
    %428 = arith.subf %427, %421 : vector<2x32xf32>
    %429 = arith.mulf %428, %426 : vector<2x32xf32>
    %430 = arith.mulf %421, %369 : vector<2x32xf32>
    %431 = arith.addf %429, %430 : vector<2x32xf32>
    %c2_127 = arith.constant 2 : index
    %c0_128 = arith.constant 0 : index
    %432 = vector.load %arg14[%c2_127, %c0_128] : memref<16x96xf32, #tpu.memory_space<vmem>>, vector<2x96xf32>
    %433 = vector.extract_strided_slice %432 {offsets = [0, 0], sizes = [2, 32], strides = [1, 1]} : vector<2x96xf32> to vector<2x32xf32>
    %434 = vector.extract_strided_slice %404 {offsets = [0, 0], sizes = [2, 32], strides = [1, 1]} : vector<2x96xf32> to vector<2x32xf32>
    %435 = arith.addf %433, %434 : vector<2x32xf32>
    %436 = arith.negf %435 : vector<2x32xf32>
    %437 = math.exp %436 : vector<2x32xf32>
    %cst_129 = arith.constant 1.000000e+00 : f32
    %438 = vector.broadcast %cst_129 : f32 to vector<2x32xf32>
    %439 = arith.addf %438, %437 : vector<2x32xf32>
    %440 = arith.divf %438, %439 : vector<2x32xf32>
    %441 = vector.extract_strided_slice %432 {offsets = [0, 32], sizes = [2, 32], strides = [1, 1]} : vector<2x96xf32> to vector<2x32xf32>
    %442 = vector.extract_strided_slice %404 {offsets = [0, 32], sizes = [2, 32], strides = [1, 1]} : vector<2x96xf32> to vector<2x32xf32>
    %443 = arith.addf %441, %442 : vector<2x32xf32>
    %444 = arith.negf %443 : vector<2x32xf32>
    %445 = math.exp %444 : vector<2x32xf32>
    %cst_130 = arith.constant 1.000000e+00 : f32
    %446 = vector.broadcast %cst_130 : f32 to vector<2x32xf32>
    %447 = arith.addf %446, %445 : vector<2x32xf32>
    %448 = arith.divf %446, %447 : vector<2x32xf32>
    %449 = vector.extract_strided_slice %432 {offsets = [0, 64], sizes = [2, 32], strides = [1, 1]} : vector<2x96xf32> to vector<2x32xf32>
    %450 = vector.extract_strided_slice %404 {offsets = [0, 64], sizes = [2, 32], strides = [1, 1]} : vector<2x96xf32> to vector<2x32xf32>
    %451 = arith.mulf %440, %450 : vector<2x32xf32>
    %452 = arith.addf %449, %451 : vector<2x32xf32>
    %453 = math.tanh %452 : vector<2x32xf32>
    %cst_131 = arith.constant 1.000000e+00 : f32
    %454 = vector.broadcast %cst_131 : f32 to vector<2x32xf32>
    %455 = arith.subf %454, %448 : vector<2x32xf32>
    %456 = arith.mulf %455, %453 : vector<2x32xf32>
    %457 = arith.mulf %448, %396 : vector<2x32xf32>
    %458 = arith.addf %456, %457 : vector<2x32xf32>
    %c12_132 = arith.constant 12 : index
    %c0_133 = arith.constant 0 : index
    %459 = vector.load %arg15[%c12_132, %c0_133] : memref<16x32xf32, #tpu.memory_space<vmem>>, vector<2x32xf32>
    tpu.vector_store %arg15[%c12_132, %c0_133], %431 {strides = array<i32>} : memref<16x32xf32, #tpu.memory_space<vmem>>, vector<2x32xf32>,
    %c2_134 = arith.constant 2 : index
    %c0_135 = arith.constant 0 : index
    %460 = vector.load %arg16[%c2_134, %c0_135] : memref<16x32xf32, #tpu.memory_space<vmem>>, vector<2x32xf32>
    tpu.vector_store %arg16[%c2_134, %c0_135], %458 {strides = array<i32>} : memref<16x32xf32, #tpu.memory_space<vmem>>, vector<2x32xf32>,
    %cst_136 = arith.constant dense<0.000000e+00> : vector<2x96xf32>
    %461 = tpu.matmul %431, %18, %cst_136 {dimension_numbers = #tpu.dot_dimension_numbers<[1], [0], [0], [1], [0, 0, 1, 1], [], []>} : vector<2x32xf32>, vector<32x96xf32>, vector<2x96xf32> -> vector<2x96xf32>
    %462 = vector.broadcast %20 : vector<1x96xf32> to vector<2x96xf32>
    %463 = arith.addf %461, %462 : vector<2x96xf32>
    %cst_137 = arith.constant dense<0.000000e+00> : vector<2x96xf32>
    %464 = tpu.matmul %458, %22, %cst_137 {dimension_numbers = #tpu.dot_dimension_numbers<[1], [0], [0], [1], [0, 0, 1, 1], [], []>} : vector<2x32xf32>, vector<32x96xf32>, vector<2x96xf32> -> vector<2x96xf32>
    %465 = vector.broadcast %24 : vector<1x96xf32> to vector<2x96xf32>
    %466 = arith.addf %464, %465 : vector<2x96xf32>
    %c14_138 = arith.constant 14 : index
    %c0_139 = arith.constant 0 : index
    %467 = vector.load %arg13[%c14_138, %c0_139] : memref<16x96xf32, #tpu.memory_space<vmem>>, vector<2x96xf32>
    %468 = vector.extract_strided_slice %467 {offsets = [0, 0], sizes = [2, 32], strides = [1, 1]} : vector<2x96xf32> to vector<2x32xf32>
    %469 = vector.extract_strided_slice %463 {offsets = [0, 0], sizes = [2, 32], strides = [1, 1]} : vector<2x96xf32> to vector<2x32xf32>
    %470 = arith.addf %468, %469 : vector<2x32xf32>
    %471 = arith.negf %470 : vector<2x32xf32>
    %472 = math.exp %471 : vector<2x32xf32>
    %cst_140 = arith.constant 1.000000e+00 : f32
    %473 = vector.broadcast %cst_140 : f32 to vector<2x32xf32>
    %474 = arith.addf %473, %472 : vector<2x32xf32>
    %475 = arith.divf %473, %474 : vector<2x32xf32>
    %476 = vector.extract_strided_slice %467 {offsets = [0, 32], sizes = [2, 32], strides = [1, 1]} : vector<2x96xf32> to vector<2x32xf32>
    %477 = vector.extract_strided_slice %463 {offsets = [0, 32], sizes = [2, 32], strides = [1, 1]} : vector<2x96xf32> to vector<2x32xf32>
    %478 = arith.addf %476, %477 : vector<2x32xf32>
    %479 = arith.negf %478 : vector<2x32xf32>
    %480 = math.exp %479 : vector<2x32xf32>
    %cst_141 = arith.constant 1.000000e+00 : f32
    %481 = vector.broadcast %cst_141 : f32 to vector<2x32xf32>
    %482 = arith.addf %481, %480 : vector<2x32xf32>
    %483 = arith.divf %481, %482 : vector<2x32xf32>
    %484 = vector.extract_strided_slice %467 {offsets = [0, 64], sizes = [2, 32], strides = [1, 1]} : vector<2x96xf32> to vector<2x32xf32>
    %485 = vector.extract_strided_slice %463 {offsets = [0, 64], sizes = [2, 32], strides = [1, 1]} : vector<2x96xf32> to vector<2x32xf32>
    %486 = arith.mulf %475, %485 : vector<2x32xf32>
    %487 = arith.addf %484, %486 : vector<2x32xf32>
    %488 = math.tanh %487 : vector<2x32xf32>
    %cst_142 = arith.constant 1.000000e+00 : f32
    %489 = vector.broadcast %cst_142 : f32 to vector<2x32xf32>
    %490 = arith.subf %489, %483 : vector<2x32xf32>
    %491 = arith.mulf %490, %488 : vector<2x32xf32>
    %492 = arith.mulf %483, %431 : vector<2x32xf32>
    %493 = arith.addf %491, %492 : vector<2x32xf32>
    %c0_143 = arith.constant 0 : index
    %c0_144 = arith.constant 0 : index
    %494 = vector.load %arg14[%c0_143, %c0_144] : memref<16x96xf32, #tpu.memory_space<vmem>>, vector<2x96xf32>
    %495 = vector.extract_strided_slice %494 {offsets = [0, 0], sizes = [2, 32], strides = [1, 1]} : vector<2x96xf32> to vector<2x32xf32>
    %496 = vector.extract_strided_slice %466 {offsets = [0, 0], sizes = [2, 32], strides = [1, 1]} : vector<2x96xf32> to vector<2x32xf32>
    %497 = arith.addf %495, %496 : vector<2x32xf32>
    %498 = arith.negf %497 : vector<2x32xf32>
    %499 = math.exp %498 : vector<2x32xf32>
    %cst_145 = arith.constant 1.000000e+00 : f32
    %500 = vector.broadcast %cst_145 : f32 to vector<2x32xf32>
    %501 = arith.addf %500, %499 : vector<2x32xf32>
    %502 = arith.divf %500, %501 : vector<2x32xf32>
    %503 = vector.extract_strided_slice %494 {offsets = [0, 32], sizes = [2, 32], strides = [1, 1]} : vector<2x96xf32> to vector<2x32xf32>
    %504 = vector.extract_strided_slice %466 {offsets = [0, 32], sizes = [2, 32], strides = [1, 1]} : vector<2x96xf32> to vector<2x32xf32>
    %505 = arith.addf %503, %504 : vector<2x32xf32>
    %506 = arith.negf %505 : vector<2x32xf32>
    %507 = math.exp %506 : vector<2x32xf32>
    %cst_146 = arith.constant 1.000000e+00 : f32
    %508 = vector.broadcast %cst_146 : f32 to vector<2x32xf32>
    %509 = arith.addf %508, %507 : vector<2x32xf32>
    %510 = arith.divf %508, %509 : vector<2x32xf32>
    %511 = vector.extract_strided_slice %494 {offsets = [0, 64], sizes = [2, 32], strides = [1, 1]} : vector<2x96xf32> to vector<2x32xf32>
    %512 = vector.extract_strided_slice %466 {offsets = [0, 64], sizes = [2, 32], strides = [1, 1]} : vector<2x96xf32> to vector<2x32xf32>
    %513 = arith.mulf %502, %512 : vector<2x32xf32>
    %514 = arith.addf %511, %513 : vector<2x32xf32>
    %515 = math.tanh %514 : vector<2x32xf32>
    %cst_147 = arith.constant 1.000000e+00 : f32
    %516 = vector.broadcast %cst_147 : f32 to vector<2x32xf32>
    %517 = arith.subf %516, %510 : vector<2x32xf32>
    %518 = arith.mulf %517, %515 : vector<2x32xf32>
    %519 = arith.mulf %510, %458 : vector<2x32xf32>
    %520 = arith.addf %518, %519 : vector<2x32xf32>
    %c14_148 = arith.constant 14 : index
    %c0_149 = arith.constant 0 : index
    %521 = vector.load %arg15[%c14_148, %c0_149] : memref<16x32xf32, #tpu.memory_space<vmem>>, vector<2x32xf32>
    tpu.vector_store %arg15[%c14_148, %c0_149], %493 {strides = array<i32>} : memref<16x32xf32, #tpu.memory_space<vmem>>, vector<2x32xf32>,
    %c0_150 = arith.constant 0 : index
    %c0_151 = arith.constant 0 : index
    %522 = vector.load %arg16[%c0_150, %c0_151] : memref<16x32xf32, #tpu.memory_space<vmem>>, vector<2x32xf32>
    tpu.vector_store %arg16[%c0_150, %c0_151], %520 {strides = array<i32>} : memref<16x32xf32, #tpu.memory_space<vmem>>, vector<2x32xf32>,
    %c0_152 = arith.constant 0 : index
    %c0_153 = arith.constant 0 : index
    %523 = vector.load %arg15[%c0_152, %c0_153] : memref<16x32xf32, #tpu.memory_space<vmem>>, vector<16x32xf32>
    %c0_154 = arith.constant 0 : index
    %c0_155 = arith.constant 0 : index
    %524 = vector.load %arg16[%c0_154, %c0_155] : memref<16x32xf32, #tpu.memory_space<vmem>>, vector<16x32xf32>
    %c0_156 = arith.constant 0 : index
    %c0_157 = arith.constant 0 : index
    %c0_158 = arith.constant 0 : index
    %525 = vector.load %arg5[%c0_156, %c0_157, %c0_158] : memref<2x32x96xf32, #tpu.memory_space<vmem>>, vector<1x32x96xf32>
    %526 = vector.shape_cast %525 : vector<1x32x96xf32> to vector<32x96xf32>
    %cst_159 = arith.constant dense<0.000000e+00> : vector<16x96xf32>
    %527 = tpu.matmul %523, %526, %cst_159 {dimension_numbers = #tpu.dot_dimension_numbers<[1], [0], [0], [1], [0, 0, 1, 1], [], []>} : vector<16x32xf32>, vector<32x96xf32>, vector<16x96xf32> -> vector<16x96xf32>
    %c0_160 = arith.constant 0 : index
    %c0_161 = arith.constant 0 : index
    %c0_162 = arith.constant 0 : index
    %528 = vector.load %arg6[%c0_160, %c0_161, %c0_162] : memref<2x32x96xf32, #tpu.memory_space<vmem>>, vector<1x32x96xf32>
    %529 = vector.shape_cast %528 : vector<1x32x96xf32> to vector<32x96xf32>
    %cst_163 = arith.constant dense<0.000000e+00> : vector<16x96xf32>
    %530 = tpu.matmul %524, %529, %cst_163 {dimension_numbers = #tpu.dot_dimension_numbers<[1], [0], [0], [1], [0, 0, 1, 1], [], []>} : vector<16x32xf32>, vector<32x96xf32>, vector<16x96xf32> -> vector<16x96xf32>
    %531 = arith.addf %527, %530 : vector<16x96xf32>
    %c0_164 = arith.constant 0 : index
    %c0_165 = arith.constant 0 : index
    %c0_166 = arith.constant 0 : index
    %532 = vector.load %arg8[%c0_164, %c0_165, %c0_166] : memref<2x1x96xf32, #tpu.memory_space<vmem>>, vector<1x1x96xf32>
    %533 = vector.shape_cast %532 : vector<1x1x96xf32> to vector<1x96xf32>
    %534 = vector.broadcast %533 : vector<1x96xf32> to vector<16x96xf32>
    %535 = arith.addf %531, %534 : vector<16x96xf32>
    %c0_167 = arith.constant 0 : index
    %c0_168 = arith.constant 0 : index
    %536 = vector.load %arg13[%c0_167, %c0_168] : memref<16x96xf32, #tpu.memory_space<vmem>>, vector<16x96xf32>
    tpu.vector_store %arg13[%c0_167, %c0_168], %535 {strides = array<i32>} : memref<16x96xf32, #tpu.memory_space<vmem>>, vector<16x96xf32>,
    %c1_169 = arith.constant 1 : index
    %c0_170 = arith.constant 0 : index
    %c0_171 = arith.constant 0 : index
    %537 = vector.load %arg5[%c1_169, %c0_170, %c0_171] : memref<2x32x96xf32, #tpu.memory_space<vmem>>, vector<1x32x96xf32>
    %538 = vector.shape_cast %537 : vector<1x32x96xf32> to vector<32x96xf32>
    %cst_172 = arith.constant dense<0.000000e+00> : vector<16x96xf32>
    %539 = tpu.matmul %523, %538, %cst_172 {dimension_numbers = #tpu.dot_dimension_numbers<[1], [0], [0], [1], [0, 0, 1, 1], [], []>} : vector<16x32xf32>, vector<32x96xf32>, vector<16x96xf32> -> vector<16x96xf32>
    %c1_173 = arith.constant 1 : index
    %c0_174 = arith.constant 0 : index
    %c0_175 = arith.constant 0 : index
    %540 = vector.load %arg6[%c1_173, %c0_174, %c0_175] : memref<2x32x96xf32, #tpu.memory_space<vmem>>, vector<1x32x96xf32>
    %541 = vector.shape_cast %540 : vector<1x32x96xf32> to vector<32x96xf32>
    %cst_176 = arith.constant dense<0.000000e+00> : vector<16x96xf32>
    %542 = tpu.matmul %524, %541, %cst_176 {dimension_numbers = #tpu.dot_dimension_numbers<[1], [0], [0], [1], [0, 0, 1, 1], [], []>} : vector<16x32xf32>, vector<32x96xf32>, vector<16x96xf32> -> vector<16x96xf32>
    %543 = arith.addf %539, %542 : vector<16x96xf32>
    %c1_177 = arith.constant 1 : index
    %c0_178 = arith.constant 0 : index
    %c0_179 = arith.constant 0 : index
    %544 = vector.load %arg8[%c1_177, %c0_178, %c0_179] : memref<2x1x96xf32, #tpu.memory_space<vmem>>, vector<1x1x96xf32>
    %545 = vector.shape_cast %544 : vector<1x1x96xf32> to vector<1x96xf32>
    %546 = vector.broadcast %545 : vector<1x96xf32> to vector<16x96xf32>
    %547 = arith.addf %543, %546 : vector<16x96xf32>
    %c0_180 = arith.constant 0 : index
    %c0_181 = arith.constant 0 : index
    %548 = vector.load %arg14[%c0_180, %c0_181] : memref<16x96xf32, #tpu.memory_space<vmem>>, vector<16x96xf32>
    tpu.vector_store %arg14[%c0_180, %c0_181], %547 {strides = array<i32>} : memref<16x96xf32, #tpu.memory_space<vmem>>, vector<16x96xf32>,
    %c0_182 = arith.constant 0 : index
    %c0_183 = arith.constant 0 : index
    %c0_184 = arith.constant 0 : index
    %549 = vector.load %arg7[%c0_182, %c0_183, %c0_184] : memref<2x32x96xf32, #tpu.memory_space<vmem>>, vector<1x32x96xf32>
    %550 = vector.shape_cast %549 : vector<1x32x96xf32> to vector<32x96xf32>
    %c0_185 = arith.constant 0 : index
    %c0_186 = arith.constant 0 : index
    %c0_187 = arith.constant 0 : index
    %551 = vector.load %arg9[%c0_185, %c0_186, %c0_187] : memref<2x1x96xf32, #tpu.memory_space<vmem>>, vector<1x1x96xf32>
    %552 = vector.shape_cast %551 : vector<1x1x96xf32> to vector<1x96xf32>
    %c1_188 = arith.constant 1 : index
    %c0_189 = arith.constant 0 : index
    %c0_190 = arith.constant 0 : index
    %553 = vector.load %arg7[%c1_188, %c0_189, %c0_190] : memref<2x32x96xf32, #tpu.memory_space<vmem>>, vector<1x32x96xf32>
    %554 = vector.shape_cast %553 : vector<1x32x96xf32> to vector<32x96xf32>
    %c1_191 = arith.constant 1 : index
    %c0_192 = arith.constant 0 : index
    %c0_193 = arith.constant 0 : index
    %555 = vector.load %arg9[%c1_191, %c0_192, %c0_193] : memref<2x1x96xf32, #tpu.memory_space<vmem>>, vector<1x1x96xf32>
    %556 = vector.shape_cast %555 : vector<1x1x96xf32> to vector<1x96xf32>
    %cst_194 = arith.constant 0.000000e+00 : f32
    %557 = vector.broadcast %cst_194 : f32 to vector<2x32xf32>
    %cst_195 = arith.constant 0.000000e+00 : f32
    %558 = vector.broadcast %cst_195 : f32 to vector<2x32xf32>
    %cst_196 = arith.constant dense<0.000000e+00> : vector<2x96xf32>
    %559 = tpu.matmul %557, %550, %cst_196 {dimension_numbers = #tpu.dot_dimension_numbers<[1], [0], [0], [1], [0, 0, 1, 1], [], []>} : vector<2x32xf32>, vector<32x96xf32>, vector<2x96xf32> -> vector<2x96xf32>
    %560 = vector.broadcast %552 : vector<1x96xf32> to vector<2x96xf32>
    %561 = arith.addf %559, %560 : vector<2x96xf32>
    %cst_197 = arith.constant dense<0.000000e+00> : vector<2x96xf32>
    %562 = tpu.matmul %558, %554, %cst_197 {dimension_numbers = #tpu.dot_dimension_numbers<[1], [0], [0], [1], [0, 0, 1, 1], [], []>} : vector<2x32xf32>, vector<32x96xf32>, vector<2x96xf32> -> vector<2x96xf32>
    %563 = vector.broadcast %556 : vector<1x96xf32> to vector<2x96xf32>
    %564 = arith.addf %562, %563 : vector<2x96xf32>
    %c0_198 = arith.constant 0 : index
    %c0_199 = arith.constant 0 : index
    %565 = vector.load %arg13[%c0_198, %c0_199] : memref<16x96xf32, #tpu.memory_space<vmem>>, vector<2x96xf32>
    %566 = vector.extract_strided_slice %565 {offsets = [0, 0], sizes = [2, 32], strides = [1, 1]} : vector<2x96xf32> to vector<2x32xf32>
    %567 = vector.extract_strided_slice %561 {offsets = [0, 0], sizes = [2, 32], strides = [1, 1]} : vector<2x96xf32> to vector<2x32xf32>
    %568 = arith.addf %566, %567 : vector<2x32xf32>
    %569 = arith.negf %568 : vector<2x32xf32>
    %570 = math.exp %569 : vector<2x32xf32>
    %cst_200 = arith.constant 1.000000e+00 : f32
    %571 = vector.broadcast %cst_200 : f32 to vector<2x32xf32>
    %572 = arith.addf %571, %570 : vector<2x32xf32>
    %573 = arith.divf %571, %572 : vector<2x32xf32>
    %574 = vector.extract_strided_slice %565 {offsets = [0, 32], sizes = [2, 32], strides = [1, 1]} : vector<2x96xf32> to vector<2x32xf32>
    %575 = vector.extract_strided_slice %561 {offsets = [0, 32], sizes = [2, 32], strides = [1, 1]} : vector<2x96xf32> to vector<2x32xf32>
    %576 = arith.addf %574, %575 : vector<2x32xf32>
    %577 = arith.negf %576 : vector<2x32xf32>
    %578 = math.exp %577 : vector<2x32xf32>
    %cst_201 = arith.constant 1.000000e+00 : f32
    %579 = vector.broadcast %cst_201 : f32 to vector<2x32xf32>
    %580 = arith.addf %579, %578 : vector<2x32xf32>
    %581 = arith.divf %579, %580 : vector<2x32xf32>
    %582 = vector.extract_strided_slice %565 {offsets = [0, 64], sizes = [2, 32], strides = [1, 1]} : vector<2x96xf32> to vector<2x32xf32>
    %583 = vector.extract_strided_slice %561 {offsets = [0, 64], sizes = [2, 32], strides = [1, 1]} : vector<2x96xf32> to vector<2x32xf32>
    %584 = arith.mulf %573, %583 : vector<2x32xf32>
    %585 = arith.addf %582, %584 : vector<2x32xf32>
    %586 = math.tanh %585 : vector<2x32xf32>
    %cst_202 = arith.constant 1.000000e+00 : f32
    %587 = vector.broadcast %cst_202 : f32 to vector<2x32xf32>
    %588 = arith.subf %587, %581 : vector<2x32xf32>
    %589 = arith.mulf %588, %586 : vector<2x32xf32>
    %590 = arith.mulf %581, %557 : vector<2x32xf32>
    %591 = arith.addf %589, %590 : vector<2x32xf32>
    %c14_203 = arith.constant 14 : index
    %c0_204 = arith.constant 0 : index
    %592 = vector.load %arg14[%c14_203, %c0_204] : memref<16x96xf32, #tpu.memory_space<vmem>>, vector<2x96xf32>
    %593 = vector.extract_strided_slice %592 {offsets = [0, 0], sizes = [2, 32], strides = [1, 1]} : vector<2x96xf32> to vector<2x32xf32>
    %594 = vector.extract_strided_slice %564 {offsets = [0, 0], sizes = [2, 32], strides = [1, 1]} : vector<2x96xf32> to vector<2x32xf32>
    %595 = arith.addf %593, %594 : vector<2x32xf32>
    %596 = arith.negf %595 : vector<2x32xf32>
    %597 = math.exp %596 : vector<2x32xf32>
    %cst_205 = arith.constant 1.000000e+00 : f32
    %598 = vector.broadcast %cst_205 : f32 to vector<2x32xf32>
    %599 = arith.addf %598, %597 : vector<2x32xf32>
    %600 = arith.divf %598, %599 : vector<2x32xf32>
    %601 = vector.extract_strided_slice %592 {offsets = [0, 32], sizes = [2, 32], strides = [1, 1]} : vector<2x96xf32> to vector<2x32xf32>
    %602 = vector.extract_strided_slice %564 {offsets = [0, 32], sizes = [2, 32], strides = [1, 1]} : vector<2x96xf32> to vector<2x32xf32>
    %603 = arith.addf %601, %602 : vector<2x32xf32>
    %604 = arith.negf %603 : vector<2x32xf32>
    %605 = math.exp %604 : vector<2x32xf32>
    %cst_206 = arith.constant 1.000000e+00 : f32
    %606 = vector.broadcast %cst_206 : f32 to vector<2x32xf32>
    %607 = arith.addf %606, %605 : vector<2x32xf32>
    %608 = arith.divf %606, %607 : vector<2x32xf32>
    %609 = vector.extract_strided_slice %592 {offsets = [0, 64], sizes = [2, 32], strides = [1, 1]} : vector<2x96xf32> to vector<2x32xf32>
    %610 = vector.extract_strided_slice %564 {offsets = [0, 64], sizes = [2, 32], strides = [1, 1]} : vector<2x96xf32> to vector<2x32xf32>
    %611 = arith.mulf %600, %610 : vector<2x32xf32>
    %612 = arith.addf %609, %611 : vector<2x32xf32>
    %613 = math.tanh %612 : vector<2x32xf32>
    %cst_207 = arith.constant 1.000000e+00 : f32
    %614 = vector.broadcast %cst_207 : f32 to vector<2x32xf32>
    %615 = arith.subf %614, %608 : vector<2x32xf32>
    %616 = arith.mulf %615, %613 : vector<2x32xf32>
    %617 = arith.mulf %608, %558 : vector<2x32xf32>
    %618 = arith.addf %616, %617 : vector<2x32xf32>
    %c0_208 = arith.constant 0 : index
    %c0_209 = arith.constant 0 : index
    %619 = vector.load %arg15[%c0_208, %c0_209] : memref<16x32xf32, #tpu.memory_space<vmem>>, vector<2x32xf32>
    tpu.vector_store %arg15[%c0_208, %c0_209], %591 {strides = array<i32>} : memref<16x32xf32, #tpu.memory_space<vmem>>, vector<2x32xf32>,
    %c14_210 = arith.constant 14 : index
    %c0_211 = arith.constant 0 : index
    %620 = vector.load %arg16[%c14_210, %c0_211] : memref<16x32xf32, #tpu.memory_space<vmem>>, vector<2x32xf32>
    tpu.vector_store %arg16[%c14_210, %c0_211], %618 {strides = array<i32>} : memref<16x32xf32, #tpu.memory_space<vmem>>, vector<2x32xf32>,
    %cst_212 = arith.constant dense<0.000000e+00> : vector<2x96xf32>
    %621 = tpu.matmul %591, %550, %cst_212 {dimension_numbers = #tpu.dot_dimension_numbers<[1], [0], [0], [1], [0, 0, 1, 1], [], []>} : vector<2x32xf32>, vector<32x96xf32>, vector<2x96xf32> -> vector<2x96xf32>
    %622 = vector.broadcast %552 : vector<1x96xf32> to vector<2x96xf32>
    %623 = arith.addf %621, %622 : vector<2x96xf32>
    %cst_213 = arith.constant dense<0.000000e+00> : vector<2x96xf32>
    %624 = tpu.matmul %618, %554, %cst_213 {dimension_numbers = #tpu.dot_dimension_numbers<[1], [0], [0], [1], [0, 0, 1, 1], [], []>} : vector<2x32xf32>, vector<32x96xf32>, vector<2x96xf32> -> vector<2x96xf32>
    %625 = vector.broadcast %556 : vector<1x96xf32> to vector<2x96xf32>
    %626 = arith.addf %624, %625 : vector<2x96xf32>
    %c2_214 = arith.constant 2 : index
    %c0_215 = arith.constant 0 : index
    %627 = vector.load %arg13[%c2_214, %c0_215] : memref<16x96xf32, #tpu.memory_space<vmem>>, vector<2x96xf32>
    %628 = vector.extract_strided_slice %627 {offsets = [0, 0], sizes = [2, 32], strides = [1, 1]} : vector<2x96xf32> to vector<2x32xf32>
    %629 = vector.extract_strided_slice %623 {offsets = [0, 0], sizes = [2, 32], strides = [1, 1]} : vector<2x96xf32> to vector<2x32xf32>
    %630 = arith.addf %628, %629 : vector<2x32xf32>
    %631 = arith.negf %630 : vector<2x32xf32>
    %632 = math.exp %631 : vector<2x32xf32>
    %cst_216 = arith.constant 1.000000e+00 : f32
    %633 = vector.broadcast %cst_216 : f32 to vector<2x32xf32>
    %634 = arith.addf %633, %632 : vector<2x32xf32>
    %635 = arith.divf %633, %634 : vector<2x32xf32>
    %636 = vector.extract_strided_slice %627 {offsets = [0, 32], sizes = [2, 32], strides = [1, 1]} : vector<2x96xf32> to vector<2x32xf32>
    %637 = vector.extract_strided_slice %623 {offsets = [0, 32], sizes = [2, 32], strides = [1, 1]} : vector<2x96xf32> to vector<2x32xf32>
    %638 = arith.addf %636, %637 : vector<2x32xf32>
    %639 = arith.negf %638 : vector<2x32xf32>
    %640 = math.exp %639 : vector<2x32xf32>
    %cst_217 = arith.constant 1.000000e+00 : f32
    %641 = vector.broadcast %cst_217 : f32 to vector<2x32xf32>
    %642 = arith.addf %641, %640 : vector<2x32xf32>
    %643 = arith.divf %641, %642 : vector<2x32xf32>
    %644 = vector.extract_strided_slice %627 {offsets = [0, 64], sizes = [2, 32], strides = [1, 1]} : vector<2x96xf32> to vector<2x32xf32>
    %645 = vector.extract_strided_slice %623 {offsets = [0, 64], sizes = [2, 32], strides = [1, 1]} : vector<2x96xf32> to vector<2x32xf32>
    %646 = arith.mulf %635, %645 : vector<2x32xf32>
    %647 = arith.addf %644, %646 : vector<2x32xf32>
    %648 = math.tanh %647 : vector<2x32xf32>
    %cst_218 = arith.constant 1.000000e+00 : f32
    %649 = vector.broadcast %cst_218 : f32 to vector<2x32xf32>
    %650 = arith.subf %649, %643 : vector<2x32xf32>
    %651 = arith.mulf %650, %648 : vector<2x32xf32>
    %652 = arith.mulf %643, %591 : vector<2x32xf32>
    %653 = arith.addf %651, %652 : vector<2x32xf32>
    %c12_219 = arith.constant 12 : index
    %c0_220 = arith.constant 0 : index
    %654 = vector.load %arg14[%c12_219, %c0_220] : memref<16x96xf32, #tpu.memory_space<vmem>>, vector<2x96xf32>
    %655 = vector.extract_strided_slice %654 {offsets = [0, 0], sizes = [2, 32], strides = [1, 1]} : vector<2x96xf32> to vector<2x32xf32>
    %656 = vector.extract_strided_slice %626 {offsets = [0, 0], sizes = [2, 32], strides = [1, 1]} : vector<2x96xf32> to vector<2x32xf32>
    %657 = arith.addf %655, %656 : vector<2x32xf32>
    %658 = arith.negf %657 : vector<2x32xf32>
    %659 = math.exp %658 : vector<2x32xf32>
    %cst_221 = arith.constant 1.000000e+00 : f32
    %660 = vector.broadcast %cst_221 : f32 to vector<2x32xf32>
    %661 = arith.addf %660, %659 : vector<2x32xf32>
    %662 = arith.divf %660, %661 : vector<2x32xf32>
    %663 = vector.extract_strided_slice %654 {offsets = [0, 32], sizes = [2, 32], strides = [1, 1]} : vector<2x96xf32> to vector<2x32xf32>
    %664 = vector.extract_strided_slice %626 {offsets = [0, 32], sizes = [2, 32], strides = [1, 1]} : vector<2x96xf32> to vector<2x32xf32>
    %665 = arith.addf %663, %664 : vector<2x32xf32>
    %666 = arith.negf %665 : vector<2x32xf32>
    %667 = math.exp %666 : vector<2x32xf32>
    %cst_222 = arith.constant 1.000000e+00 : f32
    %668 = vector.broadcast %cst_222 : f32 to vector<2x32xf32>
    %669 = arith.addf %668, %667 : vector<2x32xf32>
    %670 = arith.divf %668, %669 : vector<2x32xf32>
    %671 = vector.extract_strided_slice %654 {offsets = [0, 64], sizes = [2, 32], strides = [1, 1]} : vector<2x96xf32> to vector<2x32xf32>
    %672 = vector.extract_strided_slice %626 {offsets = [0, 64], sizes = [2, 32], strides = [1, 1]} : vector<2x96xf32> to vector<2x32xf32>
    %673 = arith.mulf %662, %672 : vector<2x32xf32>
    %674 = arith.addf %671, %673 : vector<2x32xf32>
    %675 = math.tanh %674 : vector<2x32xf32>
    %cst_223 = arith.constant 1.000000e+00 : f32
    %676 = vector.broadcast %cst_223 : f32 to vector<2x32xf32>
    %677 = arith.subf %676, %670 : vector<2x32xf32>
    %678 = arith.mulf %677, %675 : vector<2x32xf32>
    %679 = arith.mulf %670, %618 : vector<2x32xf32>
    %680 = arith.addf %678, %679 : vector<2x32xf32>
    %c2_224 = arith.constant 2 : index
    %c0_225 = arith.constant 0 : index
    %681 = vector.load %arg15[%c2_224, %c0_225] : memref<16x32xf32, #tpu.memory_space<vmem>>, vector<2x32xf32>
    tpu.vector_store %arg15[%c2_224, %c0_225], %653 {strides = array<i32>} : memref<16x32xf32, #tpu.memory_space<vmem>>, vector<2x32xf32>,
    %c12_226 = arith.constant 12 : index
    %c0_227 = arith.constant 0 : index
    %682 = vector.load %arg16[%c12_226, %c0_227] : memref<16x32xf32, #tpu.memory_space<vmem>>, vector<2x32xf32>
    tpu.vector_store %arg16[%c12_226, %c0_227], %680 {strides = array<i32>} : memref<16x32xf32, #tpu.memory_space<vmem>>, vector<2x32xf32>,
    %cst_228 = arith.constant dense<0.000000e+00> : vector<2x96xf32>
    %683 = tpu.matmul %653, %550, %cst_228 {dimension_numbers = #tpu.dot_dimension_numbers<[1], [0], [0], [1], [0, 0, 1, 1], [], []>} : vector<2x32xf32>, vector<32x96xf32>, vector<2x96xf32> -> vector<2x96xf32>
    %684 = vector.broadcast %552 : vector<1x96xf32> to vector<2x96xf32>
    %685 = arith.addf %683, %684 : vector<2x96xf32>
    %cst_229 = arith.constant dense<0.000000e+00> : vector<2x96xf32>
    %686 = tpu.matmul %680, %554, %cst_229 {dimension_numbers = #tpu.dot_dimension_numbers<[1], [0], [0], [1], [0, 0, 1, 1], [], []>} : vector<2x32xf32>, vector<32x96xf32>, vector<2x96xf32> -> vector<2x96xf32>
    %687 = vector.broadcast %556 : vector<1x96xf32> to vector<2x96xf32>
    %688 = arith.addf %686, %687 : vector<2x96xf32>
    %c4_230 = arith.constant 4 : index
    %c0_231 = arith.constant 0 : index
    %689 = vector.load %arg13[%c4_230, %c0_231] : memref<16x96xf32, #tpu.memory_space<vmem>>, vector<2x96xf32>
    %690 = vector.extract_strided_slice %689 {offsets = [0, 0], sizes = [2, 32], strides = [1, 1]} : vector<2x96xf32> to vector<2x32xf32>
    %691 = vector.extract_strided_slice %685 {offsets = [0, 0], sizes = [2, 32], strides = [1, 1]} : vector<2x96xf32> to vector<2x32xf32>
    %692 = arith.addf %690, %691 : vector<2x32xf32>
    %693 = arith.negf %692 : vector<2x32xf32>
    %694 = math.exp %693 : vector<2x32xf32>
    %cst_232 = arith.constant 1.000000e+00 : f32
    %695 = vector.broadcast %cst_232 : f32 to vector<2x32xf32>
    %696 = arith.addf %695, %694 : vector<2x32xf32>
    %697 = arith.divf %695, %696 : vector<2x32xf32>
    %698 = vector.extract_strided_slice %689 {offsets = [0, 32], sizes = [2, 32], strides = [1, 1]} : vector<2x96xf32> to vector<2x32xf32>
    %699 = vector.extract_strided_slice %685 {offsets = [0, 32], sizes = [2, 32], strides = [1, 1]} : vector<2x96xf32> to vector<2x32xf32>
    %700 = arith.addf %698, %699 : vector<2x32xf32>
    %701 = arith.negf %700 : vector<2x32xf32>
    %702 = math.exp %701 : vector<2x32xf32>
    %cst_233 = arith.constant 1.000000e+00 : f32
    %703 = vector.broadcast %cst_233 : f32 to vector<2x32xf32>
    %704 = arith.addf %703, %702 : vector<2x32xf32>
    %705 = arith.divf %703, %704 : vector<2x32xf32>
    %706 = vector.extract_strided_slice %689 {offsets = [0, 64], sizes = [2, 32], strides = [1, 1]} : vector<2x96xf32> to vector<2x32xf32>
    %707 = vector.extract_strided_slice %685 {offsets = [0, 64], sizes = [2, 32], strides = [1, 1]} : vector<2x96xf32> to vector<2x32xf32>
    %708 = arith.mulf %697, %707 : vector<2x32xf32>
    %709 = arith.addf %706, %708 : vector<2x32xf32>
    %710 = math.tanh %709 : vector<2x32xf32>
    %cst_234 = arith.constant 1.000000e+00 : f32
    %711 = vector.broadcast %cst_234 : f32 to vector<2x32xf32>
    %712 = arith.subf %711, %705 : vector<2x32xf32>
    %713 = arith.mulf %712, %710 : vector<2x32xf32>
    %714 = arith.mulf %705, %653 : vector<2x32xf32>
    %715 = arith.addf %713, %714 : vector<2x32xf32>
    %c10_235 = arith.constant 10 : index
    %c0_236 = arith.constant 0 : index
    %716 = vector.load %arg14[%c10_235, %c0_236] : memref<16x96xf32, #tpu.memory_space<vmem>>, vector<2x96xf32>
    %717 = vector.extract_strided_slice %716 {offsets = [0, 0], sizes = [2, 32], strides = [1, 1]} : vector<2x96xf32> to vector<2x32xf32>
    %718 = vector.extract_strided_slice %688 {offsets = [0, 0], sizes = [2, 32], strides = [1, 1]} : vector<2x96xf32> to vector<2x32xf32>
    %719 = arith.addf %717, %718 : vector<2x32xf32>
    %720 = arith.negf %719 : vector<2x32xf32>
    %721 = math.exp %720 : vector<2x32xf32>
    %cst_237 = arith.constant 1.000000e+00 : f32
    %722 = vector.broadcast %cst_237 : f32 to vector<2x32xf32>
    %723 = arith.addf %722, %721 : vector<2x32xf32>
    %724 = arith.divf %722, %723 : vector<2x32xf32>
    %725 = vector.extract_strided_slice %716 {offsets = [0, 32], sizes = [2, 32], strides = [1, 1]} : vector<2x96xf32> to vector<2x32xf32>
    %726 = vector.extract_strided_slice %688 {offsets = [0, 32], sizes = [2, 32], strides = [1, 1]} : vector<2x96xf32> to vector<2x32xf32>
    %727 = arith.addf %725, %726 : vector<2x32xf32>
    %728 = arith.negf %727 : vector<2x32xf32>
    %729 = math.exp %728 : vector<2x32xf32>
    %cst_238 = arith.constant 1.000000e+00 : f32
    %730 = vector.broadcast %cst_238 : f32 to vector<2x32xf32>
    %731 = arith.addf %730, %729 : vector<2x32xf32>
    %732 = arith.divf %730, %731 : vector<2x32xf32>
    %733 = vector.extract_strided_slice %716 {offsets = [0, 64], sizes = [2, 32], strides = [1, 1]} : vector<2x96xf32> to vector<2x32xf32>
    %734 = vector.extract_strided_slice %688 {offsets = [0, 64], sizes = [2, 32], strides = [1, 1]} : vector<2x96xf32> to vector<2x32xf32>
    %735 = arith.mulf %724, %734 : vector<2x32xf32>
    %736 = arith.addf %733, %735 : vector<2x32xf32>
    %737 = math.tanh %736 : vector<2x32xf32>
    %cst_239 = arith.constant 1.000000e+00 : f32
    %738 = vector.broadcast %cst_239 : f32 to vector<2x32xf32>
    %739 = arith.subf %738, %732 : vector<2x32xf32>
    %740 = arith.mulf %739, %737 : vector<2x32xf32>
    %741 = arith.mulf %732, %680 : vector<2x32xf32>
    %742 = arith.addf %740, %741 : vector<2x32xf32>
    %c4_240 = arith.constant 4 : index
    %c0_241 = arith.constant 0 : index
    %743 = vector.load %arg15[%c4_240, %c0_241] : memref<16x32xf32, #tpu.memory_space<vmem>>, vector<2x32xf32>
    tpu.vector_store %arg15[%c4_240, %c0_241], %715 {strides = array<i32>} : memref<16x32xf32, #tpu.memory_space<vmem>>, vector<2x32xf32>,
    %c10_242 = arith.constant 10 : index
    %c0_243 = arith.constant 0 : index
    %744 = vector.load %arg16[%c10_242, %c0_243] : memref<16x32xf32, #tpu.memory_space<vmem>>, vector<2x32xf32>
    tpu.vector_store %arg16[%c10_242, %c0_243], %742 {strides = array<i32>} : memref<16x32xf32, #tpu.memory_space<vmem>>, vector<2x32xf32>,
    %cst_244 = arith.constant dense<0.000000e+00> : vector<2x96xf32>
    %745 = tpu.matmul %715, %550, %cst_244 {dimension_numbers = #tpu.dot_dimension_numbers<[1], [0], [0], [1], [0, 0, 1, 1], [], []>} : vector<2x32xf32>, vector<32x96xf32>, vector<2x96xf32> -> vector<2x96xf32>
    %746 = vector.broadcast %552 : vector<1x96xf32> to vector<2x96xf32>
    %747 = arith.addf %745, %746 : vector<2x96xf32>
    %cst_245 = arith.constant dense<0.000000e+00> : vector<2x96xf32>
    %748 = tpu.matmul %742, %554, %cst_245 {dimension_numbers = #tpu.dot_dimension_numbers<[1], [0], [0], [1], [0, 0, 1, 1], [], []>} : vector<2x32xf32>, vector<32x96xf32>, vector<2x96xf32> -> vector<2x96xf32>
    %749 = vector.broadcast %556 : vector<1x96xf32> to vector<2x96xf32>
    %750 = arith.addf %748, %749 : vector<2x96xf32>
    %c6_246 = arith.constant 6 : index
    %c0_247 = arith.constant 0 : index
    %751 = vector.load %arg13[%c6_246, %c0_247] : memref<16x96xf32, #tpu.memory_space<vmem>>, vector<2x96xf32>
    %752 = vector.extract_strided_slice %751 {offsets = [0, 0], sizes = [2, 32], strides = [1, 1]} : vector<2x96xf32> to vector<2x32xf32>
    %753 = vector.extract_strided_slice %747 {offsets = [0, 0], sizes = [2, 32], strides = [1, 1]} : vector<2x96xf32> to vector<2x32xf32>
    %754 = arith.addf %752, %753 : vector<2x32xf32>
    %755 = arith.negf %754 : vector<2x32xf32>
    %756 = math.exp %755 : vector<2x32xf32>
    %cst_248 = arith.constant 1.000000e+00 : f32
    %757 = vector.broadcast %cst_248 : f32 to vector<2x32xf32>
    %758 = arith.addf %757, %756 : vector<2x32xf32>
    %759 = arith.divf %757, %758 : vector<2x32xf32>
    %760 = vector.extract_strided_slice %751 {offsets = [0, 32], sizes = [2, 32], strides = [1, 1]} : vector<2x96xf32> to vector<2x32xf32>
    %761 = vector.extract_strided_slice %747 {offsets = [0, 32], sizes = [2, 32], strides = [1, 1]} : vector<2x96xf32> to vector<2x32xf32>
    %762 = arith.addf %760, %761 : vector<2x32xf32>
    %763 = arith.negf %762 : vector<2x32xf32>
    %764 = math.exp %763 : vector<2x32xf32>
    %cst_249 = arith.constant 1.000000e+00 : f32
    %765 = vector.broadcast %cst_249 : f32 to vector<2x32xf32>
    %766 = arith.addf %765, %764 : vector<2x32xf32>
    %767 = arith.divf %765, %766 : vector<2x32xf32>
    %768 = vector.extract_strided_slice %751 {offsets = [0, 64], sizes = [2, 32], strides = [1, 1]} : vector<2x96xf32> to vector<2x32xf32>
    %769 = vector.extract_strided_slice %747 {offsets = [0, 64], sizes = [2, 32], strides = [1, 1]} : vector<2x96xf32> to vector<2x32xf32>
    %770 = arith.mulf %759, %769 : vector<2x32xf32>
    %771 = arith.addf %768, %770 : vector<2x32xf32>
    %772 = math.tanh %771 : vector<2x32xf32>
    %cst_250 = arith.constant 1.000000e+00 : f32
    %773 = vector.broadcast %cst_250 : f32 to vector<2x32xf32>
    %774 = arith.subf %773, %767 : vector<2x32xf32>
    %775 = arith.mulf %774, %772 : vector<2x32xf32>
    %776 = arith.mulf %767, %715 : vector<2x32xf32>
    %777 = arith.addf %775, %776 : vector<2x32xf32>
    %c8_251 = arith.constant 8 : index
    %c0_252 = arith.constant 0 : index
    %778 = vector.load %arg14[%c8_251, %c0_252] : memref<16x96xf32, #tpu.memory_space<vmem>>, vector<2x96xf32>
    %779 = vector.extract_strided_slice %778 {offsets = [0, 0], sizes = [2, 32], strides = [1, 1]} : vector<2x96xf32> to vector<2x32xf32>
    %780 = vector.extract_strided_slice %750 {offsets = [0, 0], sizes = [2, 32], strides = [1, 1]} : vector<2x96xf32> to vector<2x32xf32>
    %781 = arith.addf %779, %780 : vector<2x32xf32>
    %782 = arith.negf %781 : vector<2x32xf32>
    %783 = math.exp %782 : vector<2x32xf32>
    %cst_253 = arith.constant 1.000000e+00 : f32
    %784 = vector.broadcast %cst_253 : f32 to vector<2x32xf32>
    %785 = arith.addf %784, %783 : vector<2x32xf32>
    %786 = arith.divf %784, %785 : vector<2x32xf32>
    %787 = vector.extract_strided_slice %778 {offsets = [0, 32], sizes = [2, 32], strides = [1, 1]} : vector<2x96xf32> to vector<2x32xf32>
    %788 = vector.extract_strided_slice %750 {offsets = [0, 32], sizes = [2, 32], strides = [1, 1]} : vector<2x96xf32> to vector<2x32xf32>
    %789 = arith.addf %787, %788 : vector<2x32xf32>
    %790 = arith.negf %789 : vector<2x32xf32>
    %791 = math.exp %790 : vector<2x32xf32>
    %cst_254 = arith.constant 1.000000e+00 : f32
    %792 = vector.broadcast %cst_254 : f32 to vector<2x32xf32>
    %793 = arith.addf %792, %791 : vector<2x32xf32>
    %794 = arith.divf %792, %793 : vector<2x32xf32>
    %795 = vector.extract_strided_slice %778 {offsets = [0, 64], sizes = [2, 32], strides = [1, 1]} : vector<2x96xf32> to vector<2x32xf32>
    %796 = vector.extract_strided_slice %750 {offsets = [0, 64], sizes = [2, 32], strides = [1, 1]} : vector<2x96xf32> to vector<2x32xf32>
    %797 = arith.mulf %786, %796 : vector<2x32xf32>
    %798 = arith.addf %795, %797 : vector<2x32xf32>
    %799 = math.tanh %798 : vector<2x32xf32>
    %cst_255 = arith.constant 1.000000e+00 : f32
    %800 = vector.broadcast %cst_255 : f32 to vector<2x32xf32>
    %801 = arith.subf %800, %794 : vector<2x32xf32>
    %802 = arith.mulf %801, %799 : vector<2x32xf32>
    %803 = arith.mulf %794, %742 : vector<2x32xf32>
    %804 = arith.addf %802, %803 : vector<2x32xf32>
    %c6_256 = arith.constant 6 : index
    %c0_257 = arith.constant 0 : index
    %805 = vector.load %arg15[%c6_256, %c0_257] : memref<16x32xf32, #tpu.memory_space<vmem>>, vector<2x32xf32>
    tpu.vector_store %arg15[%c6_256, %c0_257], %777 {strides = array<i32>} : memref<16x32xf32, #tpu.memory_space<vmem>>, vector<2x32xf32>,
    %c8_258 = arith.constant 8 : index
    %c0_259 = arith.constant 0 : index
    %806 = vector.load %arg16[%c8_258, %c0_259] : memref<16x32xf32, #tpu.memory_space<vmem>>, vector<2x32xf32>
    tpu.vector_store %arg16[%c8_258, %c0_259], %804 {strides = array<i32>} : memref<16x32xf32, #tpu.memory_space<vmem>>, vector<2x32xf32>,
    %cst_260 = arith.constant dense<0.000000e+00> : vector<2x96xf32>
    %807 = tpu.matmul %777, %550, %cst_260 {dimension_numbers = #tpu.dot_dimension_numbers<[1], [0], [0], [1], [0, 0, 1, 1], [], []>} : vector<2x32xf32>, vector<32x96xf32>, vector<2x96xf32> -> vector<2x96xf32>
    %808 = vector.broadcast %552 : vector<1x96xf32> to vector<2x96xf32>
    %809 = arith.addf %807, %808 : vector<2x96xf32>
    %cst_261 = arith.constant dense<0.000000e+00> : vector<2x96xf32>
    %810 = tpu.matmul %804, %554, %cst_261 {dimension_numbers = #tpu.dot_dimension_numbers<[1], [0], [0], [1], [0, 0, 1, 1], [], []>} : vector<2x32xf32>, vector<32x96xf32>, vector<2x96xf32> -> vector<2x96xf32>
    %811 = vector.broadcast %556 : vector<1x96xf32> to vector<2x96xf32>
    %812 = arith.addf %810, %811 : vector<2x96xf32>
    %c8_262 = arith.constant 8 : index
    %c0_263 = arith.constant 0 : index
    %813 = vector.load %arg13[%c8_262, %c0_263] : memref<16x96xf32, #tpu.memory_space<vmem>>, vector<2x96xf32>
    %814 = vector.extract_strided_slice %813 {offsets = [0, 0], sizes = [2, 32], strides = [1, 1]} : vector<2x96xf32> to vector<2x32xf32>
    %815 = vector.extract_strided_slice %809 {offsets = [0, 0], sizes = [2, 32], strides = [1, 1]} : vector<2x96xf32> to vector<2x32xf32>
    %816 = arith.addf %814, %815 : vector<2x32xf32>
    %817 = arith.negf %816 : vector<2x32xf32>
    %818 = math.exp %817 : vector<2x32xf32>
    %cst_264 = arith.constant 1.000000e+00 : f32
    %819 = vector.broadcast %cst_264 : f32 to vector<2x32xf32>
    %820 = arith.addf %819, %818 : vector<2x32xf32>
    %821 = arith.divf %819, %820 : vector<2x32xf32>
    %822 = vector.extract_strided_slice %813 {offsets = [0, 32], sizes = [2, 32], strides = [1, 1]} : vector<2x96xf32> to vector<2x32xf32>
    %823 = vector.extract_strided_slice %809 {offsets = [0, 32], sizes = [2, 32], strides = [1, 1]} : vector<2x96xf32> to vector<2x32xf32>
    %824 = arith.addf %822, %823 : vector<2x32xf32>
    %825 = arith.negf %824 : vector<2x32xf32>
    %826 = math.exp %825 : vector<2x32xf32>
    %cst_265 = arith.constant 1.000000e+00 : f32
    %827 = vector.broadcast %cst_265 : f32 to vector<2x32xf32>
    %828 = arith.addf %827, %826 : vector<2x32xf32>
    %829 = arith.divf %827, %828 : vector<2x32xf32>
    %830 = vector.extract_strided_slice %813 {offsets = [0, 64], sizes = [2, 32], strides = [1, 1]} : vector<2x96xf32> to vector<2x32xf32>
    %831 = vector.extract_strided_slice %809 {offsets = [0, 64], sizes = [2, 32], strides = [1, 1]} : vector<2x96xf32> to vector<2x32xf32>
    %832 = arith.mulf %821, %831 : vector<2x32xf32>
    %833 = arith.addf %830, %832 : vector<2x32xf32>
    %834 = math.tanh %833 : vector<2x32xf32>
    %cst_266 = arith.constant 1.000000e+00 : f32
    %835 = vector.broadcast %cst_266 : f32 to vector<2x32xf32>
    %836 = arith.subf %835, %829 : vector<2x32xf32>
    %837 = arith.mulf %836, %834 : vector<2x32xf32>
    %838 = arith.mulf %829, %777 : vector<2x32xf32>
    %839 = arith.addf %837, %838 : vector<2x32xf32>
    %c6_267 = arith.constant 6 : index
    %c0_268 = arith.constant 0 : index
    %840 = vector.load %arg14[%c6_267, %c0_268] : memref<16x96xf32, #tpu.memory_space<vmem>>, vector<2x96xf32>
    %841 = vector.extract_strided_slice %840 {offsets = [0, 0], sizes = [2, 32], strides = [1, 1]} : vector<2x96xf32> to vector<2x32xf32>
    %842 = vector.extract_strided_slice %812 {offsets = [0, 0], sizes = [2, 32], strides = [1, 1]} : vector<2x96xf32> to vector<2x32xf32>
    %843 = arith.addf %841, %842 : vector<2x32xf32>
    %844 = arith.negf %843 : vector<2x32xf32>
    %845 = math.exp %844 : vector<2x32xf32>
    %cst_269 = arith.constant 1.000000e+00 : f32
    %846 = vector.broadcast %cst_269 : f32 to vector<2x32xf32>
    %847 = arith.addf %846, %845 : vector<2x32xf32>
    %848 = arith.divf %846, %847 : vector<2x32xf32>
    %849 = vector.extract_strided_slice %840 {offsets = [0, 32], sizes = [2, 32], strides = [1, 1]} : vector<2x96xf32> to vector<2x32xf32>
    %850 = vector.extract_strided_slice %812 {offsets = [0, 32], sizes = [2, 32], strides = [1, 1]} : vector<2x96xf32> to vector<2x32xf32>
    %851 = arith.addf %849, %850 : vector<2x32xf32>
    %852 = arith.negf %851 : vector<2x32xf32>
    %853 = math.exp %852 : vector<2x32xf32>
    %cst_270 = arith.constant 1.000000e+00 : f32
    %854 = vector.broadcast %cst_270 : f32 to vector<2x32xf32>
    %855 = arith.addf %854, %853 : vector<2x32xf32>
    %856 = arith.divf %854, %855 : vector<2x32xf32>
    %857 = vector.extract_strided_slice %840 {offsets = [0, 64], sizes = [2, 32], strides = [1, 1]} : vector<2x96xf32> to vector<2x32xf32>
    %858 = vector.extract_strided_slice %812 {offsets = [0, 64], sizes = [2, 32], strides = [1, 1]} : vector<2x96xf32> to vector<2x32xf32>
    %859 = arith.mulf %848, %858 : vector<2x32xf32>
    %860 = arith.addf %857, %859 : vector<2x32xf32>
    %861 = math.tanh %860 : vector<2x32xf32>
    %cst_271 = arith.constant 1.000000e+00 : f32
    %862 = vector.broadcast %cst_271 : f32 to vector<2x32xf32>
    %863 = arith.subf %862, %856 : vector<2x32xf32>
    %864 = arith.mulf %863, %861 : vector<2x32xf32>
    %865 = arith.mulf %856, %804 : vector<2x32xf32>
    %866 = arith.addf %864, %865 : vector<2x32xf32>
    %c8_272 = arith.constant 8 : index
    %c0_273 = arith.constant 0 : index
    %867 = vector.load %arg15[%c8_272, %c0_273] : memref<16x32xf32, #tpu.memory_space<vmem>>, vector<2x32xf32>
    tpu.vector_store %arg15[%c8_272, %c0_273], %839 {strides = array<i32>} : memref<16x32xf32, #tpu.memory_space<vmem>>, vector<2x32xf32>,
    %c6_274 = arith.constant 6 : index
    %c0_275 = arith.constant 0 : index
    %868 = vector.load %arg16[%c6_274, %c0_275] : memref<16x32xf32, #tpu.memory_space<vmem>>, vector<2x32xf32>
    tpu.vector_store %arg16[%c6_274, %c0_275], %866 {strides = array<i32>} : memref<16x32xf32, #tpu.memory_space<vmem>>, vector<2x32xf32>,
    %cst_276 = arith.constant dense<0.000000e+00> : vector<2x96xf32>
    %869 = tpu.matmul %839, %550, %cst_276 {dimension_numbers = #tpu.dot_dimension_numbers<[1], [0], [0], [1], [0, 0, 1, 1], [], []>} : vector<2x32xf32>, vector<32x96xf32>, vector<2x96xf32> -> vector<2x96xf32>
    %870 = vector.broadcast %552 : vector<1x96xf32> to vector<2x96xf32>
    %871 = arith.addf %869, %870 : vector<2x96xf32>
    %cst_277 = arith.constant dense<0.000000e+00> : vector<2x96xf32>
    %872 = tpu.matmul %866, %554, %cst_277 {dimension_numbers = #tpu.dot_dimension_numbers<[1], [0], [0], [1], [0, 0, 1, 1], [], []>} : vector<2x32xf32>, vector<32x96xf32>, vector<2x96xf32> -> vector<2x96xf32>
    %873 = vector.broadcast %556 : vector<1x96xf32> to vector<2x96xf32>
    %874 = arith.addf %872, %873 : vector<2x96xf32>
    %c10_278 = arith.constant 10 : index
    %c0_279 = arith.constant 0 : index
    %875 = vector.load %arg13[%c10_278, %c0_279] : memref<16x96xf32, #tpu.memory_space<vmem>>, vector<2x96xf32>
    %876 = vector.extract_strided_slice %875 {offsets = [0, 0], sizes = [2, 32], strides = [1, 1]} : vector<2x96xf32> to vector<2x32xf32>
    %877 = vector.extract_strided_slice %871 {offsets = [0, 0], sizes = [2, 32], strides = [1, 1]} : vector<2x96xf32> to vector<2x32xf32>
    %878 = arith.addf %876, %877 : vector<2x32xf32>
    %879 = arith.negf %878 : vector<2x32xf32>
    %880 = math.exp %879 : vector<2x32xf32>
    %cst_280 = arith.constant 1.000000e+00 : f32
    %881 = vector.broadcast %cst_280 : f32 to vector<2x32xf32>
    %882 = arith.addf %881, %880 : vector<2x32xf32>
    %883 = arith.divf %881, %882 : vector<2x32xf32>
    %884 = vector.extract_strided_slice %875 {offsets = [0, 32], sizes = [2, 32], strides = [1, 1]} : vector<2x96xf32> to vector<2x32xf32>
    %885 = vector.extract_strided_slice %871 {offsets = [0, 32], sizes = [2, 32], strides = [1, 1]} : vector<2x96xf32> to vector<2x32xf32>
    %886 = arith.addf %884, %885 : vector<2x32xf32>
    %887 = arith.negf %886 : vector<2x32xf32>
    %888 = math.exp %887 : vector<2x32xf32>
    %cst_281 = arith.constant 1.000000e+00 : f32
    %889 = vector.broadcast %cst_281 : f32 to vector<2x32xf32>
    %890 = arith.addf %889, %888 : vector<2x32xf32>
    %891 = arith.divf %889, %890 : vector<2x32xf32>
    %892 = vector.extract_strided_slice %875 {offsets = [0, 64], sizes = [2, 32], strides = [1, 1]} : vector<2x96xf32> to vector<2x32xf32>
    %893 = vector.extract_strided_slice %871 {offsets = [0, 64], sizes = [2, 32], strides = [1, 1]} : vector<2x96xf32> to vector<2x32xf32>
    %894 = arith.mulf %883, %893 : vector<2x32xf32>
    %895 = arith.addf %892, %894 : vector<2x32xf32>
    %896 = math.tanh %895 : vector<2x32xf32>
    %cst_282 = arith.constant 1.000000e+00 : f32
    %897 = vector.broadcast %cst_282 : f32 to vector<2x32xf32>
    %898 = arith.subf %897, %891 : vector<2x32xf32>
    %899 = arith.mulf %898, %896 : vector<2x32xf32>
    %900 = arith.mulf %891, %839 : vector<2x32xf32>
    %901 = arith.addf %899, %900 : vector<2x32xf32>
    %c4_283 = arith.constant 4 : index
    %c0_284 = arith.constant 0 : index
    %902 = vector.load %arg14[%c4_283, %c0_284] : memref<16x96xf32, #tpu.memory_space<vmem>>, vector<2x96xf32>
    %903 = vector.extract_strided_slice %902 {offsets = [0, 0], sizes = [2, 32], strides = [1, 1]} : vector<2x96xf32> to vector<2x32xf32>
    %904 = vector.extract_strided_slice %874 {offsets = [0, 0], sizes = [2, 32], strides = [1, 1]} : vector<2x96xf32> to vector<2x32xf32>
    %905 = arith.addf %903, %904 : vector<2x32xf32>
    %906 = arith.negf %905 : vector<2x32xf32>
    %907 = math.exp %906 : vector<2x32xf32>
    %cst_285 = arith.constant 1.000000e+00 : f32
    %908 = vector.broadcast %cst_285 : f32 to vector<2x32xf32>
    %909 = arith.addf %908, %907 : vector<2x32xf32>
    %910 = arith.divf %908, %909 : vector<2x32xf32>
    %911 = vector.extract_strided_slice %902 {offsets = [0, 32], sizes = [2, 32], strides = [1, 1]} : vector<2x96xf32> to vector<2x32xf32>
    %912 = vector.extract_strided_slice %874 {offsets = [0, 32], sizes = [2, 32], strides = [1, 1]} : vector<2x96xf32> to vector<2x32xf32>
    %913 = arith.addf %911, %912 : vector<2x32xf32>
    %914 = arith.negf %913 : vector<2x32xf32>
    %915 = math.exp %914 : vector<2x32xf32>
    %cst_286 = arith.constant 1.000000e+00 : f32
    %916 = vector.broadcast %cst_286 : f32 to vector<2x32xf32>
    %917 = arith.addf %916, %915 : vector<2x32xf32>
    %918 = arith.divf %916, %917 : vector<2x32xf32>
    %919 = vector.extract_strided_slice %902 {offsets = [0, 64], sizes = [2, 32], strides = [1, 1]} : vector<2x96xf32> to vector<2x32xf32>
    %920 = vector.extract_strided_slice %874 {offsets = [0, 64], sizes = [2, 32], strides = [1, 1]} : vector<2x96xf32> to vector<2x32xf32>
    %921 = arith.mulf %910, %920 : vector<2x32xf32>
    %922 = arith.addf %919, %921 : vector<2x32xf32>
    %923 = math.tanh %922 : vector<2x32xf32>
    %cst_287 = arith.constant 1.000000e+00 : f32
    %924 = vector.broadcast %cst_287 : f32 to vector<2x32xf32>
    %925 = arith.subf %924, %918 : vector<2x32xf32>
    %926 = arith.mulf %925, %923 : vector<2x32xf32>
    %927 = arith.mulf %918, %866 : vector<2x32xf32>
    %928 = arith.addf %926, %927 : vector<2x32xf32>
    %c10_288 = arith.constant 10 : index
    %c0_289 = arith.constant 0 : index
    %929 = vector.load %arg15[%c10_288, %c0_289] : memref<16x32xf32, #tpu.memory_space<vmem>>, vector<2x32xf32>
    tpu.vector_store %arg15[%c10_288, %c0_289], %901 {strides = array<i32>} : memref<16x32xf32, #tpu.memory_space<vmem>>, vector<2x32xf32>,
    %c4_290 = arith.constant 4 : index
    %c0_291 = arith.constant 0 : index
    %930 = vector.load %arg16[%c4_290, %c0_291] : memref<16x32xf32, #tpu.memory_space<vmem>>, vector<2x32xf32>
    tpu.vector_store %arg16[%c4_290, %c0_291], %928 {strides = array<i32>} : memref<16x32xf32, #tpu.memory_space<vmem>>, vector<2x32xf32>,
    %cst_292 = arith.constant dense<0.000000e+00> : vector<2x96xf32>
    %931 = tpu.matmul %901, %550, %cst_292 {dimension_numbers = #tpu.dot_dimension_numbers<[1], [0], [0], [1], [0, 0, 1, 1], [], []>} : vector<2x32xf32>, vector<32x96xf32>, vector<2x96xf32> -> vector<2x96xf32>
    %932 = vector.broadcast %552 : vector<1x96xf32> to vector<2x96xf32>
    %933 = arith.addf %931, %932 : vector<2x96xf32>
    %cst_293 = arith.constant dense<0.000000e+00> : vector<2x96xf32>
    %934 = tpu.matmul %928, %554, %cst_293 {dimension_numbers = #tpu.dot_dimension_numbers<[1], [0], [0], [1], [0, 0, 1, 1], [], []>} : vector<2x32xf32>, vector<32x96xf32>, vector<2x96xf32> -> vector<2x96xf32>
    %935 = vector.broadcast %556 : vector<1x96xf32> to vector<2x96xf32>
    %936 = arith.addf %934, %935 : vector<2x96xf32>
    %c12_294 = arith.constant 12 : index
    %c0_295 = arith.constant 0 : index
    %937 = vector.load %arg13[%c12_294, %c0_295] : memref<16x96xf32, #tpu.memory_space<vmem>>, vector<2x96xf32>
    %938 = vector.extract_strided_slice %937 {offsets = [0, 0], sizes = [2, 32], strides = [1, 1]} : vector<2x96xf32> to vector<2x32xf32>
    %939 = vector.extract_strided_slice %933 {offsets = [0, 0], sizes = [2, 32], strides = [1, 1]} : vector<2x96xf32> to vector<2x32xf32>
    %940 = arith.addf %938, %939 : vector<2x32xf32>
    %941 = arith.negf %940 : vector<2x32xf32>
    %942 = math.exp %941 : vector<2x32xf32>
    %cst_296 = arith.constant 1.000000e+00 : f32
    %943 = vector.broadcast %cst_296 : f32 to vector<2x32xf32>
    %944 = arith.addf %943, %942 : vector<2x32xf32>
    %945 = arith.divf %943, %944 : vector<2x32xf32>
    %946 = vector.extract_strided_slice %937 {offsets = [0, 32], sizes = [2, 32], strides = [1, 1]} : vector<2x96xf32> to vector<2x32xf32>
    %947 = vector.extract_strided_slice %933 {offsets = [0, 32], sizes = [2, 32], strides = [1, 1]} : vector<2x96xf32> to vector<2x32xf32>
    %948 = arith.addf %946, %947 : vector<2x32xf32>
    %949 = arith.negf %948 : vector<2x32xf32>
    %950 = math.exp %949 : vector<2x32xf32>
    %cst_297 = arith.constant 1.000000e+00 : f32
    %951 = vector.broadcast %cst_297 : f32 to vector<2x32xf32>
    %952 = arith.addf %951, %950 : vector<2x32xf32>
    %953 = arith.divf %951, %952 : vector<2x32xf32>
    %954 = vector.extract_strided_slice %937 {offsets = [0, 64], sizes = [2, 32], strides = [1, 1]} : vector<2x96xf32> to vector<2x32xf32>
    %955 = vector.extract_strided_slice %933 {offsets = [0, 64], sizes = [2, 32], strides = [1, 1]} : vector<2x96xf32> to vector<2x32xf32>
    %956 = arith.mulf %945, %955 : vector<2x32xf32>
    %957 = arith.addf %954, %956 : vector<2x32xf32>
    %958 = math.tanh %957 : vector<2x32xf32>
    %cst_298 = arith.constant 1.000000e+00 : f32
    %959 = vector.broadcast %cst_298 : f32 to vector<2x32xf32>
    %960 = arith.subf %959, %953 : vector<2x32xf32>
    %961 = arith.mulf %960, %958 : vector<2x32xf32>
    %962 = arith.mulf %953, %901 : vector<2x32xf32>
    %963 = arith.addf %961, %962 : vector<2x32xf32>
    %c2_299 = arith.constant 2 : index
    %c0_300 = arith.constant 0 : index
    %964 = vector.load %arg14[%c2_299, %c0_300] : memref<16x96xf32, #tpu.memory_space<vmem>>, vector<2x96xf32>
    %965 = vector.extract_strided_slice %964 {offsets = [0, 0], sizes = [2, 32], strides = [1, 1]} : vector<2x96xf32> to vector<2x32xf32>
    %966 = vector.extract_strided_slice %936 {offsets = [0, 0], sizes = [2, 32], strides = [1, 1]} : vector<2x96xf32> to vector<2x32xf32>
    %967 = arith.addf %965, %966 : vector<2x32xf32>
    %968 = arith.negf %967 : vector<2x32xf32>
    %969 = math.exp %968 : vector<2x32xf32>
    %cst_301 = arith.constant 1.000000e+00 : f32
    %970 = vector.broadcast %cst_301 : f32 to vector<2x32xf32>
    %971 = arith.addf %970, %969 : vector<2x32xf32>
    %972 = arith.divf %970, %971 : vector<2x32xf32>
    %973 = vector.extract_strided_slice %964 {offsets = [0, 32], sizes = [2, 32], strides = [1, 1]} : vector<2x96xf32> to vector<2x32xf32>
    %974 = vector.extract_strided_slice %936 {offsets = [0, 32], sizes = [2, 32], strides = [1, 1]} : vector<2x96xf32> to vector<2x32xf32>
    %975 = arith.addf %973, %974 : vector<2x32xf32>
    %976 = arith.negf %975 : vector<2x32xf32>
    %977 = math.exp %976 : vector<2x32xf32>
    %cst_302 = arith.constant 1.000000e+00 : f32
    %978 = vector.broadcast %cst_302 : f32 to vector<2x32xf32>
    %979 = arith.addf %978, %977 : vector<2x32xf32>
    %980 = arith.divf %978, %979 : vector<2x32xf32>
    %981 = vector.extract_strided_slice %964 {offsets = [0, 64], sizes = [2, 32], strides = [1, 1]} : vector<2x96xf32> to vector<2x32xf32>
    %982 = vector.extract_strided_slice %936 {offsets = [0, 64], sizes = [2, 32], strides = [1, 1]} : vector<2x96xf32> to vector<2x32xf32>
    %983 = arith.mulf %972, %982 : vector<2x32xf32>
    %984 = arith.addf %981, %983 : vector<2x32xf32>
    %985 = math.tanh %984 : vector<2x32xf32>
    %cst_303 = arith.constant 1.000000e+00 : f32
    %986 = vector.broadcast %cst_303 : f32 to vector<2x32xf32>
    %987 = arith.subf %986, %980 : vector<2x32xf32>
    %988 = arith.mulf %987, %985 : vector<2x32xf32>
    %989 = arith.mulf %980, %928 : vector<2x32xf32>
    %990 = arith.addf %988, %989 : vector<2x32xf32>
    %c12_304 = arith.constant 12 : index
    %c0_305 = arith.constant 0 : index
    %991 = vector.load %arg15[%c12_304, %c0_305] : memref<16x32xf32, #tpu.memory_space<vmem>>, vector<2x32xf32>
    tpu.vector_store %arg15[%c12_304, %c0_305], %963 {strides = array<i32>} : memref<16x32xf32, #tpu.memory_space<vmem>>, vector<2x32xf32>,
    %c2_306 = arith.constant 2 : index
    %c0_307 = arith.constant 0 : index
    %992 = vector.load %arg16[%c2_306, %c0_307] : memref<16x32xf32, #tpu.memory_space<vmem>>, vector<2x32xf32>
    tpu.vector_store %arg16[%c2_306, %c0_307], %990 {strides = array<i32>} : memref<16x32xf32, #tpu.memory_space<vmem>>, vector<2x32xf32>,
    %cst_308 = arith.constant dense<0.000000e+00> : vector<2x96xf32>
    %993 = tpu.matmul %963, %550, %cst_308 {dimension_numbers = #tpu.dot_dimension_numbers<[1], [0], [0], [1], [0, 0, 1, 1], [], []>} : vector<2x32xf32>, vector<32x96xf32>, vector<2x96xf32> -> vector<2x96xf32>
    %994 = vector.broadcast %552 : vector<1x96xf32> to vector<2x96xf32>
    %995 = arith.addf %993, %994 : vector<2x96xf32>
    %cst_309 = arith.constant dense<0.000000e+00> : vector<2x96xf32>
    %996 = tpu.matmul %990, %554, %cst_309 {dimension_numbers = #tpu.dot_dimension_numbers<[1], [0], [0], [1], [0, 0, 1, 1], [], []>} : vector<2x32xf32>, vector<32x96xf32>, vector<2x96xf32> -> vector<2x96xf32>
    %997 = vector.broadcast %556 : vector<1x96xf32> to vector<2x96xf32>
    %998 = arith.addf %996, %997 : vector<2x96xf32>
    %c14_310 = arith.constant 14 : index
    %c0_311 = arith.constant 0 : index
    %999 = vector.load %arg13[%c14_310, %c0_311] : memref<16x96xf32, #tpu.memory_space<vmem>>, vector<2x96xf32>
    %1000 = vector.extract_strided_slice %999 {offsets = [0, 0], sizes = [2, 32], strides = [1, 1]} : vector<2x96xf32> to vector<2x32xf32>
    %1001 = vector.extract_strided_slice %995 {offsets = [0, 0], sizes = [2, 32], strides = [1, 1]} : vector<2x96xf32> to vector<2x32xf32>
    %1002 = arith.addf %1000, %1001 : vector<2x32xf32>
    %1003 = arith.negf %1002 : vector<2x32xf32>
    %1004 = math.exp %1003 : vector<2x32xf32>
    %cst_312 = arith.constant 1.000000e+00 : f32
    %1005 = vector.broadcast %cst_312 : f32 to vector<2x32xf32>
    %1006 = arith.addf %1005, %1004 : vector<2x32xf32>
    %1007 = arith.divf %1005, %1006 : vector<2x32xf32>
    %1008 = vector.extract_strided_slice %999 {offsets = [0, 32], sizes = [2, 32], strides = [1, 1]} : vector<2x96xf32> to vector<2x32xf32>
    %1009 = vector.extract_strided_slice %995 {offsets = [0, 32], sizes = [2, 32], strides = [1, 1]} : vector<2x96xf32> to vector<2x32xf32>
    %1010 = arith.addf %1008, %1009 : vector<2x32xf32>
    %1011 = arith.negf %1010 : vector<2x32xf32>
    %1012 = math.exp %1011 : vector<2x32xf32>
    %cst_313 = arith.constant 1.000000e+00 : f32
    %1013 = vector.broadcast %cst_313 : f32 to vector<2x32xf32>
    %1014 = arith.addf %1013, %1012 : vector<2x32xf32>
    %1015 = arith.divf %1013, %1014 : vector<2x32xf32>
    %1016 = vector.extract_strided_slice %999 {offsets = [0, 64], sizes = [2, 32], strides = [1, 1]} : vector<2x96xf32> to vector<2x32xf32>
    %1017 = vector.extract_strided_slice %995 {offsets = [0, 64], sizes = [2, 32], strides = [1, 1]} : vector<2x96xf32> to vector<2x32xf32>
    %1018 = arith.mulf %1007, %1017 : vector<2x32xf32>
    %1019 = arith.addf %1016, %1018 : vector<2x32xf32>
    %1020 = math.tanh %1019 : vector<2x32xf32>
    %cst_314 = arith.constant 1.000000e+00 : f32
    %1021 = vector.broadcast %cst_314 : f32 to vector<2x32xf32>
    %1022 = arith.subf %1021, %1015 : vector<2x32xf32>
    %1023 = arith.mulf %1022, %1020 : vector<2x32xf32>
    %1024 = arith.mulf %1015, %963 : vector<2x32xf32>
    %1025 = arith.addf %1023, %1024 : vector<2x32xf32>
    %c0_315 = arith.constant 0 : index
    %c0_316 = arith.constant 0 : index
    %1026 = vector.load %arg14[%c0_315, %c0_316] : memref<16x96xf32, #tpu.memory_space<vmem>>, vector<2x96xf32>
    %1027 = vector.extract_strided_slice %1026 {offsets = [0, 0], sizes = [2, 32], strides = [1, 1]} : vector<2x96xf32> to vector<2x32xf32>
    %1028 = vector.extract_strided_slice %998 {offsets = [0, 0], sizes = [2, 32], strides = [1, 1]} : vector<2x96xf32> to vector<2x32xf32>
    %1029 = arith.addf %1027, %1028 : vector<2x32xf32>
    %1030 = arith.negf %1029 : vector<2x32xf32>
    %1031 = math.exp %1030 : vector<2x32xf32>
    %cst_317 = arith.constant 1.000000e+00 : f32
    %1032 = vector.broadcast %cst_317 : f32 to vector<2x32xf32>
    %1033 = arith.addf %1032, %1031 : vector<2x32xf32>
    %1034 = arith.divf %1032, %1033 : vector<2x32xf32>
    %1035 = vector.extract_strided_slice %1026 {offsets = [0, 32], sizes = [2, 32], strides = [1, 1]} : vector<2x96xf32> to vector<2x32xf32>
    %1036 = vector.extract_strided_slice %998 {offsets = [0, 32], sizes = [2, 32], strides = [1, 1]} : vector<2x96xf32> to vector<2x32xf32>
    %1037 = arith.addf %1035, %1036 : vector<2x32xf32>
    %1038 = arith.negf %1037 : vector<2x32xf32>
    %1039 = math.exp %1038 : vector<2x32xf32>
    %cst_318 = arith.constant 1.000000e+00 : f32
    %1040 = vector.broadcast %cst_318 : f32 to vector<2x32xf32>
    %1041 = arith.addf %1040, %1039 : vector<2x32xf32>
    %1042 = arith.divf %1040, %1041 : vector<2x32xf32>
    %1043 = vector.extract_strided_slice %1026 {offsets = [0, 64], sizes = [2, 32], strides = [1, 1]} : vector<2x96xf32> to vector<2x32xf32>
    %1044 = vector.extract_strided_slice %998 {offsets = [0, 64], sizes = [2, 32], strides = [1, 1]} : vector<2x96xf32> to vector<2x32xf32>
    %1045 = arith.mulf %1034, %1044 : vector<2x32xf32>
    %1046 = arith.addf %1043, %1045 : vector<2x32xf32>
    %1047 = math.tanh %1046 : vector<2x32xf32>
    %cst_319 = arith.constant 1.000000e+00 : f32
    %1048 = vector.broadcast %cst_319 : f32 to vector<2x32xf32>
    %1049 = arith.subf %1048, %1042 : vector<2x32xf32>
    %1050 = arith.mulf %1049, %1047 : vector<2x32xf32>
    %1051 = arith.mulf %1042, %990 : vector<2x32xf32>
    %1052 = arith.addf %1050, %1051 : vector<2x32xf32>
    %c14_320 = arith.constant 14 : index
    %c0_321 = arith.constant 0 : index
    %1053 = vector.load %arg15[%c14_320, %c0_321] : memref<16x32xf32, #tpu.memory_space<vmem>>, vector<2x32xf32>
    tpu.vector_store %arg15[%c14_320, %c0_321], %1025 {strides = array<i32>} : memref<16x32xf32, #tpu.memory_space<vmem>>, vector<2x32xf32>,
    %c0_322 = arith.constant 0 : index
    %c0_323 = arith.constant 0 : index
    %1054 = vector.load %arg16[%c0_322, %c0_323] : memref<16x32xf32, #tpu.memory_space<vmem>>, vector<2x32xf32>
    tpu.vector_store %arg16[%c0_322, %c0_323], %1052 {strides = array<i32>} : memref<16x32xf32, #tpu.memory_space<vmem>>, vector<2x32xf32>,
    %c0_324 = arith.constant 0 : index
    %c0_325 = arith.constant 0 : index
    %1055 = vector.load %arg15[%c0_324, %c0_325] : memref<16x32xf32, #tpu.memory_space<vmem>>, vector<16x32xf32>
    %c0_326 = arith.constant 0 : index
    %c0_327 = arith.constant 0 : index
    %c0_328 = arith.constant 0 : index
    %1056 = vector.load %arg10[%c0_326, %c0_327, %c0_328] : memref<2x32x1xf32, #tpu.memory_space<vmem>>, vector<1x32x1xf32>
    %1057 = vector.shape_cast %1056 : vector<1x32x1xf32> to vector<32x1xf32>
    %cst_329 = arith.constant dense<0.000000e+00> : vector<16x1xf32>
    %1058 = tpu.matmul %1055, %1057, %cst_329 {dimension_numbers = #tpu.dot_dimension_numbers<[1], [0], [0], [1], [0, 0, 1, 1], [], []>} : vector<16x32xf32>, vector<32x1xf32>, vector<16x1xf32> -> vector<16x1xf32>
    %c0_330 = arith.constant 0 : index
    %c0_331 = arith.constant 0 : index
    %1059 = vector.load %arg16[%c0_330, %c0_331] : memref<16x32xf32, #tpu.memory_space<vmem>>, vector<16x32xf32>
    %c1_332 = arith.constant 1 : index
    %c0_333 = arith.constant 0 : index
    %c0_334 = arith.constant 0 : index
    %1060 = vector.load %arg10[%c1_332, %c0_333, %c0_334] : memref<2x32x1xf32, #tpu.memory_space<vmem>>, vector<1x32x1xf32>
    %1061 = vector.shape_cast %1060 : vector<1x32x1xf32> to vector<32x1xf32>
    %cst_335 = arith.constant dense<0.000000e+00> : vector<16x1xf32>
    %1062 = tpu.matmul %1059, %1061, %cst_335 {dimension_numbers = #tpu.dot_dimension_numbers<[1], [0], [0], [1], [0, 0, 1, 1], [], []>} : vector<16x32xf32>, vector<32x1xf32>, vector<16x1xf32> -> vector<16x1xf32>
    %1063 = arith.addf %1058, %1062 : vector<16x1xf32>
    %c0_336 = arith.constant 0 : index
    %c0_337 = arith.constant 0 : index
    %1064 = vector.load %arg11[%c0_336, %c0_337] : memref<1x1xf32, #tpu.memory_space<vmem>>, vector<1x1xf32>
    %1065 = vector.broadcast %1064 : vector<1x1xf32> to vector<16x1xf32>
    %1066 = arith.addf %1063, %1065 : vector<16x1xf32>
    %1067 = math.tanh %1066 : vector<16x1xf32>
    %c0_338 = arith.constant 0 : index
    %c0_339 = arith.constant 0 : index
    %1068 = vector.load %arg12[%c0_338, %c0_339] : memref<16x1xf32, #tpu.memory_space<vmem>>, vector<16x1xf32>
    tpu.vector_store %arg12[%c0_338, %c0_339], %1067 {strides = array<i32>} : memref<16x1xf32, #tpu.memory_space<vmem>>, vector<16x1xf32>,
    return
  }
}

</mosaic_0001>

<llo_original>
// kernel: tpu_custom_call.1
$region0: #{tpu_custom_call.1}
  #allocation0 [shape = 'u32[]', space=smem, size = 0x4, offset = 0x4, fixed_abs, tag = 'smem constant byte address 0x4 - core index']
  #allocation1 [shape = 'u32[144,128]{1,0:T(1,128)}', space=vmem, size = 0x12000, scoped, tag = 'internal scratch']
  #allocation2 [shape = 'f32[16,96]{1,0:T(8,128)}', space=vmem, size = 0x2000, scoped, tag = 'scratch operand']
  #allocation3 [shape = 'f32[16,96]{1,0:T(8,128)}', space=vmem, size = 0x2000, scoped, tag = 'scratch operand']
  #allocation4 [shape = 'f32[16,32]{1,0:T(8,128)}', space=vmem, size = 0x2000, scoped, tag = 'scratch operand']
  #allocation5 [shape = 'f32[16,32]{1,0:T(8,128)}', space=vmem, size = 0x2000, scoped, tag = 'scratch operand']
  #allocation6 [shape = 'f32[1,1]{1,0:T(1,128)S(1)}', space=vmem, size = 0x200, scoped, tag = 'scoped memory for tpu_custom_call.1']
  %s0 = inlined_call_operand.hbm [shape: f32[16,16], index: 0, kind: input, shape index: {}]
  %s1 = inlined_call_operand.hbm [shape: f32[2,16,96], index: 1, kind: input, shape index: {}]
  %s2 = inlined_call_operand.vmem [shape: f32[2,32,96], index: 2, kind: input, shape index: {}]
  %s3 = inlined_call_operand.vmem [shape: f32[2,1,96], index: 3, kind: input, shape index: {}]
  %s4 = inlined_call_operand.vmem [shape: f32[2,1,96], index: 4, kind: input, shape index: {}]
  %s5 = inlined_call_operand.hbm [shape: f32[2,32,96], index: 5, kind: input, shape index: {}]
  %s6 = inlined_call_operand.hbm [shape: f32[2,32,96], index: 6, kind: input, shape index: {}]
  %s7 = inlined_call_operand.hbm [shape: f32[2,32,96], index: 7, kind: input, shape index: {}]
  %s8 = inlined_call_operand.vmem [shape: f32[2,1,96], index: 8, kind: input, shape index: {}]
  %s9 = inlined_call_operand.vmem [shape: f32[2,1,96], index: 9, kind: input, shape index: {}]
  %s10 = inlined_call_operand.vmem [shape: f32[2,32,1], index: 10, kind: input, shape index: {}]
  %s11 = inlined_call_operand.<no memory space> [shape: f32[1,1], index: 11, kind: input, shape index: {}]
  %s12 = inlined_call_operand.vmem [shape: f32[16,1], index: 12, kind: output, shape index: {}]
  %s13 = sld [smem:[#allocation0]]
  $region78: #{tpu_custom_call.1} parent=0
    _
  %s15 = ssub.s32 1, %s13
  %s16 = scalar_select 0, %s15, %s13
  %v17 = vstv %s11
  %18 = vst [vmem:[#allocation6] sm:$0x1] %v17
  $region1: #{tpu_custom_call.1} parent=0
    #allocation7 [shape = 'u8[8192]{0}', space=vmem, size = 0x2000, scoped, tag = 'input window, operand 0, single buffered']
    #allocation8 [shape = 's32[1]{0}', space=sflag, size = 0x4, scoped, tag = 'scoped memory for tpu_custom_call.1']
    #allocation9 [shape = 'u8[16384]{0}', space=vmem, size = 0x4000, scoped, tag = 'input window, operand 1, single buffered']
    #allocation10 [shape = 's32[1]{0}', space=sflag, size = 0x4, scoped, tag = 'scoped memory for tpu_custom_call.1']
    #allocation11 [shape = 'u8[32768]{0}', space=vmem, size = 0x8000, scoped, tag = 'input window, operand 5, single buffered']
    #allocation12 [shape = 'u8[32768]{0}', space=vmem, size = 0x8000, scoped, tag = 'input window, operand 6, single buffered']
    #allocation13 [shape = 's32[1]{0}', space=sflag, size = 0x4, scoped, tag = 'scoped memory for tpu_custom_call.1']
    #allocation14 [shape = 'u8[32768]{0}', space=vmem, size = 0x8000, scoped, tag = 'input window, operand 7, single buffered']
    %19 = vsyncpa [#allocation8], 0
    %20 = vsyncpa [#allocation10], 0
    %21 = vsyncpa [#allocation13], 0
    // Predicated region
    $region2: #{tpu_custom_call.1} parent=1 // pred_check
      _
    $region3: #{tpu_custom_call.1} parent=1 // pred_check_branch
      %23 = sbr.rel (0) target = $region5
    $region4: #{tpu_custom_call.1} parent=1 // pred_region
      %s25 = ssub.s32 256, 256
      %26 = vsyncadd [#allocation8], %s25
      %s27 = sshll.u32 [#allocation7], 4
      %s28 = int_to_ptr.vmem [resolvable:$true] %s27
      %33 = dma.hbm_to_vmem [thread:$0]  %s0, 256, %s28, [#allocation8], 128, 128, 8
    $region5: #{tpu_custom_call.1} parent=1 // pred_fallthru
      _
    // Predicated region
    $region6: #{tpu_custom_call.1} parent=1 // pred_check
      _
    $region7: #{tpu_custom_call.1} parent=1 // pred_check_branch
      %35 = sbr.rel (0) target = $region9
    $region8: #{tpu_custom_call.1} parent=1 // pred_region
      %s37 = ssub.s32 512, 512
      %38 = vsyncadd [#allocation10], %s37
      %s39 = sshll.u32 [#allocation9], 4
      %s40 = int_to_ptr.vmem [resolvable:$true] %s39
      %45 = dma.hbm_to_vmem [thread:$0]  %s1, 512, %s40, [#allocation10], 128, 128, 8
    $region9: #{tpu_custom_call.1} parent=1 // pred_fallthru
      _
    // Predicated region
    $region10: #{tpu_custom_call.1} parent=1 // pred_check
      _
    $region11: #{tpu_custom_call.1} parent=1 // pred_check_branch
      %47 = sbr.rel (0) target = $region13
    $region12: #{tpu_custom_call.1} parent=1 // pred_region
      _
    $region13: #{tpu_custom_call.1} parent=1 // pred_fallthru
      _
    // Predicated region
    $region14: #{tpu_custom_call.1} parent=1 // pred_check
      _
    $region15: #{tpu_custom_call.1} parent=1 // pred_check_branch
      %49 = sbr.rel (0) target = $region17
    $region16: #{tpu_custom_call.1} parent=1 // pred_region
      _
    $region17: #{tpu_custom_call.1} parent=1 // pred_fallthru
      _
    // Predicated region
    $region18: #{tpu_custom_call.1} parent=1 // pred_check
      _
    $region19: #{tpu_custom_call.1} parent=1 // pred_check_branch
      %51 = sbr.rel (0) target = $region21
    $region20: #{tpu_custom_call.1} parent=1 // pred_region
      _
    $region21: #{tpu_custom_call.1} parent=1 // pred_fallthru
      _
    // Predicated region
    $region22: #{tpu_custom_call.1} parent=1 // pred_check
      _
    $region23: #{tpu_custom_call.1} parent=1 // pred_check_branch
      %53 = sbr.rel (0) target = $region25
    $region24: #{tpu_custom_call.1} parent=1 // pred_region
      %s55 = ssub.s32 1024, 1024
      %56 = vsyncadd [#allocation10], %s55
      %s57 = sshll.u32 [#allocation11], 4
      %s58 = int_to_ptr.vmem [resolvable:$true] %s57
      %63 = dma.hbm_to_vmem [thread:$0]  %s5, 1024, %s58, [#allocation10], 128, 128, 8
    $region25: #{tpu_custom_call.1} parent=1 // pred_fallthru
      _
    // Predicated region
    $region26: #{tpu_custom_call.1} parent=1 // pred_check
      _
    $region27: #{tpu_custom_call.1} parent=1 // pred_check_branch
      %65 = sbr.rel (0) target = $region29
    $region28: #{tpu_custom_call.1} parent=1 // pred_region
      %s67 = ssub.s32 1024, 1024
      %68 = vsyncadd [#allocation13], %s67
      %s69 = sshll.u32 [#allocation12], 4
      %s70 = int_to_ptr.vmem [resolvable:$true] %s69
      %75 = dma.hbm_to_vmem [thread:$0]  %s6, 1024, %s70, [#allocation13], 128, 128, 8
    $region29: #{tpu_custom_call.1} parent=1 // pred_fallthru
      _
    // Predicated region
    $region30: #{tpu_custom_call.1} parent=1 // pred_check
      _
    $region31: #{tpu_custom_call.1} parent=1 // pred_check_branch
      %77 = sbr.rel (0) target = $region33
    $region32: #{tpu_custom_call.1} parent=1 // pred_region
      %s79 = ssub.s32 1024, 1024
      %80 = vsyncadd [#allocation13], %s79
      %s81 = sshll.u32 [#allocation14], 4
      %s82 = int_to_ptr.vmem [resolvable:$true] %s81
      %87 = dma.hbm_to_vmem [thread:$0]  %s7, 1024, %s82, [#allocation13], 128, 128, 8
    $region33: #{tpu_custom_call.1} parent=1 // pred_fallthru
      _
    // Predicated region
    $region34: #{tpu_custom_call.1} parent=1 // pred_check
      _
    $region35: #{tpu_custom_call.1} parent=1 // pred_check_branch
      %89 = sbr.rel (0) target = $region37
    $region36: #{tpu_custom_call.1} parent=1 // pred_region
      _
    $region37: #{tpu_custom_call.1} parent=1 // pred_fallthru
      _
    // Predicated region
    $region38: #{tpu_custom_call.1} parent=1 // pred_check
      _
    $region39: #{tpu_custom_call.1} parent=1 // pred_check_branch
      %91 = sbr.rel (0) target = $region41
    $region40: #{tpu_custom_call.1} parent=1 // pred_region
      _
    $region41: #{tpu_custom_call.1} parent=1 // pred_fallthru
      _
    // Predicated region
    $region42: #{tpu_custom_call.1} parent=1 // pred_check
      _
    $region43: #{tpu_custom_call.1} parent=1 // pred_check_branch
      %93 = sbr.rel (0) target = $region45
    $region44: #{tpu_custom_call.1} parent=1 // pred_region
      _
    $region45: #{tpu_custom_call.1} parent=1 // pred_fallthru
      _
    // Predicated region
    $region46: #{tpu_custom_call.1} parent=1 // pred_check
      _
    $region47: #{tpu_custom_call.1} parent=1 // pred_check_branch
      %95 = sbr.rel (0) target = $region49
    $region48: #{tpu_custom_call.1} parent=1 // pred_region
      _
    $region49: #{tpu_custom_call.1} parent=1 // pred_fallthru
      _
    // Predicated region
    $region50: #{tpu_custom_call.1} parent=1 // pred_check
      _
    $region51: #{tpu_custom_call.1} parent=1 // pred_check_branch
      %97 = sbr.rel (0) target = $region53
    $region52: #{tpu_custom_call.1} parent=1 // pred_region
      %98 = dma.done [#allocation8], 256
    $region53: #{tpu_custom_call.1} parent=1 // pred_fallthru
      _
    // Predicated region
    $region54: #{tpu_custom_call.1} parent=1 // pred_check
      _
    $region55: #{tpu_custom_call.1} parent=1 // pred_check_branch
      %100 = sbr.rel (0) target = $region57
    $region56: #{tpu_custom_call.1} parent=1 // pred_region
      %101 = dma.done [#allocation10], 512
    $region57: #{tpu_custom_call.1} parent=1 // pred_fallthru
      _
    // Predicated region
    $region58: #{tpu_custom_call.1} parent=1 // pred_check
      _
    $region59: #{tpu_custom_call.1} parent=1 // pred_check_branch
      %103 = sbr.rel (0) target = $region61
    $region60: #{tpu_custom_call.1} parent=1 // pred_region
      %104 = dma.done [#allocation10], 1024
    $region61: #{tpu_custom_call.1} parent=1 // pred_fallthru
      _
    // Predicated region
    $region62: #{tpu_custom_call.1} parent=1 // pred_check
      _
    $region63: #{tpu_custom_call.1} parent=1 // pred_check_branch
      %106 = sbr.rel (0) target = $region65
    $region64: #{tpu_custom_call.1} parent=1 // pred_region
      %107 = dma.done [#allocation13], 1024
    $region65: #{tpu_custom_call.1} parent=1 // pred_fallthru
      _
    // Predicated region
    $region66: #{tpu_custom_call.1} parent=1 // pred_check
      _
    $region67: #{tpu_custom_call.1} parent=1 // pred_check_branch
      %109 = sbr.rel (0) target = $region69
    $region68: #{tpu_custom_call.1} parent=1 // pred_region
      %110 = dma.done [#allocation13], 1024
    $region69: #{tpu_custom_call.1} parent=1 // pred_fallthru
      _
    %v111 = vld [vmem:[#allocation7] sm:$0xff]
    %v112 = vld [vmem:[#allocation7 + $0x8] sm:$0xff]
    %v113 = vld [vmem:[#allocation9] sm:$0xff]
    %v114 = vld [vmem:[#allocation9 + $0x8] sm:$0xff]
    %v115 = vld [vmem:[%s3] sm:$0x1]
    %v117 = vlaneseq
    %v118 = vshrl.u32 %v117, 7
    %v119 = vsub.s32 0, %v118
    %v120 = vrot.slane %v115, %v119
    %vm122 = vcmask 130048
    %v124 = vsel %vm122, %v111, 0
    %v127 = vsel %vm122, %v112, 0
    %129 = vmatprep.subr.mxu0 0.0
    %130 = vmatpush1.msra.mxu0 %v113
    %131 = vmatprep.subr.mxu0 0.0
    %132 = vmatpush1.msra.mxu0 %v114
    %133 = vmatprep.subr.mxu0 0.0
    %134 = vmatpush1.msra.mxu0 0.0
    %135 = vmatprep.subr.mxu0 0.0
    %136 = vmatpush1.msra.mxu0 0.0
    %137 = vmatprep.subr.mxu0 0.0
    %138 = vmatpush1.msra.mxu0 0.0
    %139 = vmatprep.subr.mxu0 0.0
    %140 = vmatpush1.msra.mxu0 0.0
    %141 = vmatprep.subr.mxu0 0.0
    %142 = vmatpush1.msra.mxu0 0.0
    %143 = vmatprep.subr.mxu0 0.0
    %144 = vmatpush1.msra.mxu0 0.0
    %145 = vmatprep.subr.mxu0 0.0
    %146 = vmatpush1.msra.mxu0 0.0
    %147 = vmatprep.subr.mxu0 0.0
    %148 = vmatpush1.msra.mxu0 0.0
    %149 = vmatprep.subr.mxu0 0.0
    %150 = vmatpush1.msra.mxu0 0.0
    %151 = vmatprep.subr.mxu0 0.0
    %152 = vmatpush1.msra.mxu0 0.0
    %153 = vmatprep.subr.mxu0 0.0
    %154 = vmatpush1.msra.mxu0 0.0
    %155 = vmatprep.subr.mxu0 0.0
    %156 = vmatpush1.msra.mxu0 0.0
    %157 = vmatprep.subr.mxu0 0.0
    %158 = vmatpush1.msra.mxu0 0.0
    %159 = vmatprep.subr.mxu0 0.0
    %160 = vmatpush1.msra.mxu0 0.0
    %161 = vmatprep.subr.mxu0 0.0
    %162 = vmatpush1.msra.mxu0 0.0
    %163 = vmatprep.subr.mxu0 0.0
    %164 = vmatpush1.msra.mxu0 0.0
    %165 = vmatprep.subr.mxu0 0.0
    %166 = vmatpush1.msra.mxu0 0.0
    %167 = vmatprep.subr.mxu0 0.0
    %168 = vmatpush1.msra.mxu0 0.0
    %169 = vmatprep.subr.mxu0 0.0
    %170 = vmatpush1.msra.mxu0 0.0
    %171 = vmatprep.subr.mxu0 0.0
    %172 = vmatpush1.msra.mxu0 0.0
    %173 = vmatprep.subr.mxu0 0.0
    %174 = vmatpush1.msra.mxu0 0.0
    %175 = vmatprep.subr.mxu0 0.0
    %176 = vmatpush1.msra.mxu0 0.0
    %177 = vmatprep.subr.mxu0 0.0
    %178 = vmatpush1.msra.mxu0 0.0
    %179 = vmatprep.subr.mxu0 0.0
    %180 = vmatpush1.msra.mxu0 0.0
    %181 = vmatprep.subr.mxu0 0.0
    %182 = vmatpush1.msra.mxu0 0.0
    %183 = vmatprep.subr.mxu0 0.0
    %184 = vmatpush1.msra.mxu0 0.0
    %185 = vmatprep.subr.mxu0 0.0
    %186 = vmatpush1.msra.mxu0 0.0
    %187 = vmatprep.subr.mxu0 0.0
    %188 = vmatpush1.msra.mxu0 0.0
    %189 = vmatprep.subr.mxu0 0.0
    %190 = vmatpush1.msra.mxu0 0.0
    %191 = vmatprep.subr.mxu0 0.0
    %192 = vmatpush1.msra.mxu0 0.0
    %193 = vmatprep.mubr.f32.mxu0 0.0
    %194 = vmatmul.mubr.f32.gmra.mrb[0].mxu0 %v124
    %v195 = vpop.f32.mrb[0].mxu0
    %v196 = vadd.f32 %v120, %v195
    %v197 = vpop.f32.mrb[0].mxu0
    %198 = vmatprep.mubr.f32.mxu0 0.0
    %199 = vmatmul.mubr.f32.gmra.mrb[0].mxu0 %v127
    %v200 = vpop.f32.mrb[0].mxu0
    %v201 = vadd.f32 %v120, %v200
    %v202 = vpop.f32.mrb[0].mxu0
    %203 = vdwg.mxu0
    %vm204 = vcmask 785408
    %205 = vst.msk [vmem:[#allocation2] sm:$0xff] %vm204, %v196
    %206 = vst.msk [vmem:[#allocation2 + $0x8] sm:$0xff] %vm204, %v201
    %s207 = scalar_lea.vmem [#allocation9], 16
    %v208 = vld [vmem:[%s207] sm:$0xff]
    %v209 = vld [vmem:[%s207 + $0x8] sm:$0xff]
    %s210 = scalar_lea.vmem %s3, 1
    %v211 = vld [vmem:[%s210] sm:$0x1]
    %v213 = vlaneseq
    %v214 = vshrl.u32 %v213, 7
    %v215 = vsub.s32 0, %v214
    %v216 = vrot.slane %v211, %v215
    %218 = vmatprep.subr.mxu0 0.0
    %219 = vmatpush1.msra.mxu0 %v208
    %220 = vmatprep.subr.mxu0 0.0
    %221 = vmatpush1.msra.mxu0 %v209
    %222 = vmatprep.subr.mxu0 0.0
    %223 = vmatpush1.msra.mxu0 0.0
    %224 = vmatprep.subr.mxu0 0.0
    %225 = vmatpush1.msra.mxu0 0.0
    %226 = vmatprep.subr.mxu0 0.0
    %227 = vmatpush1.msra.mxu0 0.0
    %228 = vmatprep.subr.mxu0 0.0
    %229 = vmatpush1.msra.mxu0 0.0
    %230 = vmatprep.subr.mxu0 0.0
    %231 = vmatpush1.msra.mxu0 0.0
    %232 = vmatprep.subr.mxu0 0.0
    %233 = vmatpush1.msra.mxu0 0.0
    %234 = vmatprep.subr.mxu0 0.0
    %235 = vmatpush1.msra.mxu0 0.0
    %236 = vmatprep.subr.mxu0 0.0
    %237 = vmatpush1.msra.mxu0 0.0
    %238 = vmatprep.subr.mxu0 0.0
    %239 = vmatpush1.msra.mxu0 0.0
    %240 = vmatprep.subr.mxu0 0.0
    %241 = vmatpush1.msra.mxu0 0.0
    %242 = vmatprep.subr.mxu0 0.0
    %243 = vmatpush1.msra.mxu0 0.0
    %244 = vmatprep.subr.mxu0 0.0
    %245 = vmatpush1.msra.mxu0 0.0
    %246 = vmatprep.subr.mxu0 0.0
    %247 = vmatpush1.msra.mxu0 0.0
    %248 = vmatprep.subr.mxu0 0.0
    %249 = vmatpush1.msra.mxu0 0.0
    %250 = vmatprep.subr.mxu0 0.0
    %251 = vmatpush1.msra.mxu0 0.0
    %252 = vmatprep.subr.mxu0 0.0
    %253 = vmatpush1.msra.mxu0 0.0
    %254 = vmatprep.subr.mxu0 0.0
    %255 = vmatpush1.msra.mxu0 0.0
    %256 = vmatprep.subr.mxu0 0.0
    %257 = vmatpush1.msra.mxu0 0.0
    %258 = vmatprep.subr.mxu0 0.0
    %259 = vmatpush1.msra.mxu0 0.0
    %260 = vmatprep.subr.mxu0 0.0
    %261 = vmatpush1.msra.mxu0 0.0
    %262 = vmatprep.subr.mxu0 0.0
    %263 = vmatpush1.msra.mxu0 0.0
    %264 = vmatprep.subr.mxu0 0.0
    %265 = vmatpush1.msra.mxu0 0.0
    %266 = vmatprep.subr.mxu0 0.0
    %267 = vmatpush1.msra.mxu0 0.0
    %268 = vmatprep.subr.mxu0 0.0
    %269 = vmatpush1.msra.mxu0 0.0
    %270 = vmatprep.subr.mxu0 0.0
    %271 = vmatpush1.msra.mxu0 0.0
    %272 = vmatprep.subr.mxu0 0.0
    %273 = vmatpush1.msra.mxu0 0.0
    %274 = vmatprep.subr.mxu0 0.0
    %275 = vmatpush1.msra.mxu0 0.0
    %276 = vmatprep.subr.mxu0 0.0
    %277 = vmatpush1.msra.mxu0 0.0
    %278 = vmatprep.subr.mxu0 0.0
    %279 = vmatpush1.msra.mxu0 0.0
    %280 = vmatprep.subr.mxu0 0.0
    %281 = vmatpush1.msra.mxu0 0.0
    %282 = vmatprep.mubr.f32.mxu0 0.0
    %283 = vmatmul.mubr.f32.gmra.mrb[0].mxu0 %v124
    %v284 = vpop.f32.mrb[0].mxu0
    %v285 = vadd.f32 %v216, %v284
    %v286 = vpop.f32.mrb[0].mxu0
    %287 = vmatprep.mubr.f32.mxu0 0.0
    %288 = vmatmul.mubr.f32.gmra.mrb[0].mxu0 %v127
    %v289 = vpop.f32.mrb[0].mxu0
    %v290 = vadd.f32 %v216, %v289
    %v291 = vpop.f32.mrb[0].mxu0
    %292 = vdwg.mxu0
    %293 = vst.msk [vmem:[#allocation3] sm:$0xff] %vm204, %v285
    %294 = vst.msk [vmem:[#allocation3 + $0x8] sm:$0xff] %vm204, %v290
    %v295 = vld [vmem:[%s2] sm:$0xff]
    %v296 = vld [vmem:[%s2 + $0x8] sm:$0xff]
    %v297 = vld [vmem:[%s2 + $0x10] sm:$0xff]
    %v298 = vld [vmem:[%s2 + $0x18] sm:$0xff]
    %v299 = vld [vmem:[%s4] sm:$0x1]
    %s300 = scalar_lea.vmem %s2, 32
    %v301 = vld [vmem:[%s300] sm:$0xff]
    %v302 = vld [vmem:[%s300 + $0x8] sm:$0xff]
    %v303 = vld [vmem:[%s300 + $0x10] sm:$0xff]
    %v304 = vld [vmem:[%s300 + $0x18] sm:$0xff]
    %s305 = scalar_lea.vmem %s4, 1
    %v306 = vld [vmem:[%s305] sm:$0x1]
    %v308 = vlaneseq
    %v309 = vshrl.u32 %v308, 7
    %v310 = vsub.s32 0, %v309
    %v311 = vrot.slane %v299, %v310
    %vm313 = vcmask 261120
    %v315 = vsel %vm313, 0.0, 0
    %317 = vmatprep.subr.mxu0 0.0
    %318 = vmatpush1.msra.mxu0 %v295
    %319 = vmatprep.subr.mxu0 0.0
    %320 = vmatpush1.msra.mxu0 %v296
    %321 = vmatprep.subr.mxu0 0.0
    %322 = vmatpush1.msra.mxu0 %v297
    %323 = vmatprep.subr.mxu0 0.0
    %324 = vmatpush1.msra.mxu0 %v298
    %325 = vmatprep.subr.mxu0 0.0
    %326 = vmatpush1.msra.mxu0 0.0
    %327 = vmatprep.subr.mxu0 0.0
    %328 = vmatpush1.msra.mxu0 0.0
    %329 = vmatprep.subr.mxu0 0.0
    %330 = vmatpush1.msra.mxu0 0.0
    %331 = vmatprep.subr.mxu0 0.0
    %332 = vmatpush1.msra.mxu0 0.0
    %333 = vmatprep.subr.mxu0 0.0
    %334 = vmatpush1.msra.mxu0 0.0
    %335 = vmatprep.subr.mxu0 0.0
    %336 = vmatpush1.msra.mxu0 0.0
    %337 = vmatprep.subr.mxu0 0.0
    %338 = vmatpush1.msra.mxu0 0.0
    %339 = vmatprep.subr.mxu0 0.0
    %340 = vmatpush1.msra.mxu0 0.0
    %341 = vmatprep.subr.mxu0 0.0
    %342 = vmatpush1.msra.mxu0 0.0
    %343 = vmatprep.subr.mxu0 0.0
    %344 = vmatpush1.msra.mxu0 0.0
    %345 = vmatprep.subr.mxu0 0.0
    %346 = vmatpush1.msra.mxu0 0.0
    %347 = vmatprep.subr.mxu0 0.0
    %348 = vmatpush1.msra.mxu0 0.0
    %349 = vmatprep.subr.mxu0 0.0
    %350 = vmatpush1.msra.mxu0 0.0
    %351 = vmatprep.subr.mxu0 0.0
    %352 = vmatpush1.msra.mxu0 0.0
    %353 = vmatprep.subr.mxu0 0.0
    %354 = vmatpush1.msra.mxu0 0.0
    %355 = vmatprep.subr.mxu0 0.0
    %356 = vmatpush1.msra.mxu0 0.0
    %357 = vmatprep.subr.mxu0 0.0
    %358 = vmatpush1.msra.mxu0 0.0
    %359 = vmatprep.subr.mxu0 0.0
    %360 = vmatpush1.msra.mxu0 0.0
    %361 = vmatprep.subr.mxu0 0.0
    %362 = vmatpush1.msra.mxu0 0.0
    %363 = vmatprep.subr.mxu0 0.0
    %364 = vmatpush1.msra.mxu0 0.0
    %365 = vmatprep.subr.mxu0 0.0
    %366 = vmatpush1.msra.mxu0 0.0
    %367 = vmatprep.subr.mxu0 0.0
    %368 = vmatpush1.msra.mxu0 0.0
    %369 = vmatprep.subr.mxu0 0.0
    %370 = vmatpush1.msra.mxu0 0.0
    %371 = vmatprep.subr.mxu0 0.0
    %372 = vmatpush1.msra.mxu0 0.0
    %373 = vmatprep.subr.mxu0 0.0
    %374 = vmatpush1.msra.mxu0 0.0
    %375 = vmatprep.subr.mxu0 0.0
    %376 = vmatpush1.msra.mxu0 0.0
    %377 = vmatprep.subr.mxu0 0.0
    %378 = vmatpush1.msra.mxu0 0.0
    %379 = vmatprep.subr.mxu0 0.0
    %380 = vmatpush1.msra.mxu0 0.0
    %381 = vmatprep.mubr.f32.mxu0 0.0
    %382 = vmatmul.mubr.f32.gmra.mrb[0].mxu0 %v315
    %v383 = vpop.f32.mrb[0].mxu0
    %v384 = vadd.f32 %v311, %v383
    %v385 = vpop.f32.mrb[0].mxu0
    %386 = vdwg.mxu0
    %v388 = vlaneseq
    %v389 = vshrl.u32 %v388, 7
    %v390 = vsub.s32 0, %v389
    %v391 = vrot.slane %v306, %v390
    %393 = vmatprep.subr.mxu0 0.0
    %394 = vmatpush1.msra.mxu0 %v301
    %395 = vmatprep.subr.mxu0 0.0
    %396 = vmatpush1.msra.mxu0 %v302
    %397 = vmatprep.subr.mxu0 0.0
    %398 = vmatpush1.msra.mxu0 %v303
    %399 = vmatprep.subr.mxu0 0.0
    %400 = vmatpush1.msra.mxu0 %v304
    %401 = vmatprep.subr.mxu0 0.0
    %402 = vmatpush1.msra.mxu0 0.0
    %403 = vmatprep.subr.mxu0 0.0
    %404 = vmatpush1.msra.mxu0 0.0
    %405 = vmatprep.subr.mxu0 0.0
    %406 = vmatpush1.msra.mxu0 0.0
    %407 = vmatprep.subr.mxu0 0.0
    %408 = vmatpush1.msra.mxu0 0.0
    %409 = vmatprep.subr.mxu0 0.0
    %410 = vmatpush1.msra.mxu0 0.0
    %411 = vmatprep.subr.mxu0 0.0
    %412 = vmatpush1.msra.mxu0 0.0
    %413 = vmatprep.subr.mxu0 0.0
    %414 = vmatpush1.msra.mxu0 0.0
    %415 = vmatprep.subr.mxu0 0.0
    %416 = vmatpush1.msra.mxu0 0.0
    %417 = vmatprep.subr.mxu0 0.0
    %418 = vmatpush1.msra.mxu0 0.0
    %419 = vmatprep.subr.mxu0 0.0
    %420 = vmatpush1.msra.mxu0 0.0
    %421 = vmatprep.subr.mxu0 0.0
    %422 = vmatpush1.msra.mxu0 0.0
    %423 = vmatprep.subr.mxu0 0.0
    %424 = vmatpush1.msra.mxu0 0.0
    %425 = vmatprep.subr.mxu0 0.0
    %426 = vmatpush1.msra.mxu0 0.0
    %427 = vmatprep.subr.mxu0 0.0
    %428 = vmatpush1.msra.mxu0 0.0
    %429 = vmatprep.subr.mxu0 0.0
    %430 = vmatpush1.msra.mxu0 0.0
    %431 = vmatprep.subr.mxu0 0.0
    %432 = vmatpush1.msra.mxu0 0.0
    %433 = vmatprep.subr.mxu0 0.0
    %434 = vmatpush1.msra.mxu0 0.0
    %435 = vmatprep.subr.mxu0 0.0
    %436 = vmatpush1.msra.mxu0 0.0
    %437 = vmatprep.subr.mxu0 0.0
    %438 = vmatpush1.msra.mxu0 0.0
    %439 = vmatprep.subr.mxu0 0.0
    %440 = vmatpush1.msra.mxu0 0.0
    %441 = vmatprep.subr.mxu0 0.0
    %442 = vmatpush1.msra.mxu0 0.0
    %443 = vmatprep.subr.mxu0 0.0
    %444 = vmatpush1.msra.mxu0 0.0
    %445 = vmatprep.subr.mxu0 0.0
    %446 = vmatpush1.msra.mxu0 0.0
    %447 = vmatprep.subr.mxu0 0.0
    %448 = vmatpush1.msra.mxu0 0.0
    %449 = vmatprep.subr.mxu0 0.0
    %450 = vmatpush1.msra.mxu0 0.0
    %451 = vmatprep.subr.mxu0 0.0
    %452 = vmatpush1.msra.mxu0 0.0
    %453 = vmatprep.subr.mxu0 0.0
    %454 = vmatpush1.msra.mxu0 0.0
    %455 = vmatprep.subr.mxu0 0.0
    %456 = vmatpush1.msra.mxu0 0.0
    %457 = vmatprep.mubr.f32.mxu0 0.0
    %458 = vmatmul.mubr.f32.gmra.mrb[0].mxu0 %v315
    %v459 = vpop.f32.mrb[0].mxu0
    %v460 = vadd.f32 %v391, %v459
    %v461 = vpop.f32.mrb[0].mxu0
    %462 = vdwg.mxu0
    %v463 = vld [vmem:[#allocation2] sm:$0x3]
    %v464 = vadd.f32 %v463, %v384
    %v465 = vxor.u32 %v464, 2147483648
    %v466 = vmul.f32 %v465, 1.442695
    %v467 = vpow.pop %v466
    %v468 = vadd.f32 %v467, 1.0
    %v469 = vrcp.pop %v468
    %v470 = vmul.f32 1.0, %v469
    %472 = vrot.lane.b32.xlu0 %v384, 64
    %v473 = vpop.permute.xlu0 %472
    %v475 = vmul.f32 %v470, %v473
    %477 = vrot.lane.b32.xlu0 %v475, 64
    %v478 = vpop.permute.xlu0 %477
    %v480 = vadd.f32 %v463, %v478
    %v481 = vtanh.pop %v480
    %v482 = vsub.f32 1.0, %v470
    %484 = vrot.lane.b32.xlu0 %v481, 96
    %v485 = vpop.permute.xlu0 %484
    %v487 = vmul.f32 %v482, %v485
    %v488 = vmul.f32 %v470, 0.0
    %v489 = vadd.f32 %v487, %v488
    %v490 = vld [vmem:[#allocation3 + $0xe] sm:$0x3]
    %v491 = vadd.f32 %v490, %v460
    %v492 = vxor.u32 %v491, 2147483648
    %v493 = vmul.f32 %v492, 1.442695
    %v494 = vpow.pop %v493
    %v495 = vadd.f32 %v494, 1.0
    %v496 = vrcp.pop %v495
    %v497 = vmul.f32 1.0, %v496
    %499 = vrot.lane.b32.xlu0 %v460, 64
    %v500 = vpop.permute.xlu0 %499
    %v502 = vmul.f32 %v497, %v500
    %504 = vrot.lane.b32.xlu0 %v502, 64
    %v505 = vpop.permute.xlu0 %504
    %v507 = vadd.f32 %v490, %v505
    %v508 = vtanh.pop %v507
    %v509 = vsub.f32 1.0, %v497
    %511 = vrot.lane.b32.xlu0 %v508, 96
    %v512 = vpop.permute.xlu0 %511
    %v514 = vmul.f32 %v509, %v512
    %v515 = vmul.f32 %v497, 0.0
    %v516 = vadd.f32 %v514, %v515
    %518 = vrot.lane.b32.xlu0 %v489, 96
    %v519 = vpop.permute.xlu0 %518
    %vm521 = vcmask 254976
    %522 = vst.msk [vmem:[#allocation4] sm:$0x3] %vm521, %v519
    %524 = vrot.lane.b32.xlu0 %v516, 96
    %v525 = vpop.permute.xlu0 %524
    %527 = vst.msk [vmem:[#allocation5 + $0xe] sm:$0x3] %vm521, %v525
    %v528 = vsel %vm313, %v519, 0
    %530 = vmatprep.subr.mxu0 0.0
    %531 = vmatpush1.msra.mxu0 %v295
    %532 = vmatprep.subr.mxu0 0.0
    %533 = vmatpush1.msra.mxu0 %v296
    %534 = vmatprep.subr.mxu0 0.0
    %535 = vmatpush1.msra.mxu0 %v297
    %536 = vmatprep.subr.mxu0 0.0
    %537 = vmatpush1.msra.mxu0 %v298
    %538 = vmatprep.subr.mxu0 0.0
    %539 = vmatpush1.msra.mxu0 0.0
    %540 = vmatprep.subr.mxu0 0.0
    %541 = vmatpush1.msra.mxu0 0.0
    %542 = vmatprep.subr.mxu0 0.0
    %543 = vmatpush1.msra.mxu0 0.0
    %544 = vmatprep.subr.mxu0 0.0
    %545 = vmatpush1.msra.mxu0 0.0
    %546 = vmatprep.subr.mxu0 0.0
    %547 = vmatpush1.msra.mxu0 0.0
    %548 = vmatprep.subr.mxu0 0.0
    %549 = vmatpush1.msra.mxu0 0.0
    %550 = vmatprep.subr.mxu0 0.0
    %551 = vmatpush1.msra.mxu0 0.0
    %552 = vmatprep.subr.mxu0 0.0
    %553 = vmatpush1.msra.mxu0 0.0
    %554 = vmatprep.subr.mxu0 0.0
    %555 = vmatpush1.msra.mxu0 0.0
    %556 = vmatprep.subr.mxu0 0.0
    %557 = vmatpush1.msra.mxu0 0.0
    %558 = vmatprep.subr.mxu0 0.0
    %559 = vmatpush1.msra.mxu0 0.0
    %560 = vmatprep.subr.mxu0 0.0
    %561 = vmatpush1.msra.mxu0 0.0
    %562 = vmatprep.subr.mxu0 0.0
    %563 = vmatpush1.msra.mxu0 0.0
    %564 = vmatprep.subr.mxu0 0.0
    %565 = vmatpush1.msra.mxu0 0.0
    %566 = vmatprep.subr.mxu0 0.0
    %567 = vmatpush1.msra.mxu0 0.0
    %568 = vmatprep.subr.mxu0 0.0
    %569 = vmatpush1.msra.mxu0 0.0
    %570 = vmatprep.subr.mxu0 0.0
    %571 = vmatpush1.msra.mxu0 0.0
    %572 = vmatprep.subr.mxu0 0.0
    %573 = vmatpush1.msra.mxu0 0.0
    %574 = vmatprep.subr.mxu0 0.0
    %575 = vmatpush1.msra.mxu0 0.0
    %576 = vmatprep.subr.mxu0 0.0
    %577 = vmatpush1.msra.mxu0 0.0
    %578 = vmatprep.subr.mxu0 0.0
    %579 = vmatpush1.msra.mxu0 0.0
    %580 = vmatprep.subr.mxu0 0.0
    %581 = vmatpush1.msra.mxu0 0.0
    %582 = vmatprep.subr.mxu0 0.0
    %583 = vmatpush1.msra.mxu0 0.0
    %584 = vmatprep.subr.mxu0 0.0
    %585 = vmatpush1.msra.mxu0 0.0
    %586 = vmatprep.subr.mxu0 0.0
    %587 = vmatpush1.msra.mxu0 0.0
    %588 = vmatprep.subr.mxu0 0.0
    %589 = vmatpush1.msra.mxu0 0.0
    %590 = vmatprep.subr.mxu0 0.0
    %591 = vmatpush1.msra.mxu0 0.0
    %592 = vmatprep.subr.mxu0 0.0
    %593 = vmatpush1.msra.mxu0 0.0
    %594 = vmatprep.mubr.f32.mxu0 0.0
    %595 = vmatmul.mubr.f32.gmra.mrb[0].mxu0 %v528
    %v596 = vpop.f32.mrb[0].mxu0
    %v597 = vadd.f32 %v311, %v596
    %v598 = vpop.f32.mrb[0].mxu0
    %599 = vdwg.mxu0
    %v600 = vsel %vm313, %v525, 0
    %602 = vmatprep.subr.mxu0 0.0
    %603 = vmatpush1.msra.mxu0 %v301
    %604 = vmatprep.subr.mxu0 0.0
    %605 = vmatpush1.msra.mxu0 %v302
    %606 = vmatprep.subr.mxu0 0.0
    %607 = vmatpush1.msra.mxu0 %v303
    %608 = vmatprep.subr.mxu0 0.0
    %609 = vmatpush1.msra.mxu0 %v304
    %610 = vmatprep.subr.mxu0 0.0
    %611 = vmatpush1.msra.mxu0 0.0
    %612 = vmatprep.subr.mxu0 0.0
    %613 = vmatpush1.msra.mxu0 0.0
    %614 = vmatprep.subr.mxu0 0.0
    %615 = vmatpush1.msra.mxu0 0.0
    %616 = vmatprep.subr.mxu0 0.0
    %617 = vmatpush1.msra.mxu0 0.0
    %618 = vmatprep.subr.mxu0 0.0
    %619 = vmatpush1.msra.mxu0 0.0
    %620 = vmatprep.subr.mxu0 0.0
    %621 = vmatpush1.msra.mxu0 0.0
    %622 = vmatprep.subr.mxu0 0.0
    %623 = vmatpush1.msra.mxu0 0.0
    %624 = vmatprep.subr.mxu0 0.0
    %625 = vmatpush1.msra.mxu0 0.0
    %626 = vmatprep.subr.mxu0 0.0
    %627 = vmatpush1.msra.mxu0 0.0
    %628 = vmatprep.subr.mxu0 0.0
    %629 = vmatpush1.msra.mxu0 0.0
    %630 = vmatprep.subr.mxu0 0.0
    %631 = vmatpush1.msra.mxu0 0.0
    %632 = vmatprep.subr.mxu0 0.0
    %633 = vmatpush1.msra.mxu0 0.0
    %634 = vmatprep.subr.mxu0 0.0
    %635 = vmatpush1.msra.mxu0 0.0
    %636 = vmatprep.subr.mxu0 0.0
    %637 = vmatpush1.msra.mxu0 0.0
    %638 = vmatprep.subr.mxu0 0.0
    %639 = vmatpush1.msra.mxu0 0.0
    %640 = vmatprep.subr.mxu0 0.0
    %641 = vmatpush1.msra.mxu0 0.0
    %642 = vmatprep.subr.mxu0 0.0
    %643 = vmatpush1.msra.mxu0 0.0
    %644 = vmatprep.subr.mxu0 0.0
    %645 = vmatpush1.msra.mxu0 0.0
    %646 = vmatprep.subr.mxu0 0.0
    %647 = vmatpush1.msra.mxu0 0.0
    %648 = vmatprep.subr.mxu0 0.0
    %649 = vmatpush1.msra.mxu0 0.0
    %650 = vmatprep.subr.mxu0 0.0
    %651 = vmatpush1.msra.mxu0 0.0
    %652 = vmatprep.subr.mxu0 0.0
    %653 = vmatpush1.msra.mxu0 0.0
    %654 = vmatprep.subr.mxu0 0.0
    %655 = vmatpush1.msra.mxu0 0.0
    %656 = vmatprep.subr.mxu0 0.0
    %657 = vmatpush1.msra.mxu0 0.0
    %658 = vmatprep.subr.mxu0 0.0
    %659 = vmatpush1.msra.mxu0 0.0
    %660 = vmatprep.subr.mxu0 0.0
    %661 = vmatpush1.msra.mxu0 0.0
    %662 = vmatprep.subr.mxu0 0.0
    %663 = vmatpush1.msra.mxu0 0.0
    %664 = vmatprep.subr.mxu0 0.0
    %665 = vmatpush1.msra.mxu0 0.0
    %666 = vmatprep.mubr.f32.mxu0 0.0
    %667 = vmatmul.mubr.f32.gmra.mrb[0].mxu0 %v600
    %v668 = vpop.f32.mrb[0].mxu0
    %v669 = vadd.f32 %v391, %v668
    %v670 = vpop.f32.mrb[0].mxu0
    %671 = vdwg.mxu0
    %v672 = vld [vmem:[#allocation2 + $0x2] sm:$0x3]
    %v673 = vadd.f32 %v672, %v597
    %v674 = vxor.u32 %v673, 2147483648
    %v675 = vmul.f32 %v674, 1.442695
    %v676 = vpow.pop %v675
    %v677 = vadd.f32 %v676, 1.0
    %v678 = vrcp.pop %v677
    %v679 = vmul.f32 1.0, %v678
    %681 = vrot.lane.b32.xlu0 %v597, 64
    %v682 = vpop.permute.xlu0 %681
    %v684 = vmul.f32 %v679, %v682
    %686 = vrot.lane.b32.xlu0 %v684, 64
    %v687 = vpop.permute.xlu0 %686
    %v689 = vadd.f32 %v672, %v687
    %v690 = vtanh.pop %v689
    %v691 = vsub.f32 1.0, %v679
    %693 = vrot.lane.b32.xlu0 %v690, 96
    %v694 = vpop.permute.xlu0 %693
    %v696 = vmul.f32 %v691, %v694
    %v697 = vmul.f32 %v679, %v489
    %v698 = vadd.f32 %v696, %v697
    %v699 = vld [vmem:[#allocation3 + $0xc] sm:$0x3]
    %v700 = vadd.f32 %v699, %v669
    %v701 = vxor.u32 %v700, 2147483648
    %v702 = vmul.f32 %v701, 1.442695
    %v703 = vpow.pop %v702
    %v704 = vadd.f32 %v703, 1.0
    %v705 = vrcp.pop %v704
    %v706 = vmul.f32 1.0, %v705
    %708 = vrot.lane.b32.xlu0 %v669, 64
    %v709 = vpop.permute.xlu0 %708
    %v711 = vmul.f32 %v706, %v709
    %713 = vrot.lane.b32.xlu0 %v711, 64
    %v714 = vpop.permute.xlu0 %713
    %v716 = vadd.f32 %v699, %v714
    %v717 = vtanh.pop %v716
    %v718 = vsub.f32 1.0, %v706
    %720 = vrot.lane.b32.xlu0 %v717, 96
    %v721 = vpop.permute.xlu0 %720
    %v723 = vmul.f32 %v718, %v721
    %v724 = vmul.f32 %v706, %v516
    %v725 = vadd.f32 %v723, %v724
    %727 = vrot.lane.b32.xlu0 %v698, 96
    %v728 = vpop.permute.xlu0 %727
    %730 = vst.msk [vmem:[#allocation4 + $0x2] sm:$0x3] %vm521, %v728
    %732 = vrot.lane.b32.xlu0 %v725, 96
    %v733 = vpop.permute.xlu0 %732
    %735 = vst.msk [vmem:[#allocation5 + $0xc] sm:$0x3] %vm521, %v733
    %v736 = vsel %vm313, %v728, 0
    %738 = vmatprep.subr.mxu0 0.0
    %739 = vmatpush1.msra.mxu0 %v295
    %740 = vmatprep.subr.mxu0 0.0
    %741 = vmatpush1.msra.mxu0 %v296
    %742 = vmatprep.subr.mxu0 0.0
    %743 = vmatpush1.msra.mxu0 %v297
    %744 = vmatprep.subr.mxu0 0.0
    %745 = vmatpush1.msra.mxu0 %v298
    %746 = vmatprep.subr.mxu0 0.0
    %747 = vmatpush1.msra.mxu0 0.0
    %748 = vmatprep.subr.mxu0 0.0
    %749 = vmatpush1.msra.mxu0 0.0
    %750 = vmatprep.subr.mxu0 0.0
    %751 = vmatpush1.msra.mxu0 0.0
    %752 = vmatprep.subr.mxu0 0.0
    %753 = vmatpush1.msra.mxu0 0.0
    %754 = vmatprep.subr.mxu0 0.0
    %755 = vmatpush1.msra.mxu0 0.0
    %756 = vmatprep.subr.mxu0 0.0
    %757 = vmatpush1.msra.mxu0 0.0
    %758 = vmatprep.subr.mxu0 0.0
    %759 = vmatpush1.msra.mxu0 0.0
    %760 = vmatprep.subr.mxu0 0.0
    %761 = vmatpush1.msra.mxu0 0.0
    %762 = vmatprep.subr.mxu0 0.0
    %763 = vmatpush1.msra.mxu0 0.0
    %764 = vmatprep.subr.mxu0 0.0
    %765 = vmatpush1.msra.mxu0 0.0
    %766 = vmatprep.subr.mxu0 0.0
    %767 = vmatpush1.msra.mxu0 0.0
    %768 = vmatprep.subr.mxu0 0.0
    %769 = vmatpush1.msra.mxu0 0.0
    %770 = vmatprep.subr.mxu0 0.0
    %771 = vmatpush1.msra.mxu0 0.0
    %772 = vmatprep.subr.mxu0 0.0
    %773 = vmatpush1.msra.mxu0 0.0
    %774 = vmatprep.subr.mxu0 0.0
    %775 = vmatpush1.msra.mxu0 0.0
    %776 = vmatprep.subr.mxu0 0.0
    %777 = vmatpush1.msra.mxu0 0.0
    %778 = vmatprep.subr.mxu0 0.0
    %779 = vmatpush1.msra.mxu0 0.0
    %780 = vmatprep.subr.mxu0 0.0
    %781 = vmatpush1.msra.mxu0 0.0
    %782 = vmatprep.subr.mxu0 0.0
    %783 = vmatpush1.msra.mxu0 0.0
    %784 = vmatprep.subr.mxu0 0.0
    %785 = vmatpush1.msra.mxu0 0.0
    %786 = vmatprep.subr.mxu0 0.0
    %787 = vmatpush1.msra.mxu0 0.0
    %788 = vmatprep.subr.mxu0 0.0
    %789 = vmatpush1.msra.mxu0 0.0
    %790 = vmatprep.subr.mxu0 0.0
    %791 = vmatpush1.msra.mxu0 0.0
    %792 = vmatprep.subr.mxu0 0.0
    %793 = vmatpush1.msra.mxu0 0.0
    %794 = vmatprep.subr.mxu0 0.0
    %795 = vmatpush1.msra.mxu0 0.0
    %796 = vmatprep.subr.mxu0 0.0
    %797 = vmatpush1.msra.mxu0 0.0
    %798 = vmatprep.subr.mxu0 0.0
    %799 = vmatpush1.msra.mxu0 0.0
    %800 = vmatprep.subr.mxu0 0.0
    %801 = vmatpush1.msra.mxu0 0.0
    %802 = vmatprep.mubr.f32.mxu0 0.0
    %803 = vmatmul.mubr.f32.gmra.mrb[0].mxu0 %v736
    %v804 = vpop.f32.mrb[0].mxu0
    %v805 = vadd.f32 %v311, %v804
    %v806 = vpop.f32.mrb[0].mxu0
    %807 = vdwg.mxu0
    %v808 = vsel %vm313, %v733, 0
    %810 = vmatprep.subr.mxu0 0.0
    %811 = vmatpush1.msra.mxu0 %v301
    %812 = vmatprep.subr.mxu0 0.0
    %813 = vmatpush1.msra.mxu0 %v302
    %814 = vmatprep.subr.mxu0 0.0
    %815 = vmatpush1.msra.mxu0 %v303
    %816 = vmatprep.subr.mxu0 0.0
    %817 = vmatpush1.msra.mxu0 %v304
    %818 = vmatprep.subr.mxu0 0.0
    %819 = vmatpush1.msra.mxu0 0.0
    %820 = vmatprep.subr.mxu0 0.0
    %821 = vmatpush1.msra.mxu0 0.0
    %822 = vmatprep.subr.mxu0 0.0
    %823 = vmatpush1.msra.mxu0 0.0
    %824 = vmatprep.subr.mxu0 0.0
    %825 = vmatpush1.msra.mxu0 0.0
    %826 = vmatprep.subr.mxu0 0.0
    %827 = vmatpush1.msra.mxu0 0.0
    %828 = vmatprep.subr.mxu0 0.0
    %829 = vmatpush1.msra.mxu0 0.0
    %830 = vmatprep.subr.mxu0 0.0
    %831 = vmatpush1.msra.mxu0 0.0
    %832 = vmatprep.subr.mxu0 0.0
    %833 = vmatpush1.msra.mxu0 0.0
    %834 = vmatprep.subr.mxu0 0.0
    %835 = vmatpush1.msra.mxu0 0.0
    %836 = vmatprep.subr.mxu0 0.0
    %837 = vmatpush1.msra.mxu0 0.0
    %838 = vmatprep.subr.mxu0 0.0
    %839 = vmatpush1.msra.mxu0 0.0
    %840 = vmatprep.subr.mxu0 0.0
    %841 = vmatpush1.msra.mxu0 0.0
    %842 = vmatprep.subr.mxu0 0.0
    %843 = vmatpush1.msra.mxu0 0.0
    %844 = vmatprep.subr.mxu0 0.0
    %845 = vmatpush1.msra.mxu0 0.0
    %846 = vmatprep.subr.mxu0 0.0
    %847 = vmatpush1.msra.mxu0 0.0
    %848 = vmatprep.subr.mxu0 0.0
    %849 = vmatpush1.msra.mxu0 0.0
    %850 = vmatprep.subr.mxu0 0.0
    %851 = vmatpush1.msra.mxu0 0.0
    %852 = vmatprep.subr.mxu0 0.0
    %853 = vmatpush1.msra.mxu0 0.0
    %854 = vmatprep.subr.mxu0 0.0
    %855 = vmatpush1.msra.mxu0 0.0
    %856 = vmatprep.subr.mxu0 0.0
    %857 = vmatpush1.msra.mxu0 0.0
    %858 = vmatprep.subr.mxu0 0.0
    %859 = vmatpush1.msra.mxu0 0.0
    %860 = vmatprep.subr.mxu0 0.0
    %861 = vmatpush1.msra.mxu0 0.0
    %862 = vmatprep.subr.mxu0 0.0
    %863 = vmatpush1.msra.mxu0 0.0
    %864 = vmatprep.subr.mxu0 0.0
    %865 = vmatpush1.msra.mxu0 0.0
    %866 = vmatprep.subr.mxu0 0.0
    %867 = vmatpush1.msra.mxu0 0.0
    %868 = vmatprep.subr.mxu0 0.0
    %869 = vmatpush1.msra.mxu0 0.0
    %870 = vmatprep.subr.mxu0 0.0
    %871 = vmatpush1.msra.mxu0 0.0
    %872 = vmatprep.subr.mxu0 0.0
    %873 = vmatpush1.msra.mxu0 0.0
    %874 = vmatprep.mubr.f32.mxu0 0.0
    %875 = vmatmul.mubr.f32.gmra.mrb[0].mxu0 %v808
    %v876 = vpop.f32.mrb[0].mxu0
    %v877 = vadd.f32 %v391, %v876
    %v878 = vpop.f32.mrb[0].mxu0
    %879 = vdwg.mxu0
    %v880 = vld [vmem:[#allocation2 + $0x4] sm:$0x3]
    %v881 = vadd.f32 %v880, %v805
    %v882 = vxor.u32 %v881, 2147483648
    %v883 = vmul.f32 %v882, 1.442695
    %v884 = vpow.pop %v883
    %v885 = vadd.f32 %v884, 1.0
    %v886 = vrcp.pop %v885
    %v887 = vmul.f32 1.0, %v886
    %889 = vrot.lane.b32.xlu0 %v805, 64
    %v890 = vpop.permute.xlu0 %889
    %v892 = vmul.f32 %v887, %v890
    %894 = vrot.lane.b32.xlu0 %v892, 64
    %v895 = vpop.permute.xlu0 %894
    %v897 = vadd.f32 %v880, %v895
    %v898 = vtanh.pop %v897
    %v899 = vsub.f32 1.0, %v887
    %901 = vrot.lane.b32.xlu0 %v898, 96
    %v902 = vpop.permute.xlu0 %901
    %v904 = vmul.f32 %v899, %v902
    %v905 = vmul.f32 %v887, %v698
    %v906 = vadd.f32 %v904, %v905
    %v907 = vld [vmem:[#allocation3 + $0xa] sm:$0x3]
    %v908 = vadd.f32 %v907, %v877
    %v909 = vxor.u32 %v908, 2147483648
    %v910 = vmul.f32 %v909, 1.442695
    %v911 = vpow.pop %v910
    %v912 = vadd.f32 %v911, 1.0
    %v913 = vrcp.pop %v912
    %v914 = vmul.f32 1.0, %v913
    %916 = vrot.lane.b32.xlu0 %v877, 64
    %v917 = vpop.permute.xlu0 %916
    %v919 = vmul.f32 %v914, %v917
    %921 = vrot.lane.b32.xlu0 %v919, 64
    %v922 = vpop.permute.xlu0 %921
    %v924 = vadd.f32 %v907, %v922
    %v925 = vtanh.pop %v924
    %v926 = vsub.f32 1.0, %v914
    %928 = vrot.lane.b32.xlu0 %v925, 96
    %v929 = vpop.permute.xlu0 %928
    %v931 = vmul.f32 %v926, %v929
    %v932 = vmul.f32 %v914, %v725
    %v933 = vadd.f32 %v931, %v932
    %935 = vrot.lane.b32.xlu0 %v906, 96
    %v936 = vpop.permute.xlu0 %935
    %938 = vst.msk [vmem:[#allocation4 + $0x4] sm:$0x3] %vm521, %v936
    %940 = vrot.lane.b32.xlu0 %v933, 96
    %v941 = vpop.permute.xlu0 %940
    %943 = vst.msk [vmem:[#allocation5 + $0xa] sm:$0x3] %vm521, %v941
    %v944 = vsel %vm313, %v936, 0
    %946 = vmatprep.subr.mxu0 0.0
    %947 = vmatpush1.msra.mxu0 %v295
    %948 = vmatprep.subr.mxu0 0.0
    %949 = vmatpush1.msra.mxu0 %v296
    %950 = vmatprep.subr.mxu0 0.0
    %951 = vmatpush1.msra.mxu0 %v297
    %952 = vmatprep.subr.mxu0 0.0
    %953 = vmatpush1.msra.mxu0 %v298
    %954 = vmatprep.subr.mxu0 0.0
    %955 = vmatpush1.msra.mxu0 0.0
    %956 = vmatprep.subr.mxu0 0.0
    %957 = vmatpush1.msra.mxu0 0.0
    %958 = vmatprep.subr.mxu0 0.0
    %959 = vmatpush1.msra.mxu0 0.0
    %960 = vmatprep.subr.mxu0 0.0
    %961 = vmatpush1.msra.mxu0 0.0
    %962 = vmatprep.subr.mxu0 0.0
    %963 = vmatpush1.msra.mxu0 0.0
    %964 = vmatprep.subr.mxu0 0.0
    %965 = vmatpush1.msra.mxu0 0.0
    %966 = vmatprep.subr.mxu0 0.0
    %967 = vmatpush1.msra.mxu0 0.0
    %968 = vmatprep.subr.mxu0 0.0
    %969 = vmatpush1.msra.mxu0 0.0
    %970 = vmatprep.subr.mxu0 0.0
    %971 = vmatpush1.msra.mxu0 0.0
    %972 = vmatprep.subr.mxu0 0.0
    %973 = vmatpush1.msra.mxu0 0.0
    %974 = vmatprep.subr.mxu0 0.0
    %975 = vmatpush1.msra.mxu0 0.0
    %976 = vmatprep.subr.mxu0 0.0
    %977 = vmatpush1.msra.mxu0 0.0
    %978 = vmatprep.subr.mxu0 0.0
    %979 = vmatpush1.msra.mxu0 0.0
    %980 = vmatprep.subr.mxu0 0.0
    %981 = vmatpush1.msra.mxu0 0.0
    %982 = vmatprep.subr.mxu0 0.0
    %983 = vmatpush1.msra.mxu0 0.0
    %984 = vmatprep.subr.mxu0 0.0
    %985 = vmatpush1.msra.mxu0 0.0
    %986 = vmatprep.subr.mxu0 0.0
    %987 = vmatpush1.msra.mxu0 0.0
    %988 = vmatprep.subr.mxu0 0.0
    %989 = vmatpush1.msra.mxu0 0.0
    %990 = vmatprep.subr.mxu0 0.0
    %991 = vmatpush1.msra.mxu0 0.0
    %992 = vmatprep.subr.mxu0 0.0
    %993 = vmatpush1.msra.mxu0 0.0
    %994 = vmatprep.subr.mxu0 0.0
    %995 = vmatpush1.msra.mxu0 0.0
    %996 = vmatprep.subr.mxu0 0.0
    %997 = vmatpush1.msra.mxu0 0.0
    %998 = vmatprep.subr.mxu0 0.0
    %999 = vmatpush1.msra.mxu0 0.0
    %1000 = vmatprep.subr.mxu0 0.0
    %1001 = vmatpush1.msra.mxu0 0.0
    %1002 = vmatprep.subr.mxu0 0.0
    %1003 = vmatpush1.msra.mxu0 0.0
    %1004 = vmatprep.subr.mxu0 0.0
    %1005 = vmatpush1.msra.mxu0 0.0
    %1006 = vmatprep.subr.mxu0 0.0
    %1007 = vmatpush1.msra.mxu0 0.0
    %1008 = vmatprep.subr.mxu0 0.0
    %1009 = vmatpush1.msra.mxu0 0.0
    %1010 = vmatprep.mubr.f32.mxu0 0.0
    %1011 = vmatmul.mubr.f32.gmra.mrb[0].mxu0 %v944
    %v1012 = vpop.f32.mrb[0].mxu0
    %v1013 = vadd.f32 %v311, %v1012
    %v1014 = vpop.f32.mrb[0].mxu0
    %1015 = vdwg.mxu0
    %v1016 = vsel %vm313, %v941, 0
    %1018 = vmatprep.subr.mxu0 0.0
    %1019 = vmatpush1.msra.mxu0 %v301
    %1020 = vmatprep.subr.mxu0 0.0
    %1021 = vmatpush1.msra.mxu0 %v302
    %1022 = vmatprep.subr.mxu0 0.0
    %1023 = vmatpush1.msra.mxu0 %v303
    %1024 = vmatprep.subr.mxu0 0.0
    %1025 = vmatpush1.msra.mxu0 %v304
    %1026 = vmatprep.subr.mxu0 0.0
    %1027 = vmatpush1.msra.mxu0 0.0
    %1028 = vmatprep.subr.mxu0 0.0
    %1029 = vmatpush1.msra.mxu0 0.0
    %1030 = vmatprep.subr.mxu0 0.0
    %1031 = vmatpush1.msra.mxu0 0.0
    %1032 = vmatprep.subr.mxu0 0.0
    %1033 = vmatpush1.msra.mxu0 0.0
    %1034 = vmatprep.subr.mxu0 0.0
    %1035 = vmatpush1.msra.mxu0 0.0
    %1036 = vmatprep.subr.mxu0 0.0
    %1037 = vmatpush1.msra.mxu0 0.0
    %1038 = vmatprep.subr.mxu0 0.0
    %1039 = vmatpush1.msra.mxu0 0.0
    %1040 = vmatprep.subr.mxu0 0.0
    %1041 = vmatpush1.msra.mxu0 0.0
    %1042 = vmatprep.subr.mxu0 0.0
    %1043 = vmatpush1.msra.mxu0 0.0
    %1044 = vmatprep.subr.mxu0 0.0
    %1045 = vmatpush1.msra.mxu0 0.0
    %1046 = vmatprep.subr.mxu0 0.0
    %1047 = vmatpush1.msra.mxu0 0.0
    %1048 = vmatprep.subr.mxu0 0.0
    %1049 = vmatpush1.msra.mxu0 0.0
    %1050 = vmatprep.subr.mxu0 0.0
    %1051 = vmatpush1.msra.mxu0 0.0
    %1052 = vmatprep.subr.mxu0 0.0
    %1053 = vmatpush1.msra.mxu0 0.0
    %1054 = vmatprep.subr.mxu0 0.0
    %1055 = vmatpush1.msra.mxu0 0.0
    %1056 = vmatprep.subr.mxu0 0.0
    %1057 = vmatpush1.msra.mxu0 0.0
    %1058 = vmatprep.subr.mxu0 0.0
    %1059 = vmatpush1.msra.mxu0 0.0
    %1060 = vmatprep.subr.mxu0 0.0
    %1061 = vmatpush1.msra.mxu0 0.0
    %1062 = vmatprep.subr.mxu0 0.0
    %1063 = vmatpush1.msra.mxu0 0.0
    %1064 = vmatprep.subr.mxu0 0.0
    %1065 = vmatpush1.msra.mxu0 0.0
    %1066 = vmatprep.subr.mxu0 0.0
    %1067 = vmatpush1.msra.mxu0 0.0
    %1068 = vmatprep.subr.mxu0 0.0
    %1069 = vmatpush1.msra.mxu0 0.0
    %1070 = vmatprep.subr.mxu0 0.0
    %1071 = vmatpush1.msra.mxu0 0.0
    %1072 = vmatprep.subr.mxu0 0.0
    %1073 = vmatpush1.msra.mxu0 0.0
    %1074 = vmatprep.subr.mxu0 0.0
    %1075 = vmatpush1.msra.mxu0 0.0
    %1076 = vmatprep.subr.mxu0 0.0
    %1077 = vmatpush1.msra.mxu0 0.0
    %1078 = vmatprep.subr.mxu0 0.0
    %1079 = vmatpush1.msra.mxu0 0.0
    %1080 = vmatprep.subr.mxu0 0.0
    %1081 = vmatpush1.msra.mxu0 0.0
    %1082 = vmatprep.mubr.f32.mxu0 0.0
    %1083 = vmatmul.mubr.f32.gmra.mrb[0].mxu0 %v1016
    %v1084 = vpop.f32.mrb[0].mxu0
    %v1085 = vadd.f32 %v391, %v1084
    %v1086 = vpop.f32.mrb[0].mxu0
    %1087 = vdwg.mxu0
    %v1088 = vld [vmem:[#allocation2 + $0x6] sm:$0x3]
    %v1089 = vadd.f32 %v1088, %v1013
    %v1090 = vxor.u32 %v1089, 2147483648
    %v1091 = vmul.f32 %v1090, 1.442695
    %v1092 = vpow.pop %v1091
    %v1093 = vadd.f32 %v1092, 1.0
    %v1094 = vrcp.pop %v1093
    %v1095 = vmul.f32 1.0, %v1094
    %1097 = vrot.lane.b32.xlu0 %v1013, 64
    %v1098 = vpop.permute.xlu0 %1097
    %v1100 = vmul.f32 %v1095, %v1098
    %1102 = vrot.lane.b32.xlu0 %v1100, 64
    %v1103 = vpop.permute.xlu0 %1102
    %v1105 = vadd.f32 %v1088, %v1103
    %v1106 = vtanh.pop %v1105
    %v1107 = vsub.f32 1.0, %v1095
    %1109 = vrot.lane.b32.xlu0 %v1106, 96
    %v1110 = vpop.permute.xlu0 %1109
    %v1112 = vmul.f32 %v1107, %v1110
    %v1113 = vmul.f32 %v1095, %v906
    %v1114 = vadd.f32 %v1112, %v1113
    %v1115 = vld [vmem:[#allocation3 + $0x8] sm:$0x3]
    %v1116 = vadd.f32 %v1115, %v1085
    %v1117 = vxor.u32 %v1116, 2147483648
    %v1118 = vmul.f32 %v1117, 1.442695
    %v1119 = vpow.pop %v1118
    %v1120 = vadd.f32 %v1119, 1.0
    %v1121 = vrcp.pop %v1120
    %v1122 = vmul.f32 1.0, %v1121
    %1124 = vrot.lane.b32.xlu0 %v1085, 64
    %v1125 = vpop.permute.xlu0 %1124
    %v1127 = vmul.f32 %v1122, %v1125
    %1129 = vrot.lane.b32.xlu0 %v1127, 64
    %v1130 = vpop.permute.xlu0 %1129
    %v1132 = vadd.f32 %v1115, %v1130
    %v1133 = vtanh.pop %v1132
    %v1134 = vsub.f32 1.0, %v1122
    %1136 = vrot.lane.b32.xlu0 %v1133, 96
    %v1137 = vpop.permute.xlu0 %1136
    %v1139 = vmul.f32 %v1134, %v1137
    %v1140 = vmul.f32 %v1122, %v933
    %v1141 = vadd.f32 %v1139, %v1140
    %1143 = vrot.lane.b32.xlu0 %v1114, 96
    %v1144 = vpop.permute.xlu0 %1143
    %1146 = vst.msk [vmem:[#allocation4 + $0x6] sm:$0x3] %vm521, %v1144
    %1148 = vrot.lane.b32.xlu0 %v1141, 96
    %v1149 = vpop.permute.xlu0 %1148
    %1151 = vst.msk [vmem:[#allocation5 + $0x8] sm:$0x3] %vm521, %v1149
    %v1152 = vsel %vm313, %v1144, 0
    %1154 = vmatprep.subr.mxu0 0.0
    %1155 = vmatpush1.msra.mxu0 %v295
    %1156 = vmatprep.subr.mxu0 0.0
    %1157 = vmatpush1.msra.mxu0 %v296
    %1158 = vmatprep.subr.mxu0 0.0
    %1159 = vmatpush1.msra.mxu0 %v297
    %1160 = vmatprep.subr.mxu0 0.0
    %1161 = vmatpush1.msra.mxu0 %v298
    %1162 = vmatprep.subr.mxu0 0.0
    %1163 = vmatpush1.msra.mxu0 0.0
    %1164 = vmatprep.subr.mxu0 0.0
    %1165 = vmatpush1.msra.mxu0 0.0
    %1166 = vmatprep.subr.mxu0 0.0
    %1167 = vmatpush1.msra.mxu0 0.0
    %1168 = vmatprep.subr.mxu0 0.0
    %1169 = vmatpush1.msra.mxu0 0.0
    %1170 = vmatprep.subr.mxu0 0.0
    %1171 = vmatpush1.msra.mxu0 0.0
    %1172 = vmatprep.subr.mxu0 0.0
    %1173 = vmatpush1.msra.mxu0 0.0
    %1174 = vmatprep.subr.mxu0 0.0
    %1175 = vmatpush1.msra.mxu0 0.0
    %1176 = vmatprep.subr.mxu0 0.0
    %1177 = vmatpush1.msra.mxu0 0.0
    %1178 = vmatprep.subr.mxu0 0.0
    %1179 = vmatpush1.msra.mxu0 0.0
    %1180 = vmatprep.subr.mxu0 0.0
    %1181 = vmatpush1.msra.mxu0 0.0
    %1182 = vmatprep.subr.mxu0 0.0
    %1183 = vmatpush1.msra.mxu0 0.0
    %1184 = vmatprep.subr.mxu0 0.0
    %1185 = vmatpush1.msra.mxu0 0.0
    %1186 = vmatprep.subr.mxu0 0.0
    %1187 = vmatpush1.msra.mxu0 0.0
    %1188 = vmatprep.subr.mxu0 0.0
    %1189 = vmatpush1.msra.mxu0 0.0
    %1190 = vmatprep.subr.mxu0 0.0
    %1191 = vmatpush1.msra.mxu0 0.0
    %1192 = vmatprep.subr.mxu0 0.0
    %1193 = vmatpush1.msra.mxu0 0.0
    %1194 = vmatprep.subr.mxu0 0.0
    %1195 = vmatpush1.msra.mxu0 0.0
    %1196 = vmatprep.subr.mxu0 0.0
    %1197 = vmatpush1.msra.mxu0 0.0
    %1198 = vmatprep.subr.mxu0 0.0
    %1199 = vmatpush1.msra.mxu0 0.0
    %1200 = vmatprep.subr.mxu0 0.0
    %1201 = vmatpush1.msra.mxu0 0.0
    %1202 = vmatprep.subr.mxu0 0.0
    %1203 = vmatpush1.msra.mxu0 0.0
    %1204 = vmatprep.subr.mxu0 0.0
    %1205 = vmatpush1.msra.mxu0 0.0
    %1206 = vmatprep.subr.mxu0 0.0
    %1207 = vmatpush1.msra.mxu0 0.0
    %1208 = vmatprep.subr.mxu0 0.0
    %1209 = vmatpush1.msra.mxu0 0.0
    %1210 = vmatprep.subr.mxu0 0.0
    %1211 = vmatpush1.msra.mxu0 0.0
    %1212 = vmatprep.subr.mxu0 0.0
    %1213 = vmatpush1.msra.mxu0 0.0
    %1214 = vmatprep.subr.mxu0 0.0
    %1215 = vmatpush1.msra.mxu0 0.0
    %1216 = vmatprep.subr.mxu0 0.0
    %1217 = vmatpush1.msra.mxu0 0.0
    %1218 = vmatprep.mubr.f32.mxu0 0.0
    %1219 = vmatmul.mubr.f32.gmra.mrb[0].mxu0 %v1152
    %v1220 = vpop.f32.mrb[0].mxu0
    %v1221 = vadd.f32 %v311, %v1220
    %v1222 = vpop.f32.mrb[0].mxu0
    %1223 = vdwg.mxu0
    %v1224 = vsel %vm313, %v1149, 0
    %1226 = vmatprep.subr.mxu0 0.0
    %1227 = vmatpush1.msra.mxu0 %v301
    %1228 = vmatprep.subr.mxu0 0.0
    %1229 = vmatpush1.msra.mxu0 %v302
    %1230 = vmatprep.subr.mxu0 0.0
    %1231 = vmatpush1.msra.mxu0 %v303
    %1232 = vmatprep.subr.mxu0 0.0
    %1233 = vmatpush1.msra.mxu0 %v304
    %1234 = vmatprep.subr.mxu0 0.0
    %1235 = vmatpush1.msra.mxu0 0.0
    %1236 = vmatprep.subr.mxu0 0.0
    %1237 = vmatpush1.msra.mxu0 0.0
    %1238 = vmatprep.subr.mxu0 0.0
    %1239 = vmatpush1.msra.mxu0 0.0
    %1240 = vmatprep.subr.mxu0 0.0
    %1241 = vmatpush1.msra.mxu0 0.0
    %1242 = vmatprep.subr.mxu0 0.0
    %1243 = vmatpush1.msra.mxu0 0.0
    %1244 = vmatprep.subr.mxu0 0.0
    %1245 = vmatpush1.msra.mxu0 0.0
    %1246 = vmatprep.subr.mxu0 0.0
    %1247 = vmatpush1.msra.mxu0 0.0
    %1248 = vmatprep.subr.mxu0 0.0
    %1249 = vmatpush1.msra.mxu0 0.0
    %1250 = vmatprep.subr.mxu0 0.0
    %1251 = vmatpush1.msra.mxu0 0.0
    %1252 = vmatprep.subr.mxu0 0.0
    %1253 = vmatpush1.msra.mxu0 0.0
    %1254 = vmatprep.subr.mxu0 0.0
    %1255 = vmatpush1.msra.mxu0 0.0
    %1256 = vmatprep.subr.mxu0 0.0
    %1257 = vmatpush1.msra.mxu0 0.0
    %1258 = vmatprep.subr.mxu0 0.0
    %1259 = vmatpush1.msra.mxu0 0.0
    %1260 = vmatprep.subr.mxu0 0.0
    %1261 = vmatpush1.msra.mxu0 0.0
    %1262 = vmatprep.subr.mxu0 0.0
    %1263 = vmatpush1.msra.mxu0 0.0
    %1264 = vmatprep.subr.mxu0 0.0
    %1265 = vmatpush1.msra.mxu0 0.0
    %1266 = vmatprep.subr.mxu0 0.0
    %1267 = vmatpush1.msra.mxu0 0.0
    %1268 = vmatprep.subr.mxu0 0.0
    %1269 = vmatpush1.msra.mxu0 0.0
    %1270 = vmatprep.subr.mxu0 0.0
    %1271 = vmatpush1.msra.mxu0 0.0
    %1272 = vmatprep.subr.mxu0 0.0
    %1273 = vmatpush1.msra.mxu0 0.0
    %1274 = vmatprep.subr.mxu0 0.0
    %1275 = vmatpush1.msra.mxu0 0.0
    %1276 = vmatprep.subr.mxu0 0.0
    %1277 = vmatpush1.msra.mxu0 0.0
    %1278 = vmatprep.subr.mxu0 0.0
    %1279 = vmatpush1.msra.mxu0 0.0
    %1280 = vmatprep.subr.mxu0 0.0
    %1281 = vmatpush1.msra.mxu0 0.0
    %1282 = vmatprep.subr.mxu0 0.0
    %1283 = vmatpush1.msra.mxu0 0.0
    %1284 = vmatprep.subr.mxu0 0.0
    %1285 = vmatpush1.msra.mxu0 0.0
    %1286 = vmatprep.subr.mxu0 0.0
    %1287 = vmatpush1.msra.mxu0 0.0
    %1288 = vmatprep.subr.mxu0 0.0
    %1289 = vmatpush1.msra.mxu0 0.0
    %1290 = vmatprep.mubr.f32.mxu0 0.0
    %1291 = vmatmul.mubr.f32.gmra.mrb[0].mxu0 %v1224
    %v1292 = vpop.f32.mrb[0].mxu0
    %v1293 = vadd.f32 %v391, %v1292
    %v1294 = vpop.f32.mrb[0].mxu0
    %1295 = vdwg.mxu0
    %v1296 = vld [vmem:[#allocation2 + $0x8] sm:$0x3]
    %v1297 = vadd.f32 %v1296, %v1221
    %v1298 = vxor.u32 %v1297, 2147483648
    %v1299 = vmul.f32 %v1298, 1.442695
    %v1300 = vpow.pop %v1299
    %v1301 = vadd.f32 %v1300, 1.0
    %v1302 = vrcp.pop %v1301
    %v1303 = vmul.f32 1.0, %v1302
    %1305 = vrot.lane.b32.xlu0 %v1221, 64
    %v1306 = vpop.permute.xlu0 %1305
    %v1308 = vmul.f32 %v1303, %v1306
    %1310 = vrot.lane.b32.xlu0 %v1308, 64
    %v1311 = vpop.permute.xlu0 %1310
    %v1313 = vadd.f32 %v1296, %v1311
    %v1314 = vtanh.pop %v1313
    %v1315 = vsub.f32 1.0, %v1303
    %1317 = vrot.lane.b32.xlu0 %v1314, 96
    %v1318 = vpop.permute.xlu0 %1317
    %v1320 = vmul.f32 %v1315, %v1318
    %v1321 = vmul.f32 %v1303, %v1114
    %v1322 = vadd.f32 %v1320, %v1321
    %v1323 = vld [vmem:[#allocation3 + $0x6] sm:$0x3]
    %v1324 = vadd.f32 %v1323, %v1293
    %v1325 = vxor.u32 %v1324, 2147483648
    %v1326 = vmul.f32 %v1325, 1.442695
    %v1327 = vpow.pop %v1326
    %v1328 = vadd.f32 %v1327, 1.0
    %v1329 = vrcp.pop %v1328
    %v1330 = vmul.f32 1.0, %v1329
    %1332 = vrot.lane.b32.xlu0 %v1293, 64
    %v1333 = vpop.permute.xlu0 %1332
    %v1335 = vmul.f32 %v1330, %v1333
    %1337 = vrot.lane.b32.xlu0 %v1335, 64
    %v1338 = vpop.permute.xlu0 %1337
    %v1340 = vadd.f32 %v1323, %v1338
    %v1341 = vtanh.pop %v1340
    %v1342 = vsub.f32 1.0, %v1330
    %1344 = vrot.lane.b32.xlu0 %v1341, 96
    %v1345 = vpop.permute.xlu0 %1344
    %v1347 = vmul.f32 %v1342, %v1345
    %v1348 = vmul.f32 %v1330, %v1141
    %v1349 = vadd.f32 %v1347, %v1348
    %1351 = vrot.lane.b32.xlu0 %v1322, 96
    %v1352 = vpop.permute.xlu0 %1351
    %1354 = vst.msk [vmem:[#allocation4 + $0x8] sm:$0x3] %vm521, %v1352
    %1356 = vrot.lane.b32.xlu0 %v1349, 96
    %v1357 = vpop.permute.xlu0 %1356
    %1359 = vst.msk [vmem:[#allocation5 + $0x6] sm:$0x3] %vm521, %v1357
    %v1360 = vsel %vm313, %v1352, 0
    %1362 = vmatprep.subr.mxu0 0.0
    %1363 = vmatpush1.msra.mxu0 %v295
    %1364 = vmatprep.subr.mxu0 0.0
    %1365 = vmatpush1.msra.mxu0 %v296
    %1366 = vmatprep.subr.mxu0 0.0
    %1367 = vmatpush1.msra.mxu0 %v297
    %1368 = vmatprep.subr.mxu0 0.0
    %1369 = vmatpush1.msra.mxu0 %v298
    %1370 = vmatprep.subr.mxu0 0.0
    %1371 = vmatpush1.msra.mxu0 0.0
    %1372 = vmatprep.subr.mxu0 0.0
    %1373 = vmatpush1.msra.mxu0 0.0
    %1374 = vmatprep.subr.mxu0 0.0
    %1375 = vmatpush1.msra.mxu0 0.0
    %1376 = vmatprep.subr.mxu0 0.0
    %1377 = vmatpush1.msra.mxu0 0.0
    %1378 = vmatprep.subr.mxu0 0.0
    %1379 = vmatpush1.msra.mxu0 0.0
    %1380 = vmatprep.subr.mxu0 0.0
    %1381 = vmatpush1.msra.mxu0 0.0
    %1382 = vmatprep.subr.mxu0 0.0
    %1383 = vmatpush1.msra.mxu0 0.0
    %1384 = vmatprep.subr.mxu0 0.0
    %1385 = vmatpush1.msra.mxu0 0.0
    %1386 = vmatprep.subr.mxu0 0.0
    %1387 = vmatpush1.msra.mxu0 0.0
    %1388 = vmatprep.subr.mxu0 0.0
    %1389 = vmatpush1.msra.mxu0 0.0
    %1390 = vmatprep.subr.mxu0 0.0
    %1391 = vmatpush1.msra.mxu0 0.0
    %1392 = vmatprep.subr.mxu0 0.0
    %1393 = vmatpush1.msra.mxu0 0.0
    %1394 = vmatprep.subr.mxu0 0.0
    %1395 = vmatpush1.msra.mxu0 0.0
    %1396 = vmatprep.subr.mxu0 0.0
    %1397 = vmatpush1.msra.mxu0 0.0
    %1398 = vmatprep.subr.mxu0 0.0
    %1399 = vmatpush1.msra.mxu0 0.0
    %1400 = vmatprep.subr.mxu0 0.0
    %1401 = vmatpush1.msra.mxu0 0.0
    %1402 = vmatprep.subr.mxu0 0.0
    %1403 = vmatpush1.msra.mxu0 0.0
    %1404 = vmatprep.subr.mxu0 0.0
    %1405 = vmatpush1.msra.mxu0 0.0
    %1406 = vmatprep.subr.mxu0 0.0
    %1407 = vmatpush1.msra.mxu0 0.0
    %1408 = vmatprep.subr.mxu0 0.0
    %1409 = vmatpush1.msra.mxu0 0.0
    %1410 = vmatprep.subr.mxu0 0.0
    %1411 = vmatpush1.msra.mxu0 0.0
    %1412 = vmatprep.subr.mxu0 0.0
    %1413 = vmatpush1.msra.mxu0 0.0
    %1414 = vmatprep.subr.mxu0 0.0
    %1415 = vmatpush1.msra.mxu0 0.0
    %1416 = vmatprep.subr.mxu0 0.0
    %1417 = vmatpush1.msra.mxu0 0.0
    %1418 = vmatprep.subr.mxu0 0.0
    %1419 = vmatpush1.msra.mxu0 0.0
    %1420 = vmatprep.subr.mxu0 0.0
    %1421 = vmatpush1.msra.mxu0 0.0
    %1422 = vmatprep.subr.mxu0 0.0
    %1423 = vmatpush1.msra.mxu0 0.0
    %1424 = vmatprep.subr.mxu0 0.0
    %1425 = vmatpush1.msra.mxu0 0.0
    %1426 = vmatprep.mubr.f32.mxu0 0.0
    %1427 = vmatmul.mubr.f32.gmra.mrb[0].mxu0 %v1360
    %v1428 = vpop.f32.mrb[0].mxu0
    %v1429 = vadd.f32 %v311, %v1428
    %v1430 = vpop.f32.mrb[0].mxu0
    %1431 = vdwg.mxu0
    %v1432 = vsel %vm313, %v1357, 0
    %1434 = vmatprep.subr.mxu0 0.0
    %1435 = vmatpush1.msra.mxu0 %v301
    %1436 = vmatprep.subr.mxu0 0.0
    %1437 = vmatpush1.msra.mxu0 %v302
    %1438 = vmatprep.subr.mxu0 0.0
    %1439 = vmatpush1.msra.mxu0 %v303
    %1440 = vmatprep.subr.mxu0 0.0
    %1441 = vmatpush1.msra.mxu0 %v304
    %1442 = vmatprep.subr.mxu0 0.0
    %1443 = vmatpush1.msra.mxu0 0.0
    %1444 = vmatprep.subr.mxu0 0.0
    %1445 = vmatpush1.msra.mxu0 0.0
    %1446 = vmatprep.subr.mxu0 0.0
    %1447 = vmatpush1.msra.mxu0 0.0
    %1448 = vmatprep.subr.mxu0 0.0
    %1449 = vmatpush1.msra.mxu0 0.0
    %1450 = vmatprep.subr.mxu0 0.0
    %1451 = vmatpush1.msra.mxu0 0.0
    %1452 = vmatprep.subr.mxu0 0.0
    %1453 = vmatpush1.msra.mxu0 0.0
    %1454 = vmatprep.subr.mxu0 0.0
    %1455 = vmatpush1.msra.mxu0 0.0
    %1456 = vmatprep.subr.mxu0 0.0
    %1457 = vmatpush1.msra.mxu0 0.0
    %1458 = vmatprep.subr.mxu0 0.0
    %1459 = vmatpush1.msra.mxu0 0.0
    %1460 = vmatprep.subr.mxu0 0.0
    %1461 = vmatpush1.msra.mxu0 0.0
    %1462 = vmatprep.subr.mxu0 0.0
    %1463 = vmatpush1.msra.mxu0 0.0
    %1464 = vmatprep.subr.mxu0 0.0
    %1465 = vmatpush1.msra.mxu0 0.0
    %1466 = vmatprep.subr.mxu0 0.0
    %1467 = vmatpush1.msra.mxu0 0.0
    %1468 = vmatprep.subr.mxu0 0.0
    %1469 = vmatpush1.msra.mxu0 0.0
    %1470 = vmatprep.subr.mxu0 0.0
    %1471 = vmatpush1.msra.mxu0 0.0
    %1472 = vmatprep.subr.mxu0 0.0
    %1473 = vmatpush1.msra.mxu0 0.0
    %1474 = vmatprep.subr.mxu0 0.0
    %1475 = vmatpush1.msra.mxu0 0.0
    %1476 = vmatprep.subr.mxu0 0.0
    %1477 = vmatpush1.msra.mxu0 0.0
    %1478 = vmatprep.subr.mxu0 0.0
    %1479 = vmatpush1.msra.mxu0 0.0
    %1480 = vmatprep.subr.mxu0 0.0
    %1481 = vmatpush1.msra.mxu0 0.0
    %1482 = vmatprep.subr.mxu0 0.0
    %1483 = vmatpush1.msra.mxu0 0.0
    %1484 = vmatprep.subr.mxu0 0.0
    %1485 = vmatpush1.msra.mxu0 0.0
    %1486 = vmatprep.subr.mxu0 0.0
    %1487 = vmatpush1.msra.mxu0 0.0
    %1488 = vmatprep.subr.mxu0 0.0
    %1489 = vmatpush1.msra.mxu0 0.0
    %1490 = vmatprep.subr.mxu0 0.0
    %1491 = vmatpush1.msra.mxu0 0.0
    %1492 = vmatprep.subr.mxu0 0.0
    %1493 = vmatpush1.msra.mxu0 0.0
    %1494 = vmatprep.subr.mxu0 0.0
    %1495 = vmatpush1.msra.mxu0 0.0
    %1496 = vmatprep.subr.mxu0 0.0
    %1497 = vmatpush1.msra.mxu0 0.0
    %1498 = vmatprep.mubr.f32.mxu0 0.0
    %1499 = vmatmul.mubr.f32.gmra.mrb[0].mxu0 %v1432
    %v1500 = vpop.f32.mrb[0].mxu0
    %v1501 = vadd.f32 %v391, %v1500
    %v1502 = vpop.f32.mrb[0].mxu0
    %1503 = vdwg.mxu0
    %v1504 = vld [vmem:[#allocation2 + $0xa] sm:$0x3]
    %v1505 = vadd.f32 %v1504, %v1429
    %v1506 = vxor.u32 %v1505, 2147483648
    %v1507 = vmul.f32 %v1506, 1.442695
    %v1508 = vpow.pop %v1507
    %v1509 = vadd.f32 %v1508, 1.0
    %v1510 = vrcp.pop %v1509
    %v1511 = vmul.f32 1.0, %v1510
    %1513 = vrot.lane.b32.xlu0 %v1429, 64
    %v1514 = vpop.permute.xlu0 %1513
    %v1516 = vmul.f32 %v1511, %v1514
    %1518 = vrot.lane.b32.xlu0 %v1516, 64
    %v1519 = vpop.permute.xlu0 %1518
    %v1521 = vadd.f32 %v1504, %v1519
    %v1522 = vtanh.pop %v1521
    %v1523 = vsub.f32 1.0, %v1511
    %1525 = vrot.lane.b32.xlu0 %v1522, 96
    %v1526 = vpop.permute.xlu0 %1525
    %v1528 = vmul.f32 %v1523, %v1526
    %v1529 = vmul.f32 %v1511, %v1322
    %v1530 = vadd.f32 %v1528, %v1529
    %v1531 = vld [vmem:[#allocation3 + $0x4] sm:$0x3]
    %v1532 = vadd.f32 %v1531, %v1501
    %v1533 = vxor.u32 %v1532, 2147483648
    %v1534 = vmul.f32 %v1533, 1.442695
    %v1535 = vpow.pop %v1534
    %v1536 = vadd.f32 %v1535, 1.0
    %v1537 = vrcp.pop %v1536
    %v1538 = vmul.f32 1.0, %v1537
    %1540 = vrot.lane.b32.xlu0 %v1501, 64
    %v1541 = vpop.permute.xlu0 %1540
    %v1543 = vmul.f32 %v1538, %v1541
    %1545 = vrot.lane.b32.xlu0 %v1543, 64
    %v1546 = vpop.permute.xlu0 %1545
    %v1548 = vadd.f32 %v1531, %v1546
    %v1549 = vtanh.pop %v1548
    %v1550 = vsub.f32 1.0, %v1538
    %1552 = vrot.lane.b32.xlu0 %v1549, 96
    %v1553 = vpop.permute.xlu0 %1552
    %v1555 = vmul.f32 %v1550, %v1553
    %v1556 = vmul.f32 %v1538, %v1349
    %v1557 = vadd.f32 %v1555, %v1556
    %1559 = vrot.lane.b32.xlu0 %v1530, 96
    %v1560 = vpop.permute.xlu0 %1559
    %1562 = vst.msk [vmem:[#allocation4 + $0xa] sm:$0x3] %vm521, %v1560
    %1564 = vrot.lane.b32.xlu0 %v1557, 96
    %v1565 = vpop.permute.xlu0 %1564
    %1567 = vst.msk [vmem:[#allocation5 + $0x4] sm:$0x3] %vm521, %v1565
    %v1568 = vsel %vm313, %v1560, 0
    %1570 = vmatprep.subr.mxu0 0.0
    %1571 = vmatpush1.msra.mxu0 %v295
    %1572 = vmatprep.subr.mxu0 0.0
    %1573 = vmatpush1.msra.mxu0 %v296
    %1574 = vmatprep.subr.mxu0 0.0
    %1575 = vmatpush1.msra.mxu0 %v297
    %1576 = vmatprep.subr.mxu0 0.0
    %1577 = vmatpush1.msra.mxu0 %v298
    %1578 = vmatprep.subr.mxu0 0.0
    %1579 = vmatpush1.msra.mxu0 0.0
    %1580 = vmatprep.subr.mxu0 0.0
    %1581 = vmatpush1.msra.mxu0 0.0
    %1582 = vmatprep.subr.mxu0 0.0
    %1583 = vmatpush1.msra.mxu0 0.0
    %1584 = vmatprep.subr.mxu0 0.0
    %1585 = vmatpush1.msra.mxu0 0.0
    %1586 = vmatprep.subr.mxu0 0.0
    %1587 = vmatpush1.msra.mxu0 0.0
    %1588 = vmatprep.subr.mxu0 0.0
    %1589 = vmatpush1.msra.mxu0 0.0
    %1590 = vmatprep.subr.mxu0 0.0
    %1591 = vmatpush1.msra.mxu0 0.0
    %1592 = vmatprep.subr.mxu0 0.0
    %1593 = vmatpush1.msra.mxu0 0.0
    %1594 = vmatprep.subr.mxu0 0.0
    %1595 = vmatpush1.msra.mxu0 0.0
    %1596 = vmatprep.subr.mxu0 0.0
    %1597 = vmatpush1.msra.mxu0 0.0
    %1598 = vmatprep.subr.mxu0 0.0
    %1599 = vmatpush1.msra.mxu0 0.0
    %1600 = vmatprep.subr.mxu0 0.0
    %1601 = vmatpush1.msra.mxu0 0.0
    %1602 = vmatprep.subr.mxu0 0.0
    %1603 = vmatpush1.msra.mxu0 0.0
    %1604 = vmatprep.subr.mxu0 0.0
    %1605 = vmatpush1.msra.mxu0 0.0
    %1606 = vmatprep.subr.mxu0 0.0
    %1607 = vmatpush1.msra.mxu0 0.0
    %1608 = vmatprep.subr.mxu0 0.0
    %1609 = vmatpush1.msra.mxu0 0.0
    %1610 = vmatprep.subr.mxu0 0.0
    %1611 = vmatpush1.msra.mxu0 0.0
    %1612 = vmatprep.subr.mxu0 0.0
    %1613 = vmatpush1.msra.mxu0 0.0
    %1614 = vmatprep.subr.mxu0 0.0
    %1615 = vmatpush1.msra.mxu0 0.0
    %1616 = vmatprep.subr.mxu0 0.0
    %1617 = vmatpush1.msra.mxu0 0.0
    %1618 = vmatprep.subr.mxu0 0.0
    %1619 = vmatpush1.msra.mxu0 0.0
    %1620 = vmatprep.subr.mxu0 0.0
    %1621 = vmatpush1.msra.mxu0 0.0
    %1622 = vmatprep.subr.mxu0 0.0
    %1623 = vmatpush1.msra.mxu0 0.0
    %1624 = vmatprep.subr.mxu0 0.0
    %1625 = vmatpush1.msra.mxu0 0.0
    %1626 = vmatprep.subr.mxu0 0.0
    %1627 = vmatpush1.msra.mxu0 0.0
    %1628 = vmatprep.subr.mxu0 0.0
    %1629 = vmatpush1.msra.mxu0 0.0
    %1630 = vmatprep.subr.mxu0 0.0
    %1631 = vmatpush1.msra.mxu0 0.0
    %1632 = vmatprep.subr.mxu0 0.0
    %1633 = vmatpush1.msra.mxu0 0.0
    %1634 = vmatprep.mubr.f32.mxu0 0.0
    %1635 = vmatmul.mubr.f32.gmra.mrb[0].mxu0 %v1568
    %v1636 = vpop.f32.mrb[0].mxu0
    %v1637 = vadd.f32 %v311, %v1636
    %v1638 = vpop.f32.mrb[0].mxu0
    %1639 = vdwg.mxu0
    %v1640 = vsel %vm313, %v1565, 0
    %1642 = vmatprep.subr.mxu0 0.0
    %1643 = vmatpush1.msra.mxu0 %v301
    %1644 = vmatprep.subr.mxu0 0.0
    %1645 = vmatpush1.msra.mxu0 %v302
    %1646 = vmatprep.subr.mxu0 0.0
    %1647 = vmatpush1.msra.mxu0 %v303
    %1648 = vmatprep.subr.mxu0 0.0
    %1649 = vmatpush1.msra.mxu0 %v304
    %1650 = vmatprep.subr.mxu0 0.0
    %1651 = vmatpush1.msra.mxu0 0.0
    %1652 = vmatprep.subr.mxu0 0.0
    %1653 = vmatpush1.msra.mxu0 0.0
    %1654 = vmatprep.subr.mxu0 0.0
    %1655 = vmatpush1.msra.mxu0 0.0
    %1656 = vmatprep.subr.mxu0 0.0
    %1657 = vmatpush1.msra.mxu0 0.0
    %1658 = vmatprep.subr.mxu0 0.0
    %1659 = vmatpush1.msra.mxu0 0.0
    %1660 = vmatprep.subr.mxu0 0.0
    %1661 = vmatpush1.msra.mxu0 0.0
    %1662 = vmatprep.subr.mxu0 0.0
    %1663 = vmatpush1.msra.mxu0 0.0
    %1664 = vmatprep.subr.mxu0 0.0
    %1665 = vmatpush1.msra.mxu0 0.0
    %1666 = vmatprep.subr.mxu0 0.0
    %1667 = vmatpush1.msra.mxu0 0.0
    %1668 = vmatprep.subr.mxu0 0.0
    %1669 = vmatpush1.msra.mxu0 0.0
    %1670 = vmatprep.subr.mxu0 0.0
    %1671 = vmatpush1.msra.mxu0 0.0
    %1672 = vmatprep.subr.mxu0 0.0
    %1673 = vmatpush1.msra.mxu0 0.0
    %1674 = vmatprep.subr.mxu0 0.0
    %1675 = vmatpush1.msra.mxu0 0.0
    %1676 = vmatprep.subr.mxu0 0.0
    %1677 = vmatpush1.msra.mxu0 0.0
    %1678 = vmatprep.subr.mxu0 0.0
    %1679 = vmatpush1.msra.mxu0 0.0
    %1680 = vmatprep.subr.mxu0 0.0
    %1681 = vmatpush1.msra.mxu0 0.0
    %1682 = vmatprep.subr.mxu0 0.0
    %1683 = vmatpush1.msra.mxu0 0.0
    %1684 = vmatprep.subr.mxu0 0.0
    %1685 = vmatpush1.msra.mxu0 0.0
    %1686 = vmatprep.subr.mxu0 0.0
    %1687 = vmatpush1.msra.mxu0 0.0
    %1688 = vmatprep.subr.mxu0 0.0
    %1689 = vmatpush1.msra.mxu0 0.0
    %1690 = vmatprep.subr.mxu0 0.0
    %1691 = vmatpush1.msra.mxu0 0.0
    %1692 = vmatprep.subr.mxu0 0.0
    %1693 = vmatpush1.msra.mxu0 0.0
    %1694 = vmatprep.subr.mxu0 0.0
    %1695 = vmatpush1.msra.mxu0 0.0
    %1696 = vmatprep.subr.mxu0 0.0
    %1697 = vmatpush1.msra.mxu0 0.0
    %1698 = vmatprep.subr.mxu0 0.0
    %1699 = vmatpush1.msra.mxu0 0.0
    %1700 = vmatprep.subr.mxu0 0.0
    %1701 = vmatpush1.msra.mxu0 0.0
    %1702 = vmatprep.subr.mxu0 0.0
    %1703 = vmatpush1.msra.mxu0 0.0
    %1704 = vmatprep.subr.mxu0 0.0
    %1705 = vmatpush1.msra.mxu0 0.0
    %1706 = vmatprep.mubr.f32.mxu0 0.0
    %1707 = vmatmul.mubr.f32.gmra.mrb[0].mxu0 %v1640
    %v1708 = vpop.f32.mrb[0].mxu0
    %v1709 = vadd.f32 %v391, %v1708
    %v1710 = vpop.f32.mrb[0].mxu0
    %1711 = vdwg.mxu0
    %v1712 = vld [vmem:[#allocation2 + $0xc] sm:$0x3]
    %v1713 = vadd.f32 %v1712, %v1637
    %v1714 = vxor.u32 %v1713, 2147483648
    %v1715 = vmul.f32 %v1714, 1.442695
    %v1716 = vpow.pop %v1715
    %v1717 = vadd.f32 %v1716, 1.0
    %v1718 = vrcp.pop %v1717
    %v1719 = vmul.f32 1.0, %v1718
    %1721 = vrot.lane.b32.xlu0 %v1637, 64
    %v1722 = vpop.permute.xlu0 %1721
    %v1724 = vmul.f32 %v1719, %v1722
    %1726 = vrot.lane.b32.xlu0 %v1724, 64
    %v1727 = vpop.permute.xlu0 %1726
    %v1729 = vadd.f32 %v1712, %v1727
    %v1730 = vtanh.pop %v1729
    %v1731 = vsub.f32 1.0, %v1719
    %1733 = vrot.lane.b32.xlu0 %v1730, 96
    %v1734 = vpop.permute.xlu0 %1733
    %v1736 = vmul.f32 %v1731, %v1734
    %v1737 = vmul.f32 %v1719, %v1530
    %v1738 = vadd.f32 %v1736, %v1737
    %v1739 = vld [vmem:[#allocation3 + $0x2] sm:$0x3]
    %v1740 = vadd.f32 %v1739, %v1709
    %v1741 = vxor.u32 %v1740, 2147483648
    %v1742 = vmul.f32 %v1741, 1.442695
    %v1743 = vpow.pop %v1742
    %v1744 = vadd.f32 %v1743, 1.0
    %v1745 = vrcp.pop %v1744
    %v1746 = vmul.f32 1.0, %v1745
    %1748 = vrot.lane.b32.xlu0 %v1709, 64
    %v1749 = vpop.permute.xlu0 %1748
    %v1751 = vmul.f32 %v1746, %v1749
    %1753 = vrot.lane.b32.xlu0 %v1751, 64
    %v1754 = vpop.permute.xlu0 %1753
    %v1756 = vadd.f32 %v1739, %v1754
    %v1757 = vtanh.pop %v1756
    %v1758 = vsub.f32 1.0, %v1746
    %1760 = vrot.lane.b32.xlu0 %v1757, 96
    %v1761 = vpop.permute.xlu0 %1760
    %v1763 = vmul.f32 %v1758, %v1761
    %v1764 = vmul.f32 %v1746, %v1557
    %v1765 = vadd.f32 %v1763, %v1764
    %1767 = vrot.lane.b32.xlu0 %v1738, 96
    %v1768 = vpop.permute.xlu0 %1767
    %1770 = vst.msk [vmem:[#allocation4 + $0xc] sm:$0x3] %vm521, %v1768
    %1772 = vrot.lane.b32.xlu0 %v1765, 96
    %v1773 = vpop.permute.xlu0 %1772
    %1775 = vst.msk [vmem:[#allocation5 + $0x2] sm:$0x3] %vm521, %v1773
    %v1776 = vsel %vm313, %v1768, 0
    %1778 = vmatprep.subr.mxu0 0.0
    %1779 = vmatpush1.msra.mxu0 %v295
    %1780 = vmatprep.subr.mxu0 0.0
    %1781 = vmatpush1.msra.mxu0 %v296
    %1782 = vmatprep.subr.mxu0 0.0
    %1783 = vmatpush1.msra.mxu0 %v297
    %1784 = vmatprep.subr.mxu0 0.0
    %1785 = vmatpush1.msra.mxu0 %v298
    %1786 = vmatprep.subr.mxu0 0.0
    %1787 = vmatpush1.msra.mxu0 0.0
    %1788 = vmatprep.subr.mxu0 0.0
    %1789 = vmatpush1.msra.mxu0 0.0
    %1790 = vmatprep.subr.mxu0 0.0
    %1791 = vmatpush1.msra.mxu0 0.0
    %1792 = vmatprep.subr.mxu0 0.0
    %1793 = vmatpush1.msra.mxu0 0.0
    %1794 = vmatprep.subr.mxu0 0.0
    %1795 = vmatpush1.msra.mxu0 0.0
    %1796 = vmatprep.subr.mxu0 0.0
    %1797 = vmatpush1.msra.mxu0 0.0
    %1798 = vmatprep.subr.mxu0 0.0
    %1799 = vmatpush1.msra.mxu0 0.0
    %1800 = vmatprep.subr.mxu0 0.0
    %1801 = vmatpush1.msra.mxu0 0.0
    %1802 = vmatprep.subr.mxu0 0.0
    %1803 = vmatpush1.msra.mxu0 0.0
    %1804 = vmatprep.subr.mxu0 0.0
    %1805 = vmatpush1.msra.mxu0 0.0
    %1806 = vmatprep.subr.mxu0 0.0
    %1807 = vmatpush1.msra.mxu0 0.0
    %1808 = vmatprep.subr.mxu0 0.0
    %1809 = vmatpush1.msra.mxu0 0.0
    %1810 = vmatprep.subr.mxu0 0.0
    %1811 = vmatpush1.msra.mxu0 0.0
    %1812 = vmatprep.subr.mxu0 0.0
    %1813 = vmatpush1.msra.mxu0 0.0
    %1814 = vmatprep.subr.mxu0 0.0
    %1815 = vmatpush1.msra.mxu0 0.0
    %1816 = vmatprep.subr.mxu0 0.0
    %1817 = vmatpush1.msra.mxu0 0.0
    %1818 = vmatprep.subr.mxu0 0.0
    %1819 = vmatpush1.msra.mxu0 0.0
    %1820 = vmatprep.subr.mxu0 0.0
    %1821 = vmatpush1.msra.mxu0 0.0
    %1822 = vmatprep.subr.mxu0 0.0
    %1823 = vmatpush1.msra.mxu0 0.0
    %1824 = vmatprep.subr.mxu0 0.0
    %1825 = vmatpush1.msra.mxu0 0.0
    %1826 = vmatprep.subr.mxu0 0.0
    %1827 = vmatpush1.msra.mxu0 0.0
    %1828 = vmatprep.subr.mxu0 0.0
    %1829 = vmatpush1.msra.mxu0 0.0
    %1830 = vmatprep.subr.mxu0 0.0
    %1831 = vmatpush1.msra.mxu0 0.0
    %1832 = vmatprep.subr.mxu0 0.0
    %1833 = vmatpush1.msra.mxu0 0.0
    %1834 = vmatprep.subr.mxu0 0.0
    %1835 = vmatpush1.msra.mxu0 0.0
    %1836 = vmatprep.subr.mxu0 0.0
    %1837 = vmatpush1.msra.mxu0 0.0
    %1838 = vmatprep.subr.mxu0 0.0
    %1839 = vmatpush1.msra.mxu0 0.0
    %1840 = vmatprep.subr.mxu0 0.0
    %1841 = vmatpush1.msra.mxu0 0.0
    %1842 = vmatprep.mubr.f32.mxu0 0.0
    %1843 = vmatmul.mubr.f32.gmra.mrb[0].mxu0 %v1776
    %v1844 = vpop.f32.mrb[0].mxu0
    %v1845 = vadd.f32 %v311, %v1844
    %v1846 = vpop.f32.mrb[0].mxu0
    %1847 = vdwg.mxu0
    %v1848 = vsel %vm313, %v1773, 0
    %1850 = vmatprep.subr.mxu0 0.0
    %1851 = vmatpush1.msra.mxu0 %v301
    %1852 = vmatprep.subr.mxu0 0.0
    %1853 = vmatpush1.msra.mxu0 %v302
    %1854 = vmatprep.subr.mxu0 0.0
    %1855 = vmatpush1.msra.mxu0 %v303
    %1856 = vmatprep.subr.mxu0 0.0
    %1857 = vmatpush1.msra.mxu0 %v304
    %1858 = vmatprep.subr.mxu0 0.0
    %1859 = vmatpush1.msra.mxu0 0.0
    %1860 = vmatprep.subr.mxu0 0.0
    %1861 = vmatpush1.msra.mxu0 0.0
    %1862 = vmatprep.subr.mxu0 0.0
    %1863 = vmatpush1.msra.mxu0 0.0
    %1864 = vmatprep.subr.mxu0 0.0
    %1865 = vmatpush1.msra.mxu0 0.0
    %1866 = vmatprep.subr.mxu0 0.0
    %1867 = vmatpush1.msra.mxu0 0.0
    %1868 = vmatprep.subr.mxu0 0.0
    %1869 = vmatpush1.msra.mxu0 0.0
    %1870 = vmatprep.subr.mxu0 0.0
    %1871 = vmatpush1.msra.mxu0 0.0
    %1872 = vmatprep.subr.mxu0 0.0
    %1873 = vmatpush1.msra.mxu0 0.0
    %1874 = vmatprep.subr.mxu0 0.0
    %1875 = vmatpush1.msra.mxu0 0.0
    %1876 = vmatprep.subr.mxu0 0.0
    %1877 = vmatpush1.msra.mxu0 0.0
    %1878 = vmatprep.subr.mxu0 0.0
    %1879 = vmatpush1.msra.mxu0 0.0
    %1880 = vmatprep.subr.mxu0 0.0
    %1881 = vmatpush1.msra.mxu0 0.0
    %1882 = vmatprep.subr.mxu0 0.0
    %1883 = vmatpush1.msra.mxu0 0.0
    %1884 = vmatprep.subr.mxu0 0.0
    %1885 = vmatpush1.msra.mxu0 0.0
    %1886 = vmatprep.subr.mxu0 0.0
    %1887 = vmatpush1.msra.mxu0 0.0
    %1888 = vmatprep.subr.mxu0 0.0
    %1889 = vmatpush1.msra.mxu0 0.0
    %1890 = vmatprep.subr.mxu0 0.0
    %1891 = vmatpush1.msra.mxu0 0.0
    %1892 = vmatprep.subr.mxu0 0.0
    %1893 = vmatpush1.msra.mxu0 0.0
    %1894 = vmatprep.subr.mxu0 0.0
    %1895 = vmatpush1.msra.mxu0 0.0
    %1896 = vmatprep.subr.mxu0 0.0
    %1897 = vmatpush1.msra.mxu0 0.0
    %1898 = vmatprep.subr.mxu0 0.0
    %1899 = vmatpush1.msra.mxu0 0.0
    %1900 = vmatprep.subr.mxu0 0.0
    %1901 = vmatpush1.msra.mxu0 0.0
    %1902 = vmatprep.subr.mxu0 0.0
    %1903 = vmatpush1.msra.mxu0 0.0
    %1904 = vmatprep.subr.mxu0 0.0
    %1905 = vmatpush1.msra.mxu0 0.0
    %1906 = vmatprep.subr.mxu0 0.0
    %1907 = vmatpush1.msra.mxu0 0.0
    %1908 = vmatprep.subr.mxu0 0.0
    %1909 = vmatpush1.msra.mxu0 0.0
    %1910 = vmatprep.subr.mxu0 0.0
    %1911 = vmatpush1.msra.mxu0 0.0
    %1912 = vmatprep.subr.mxu0 0.0
    %1913 = vmatpush1.msra.mxu0 0.0
    %1914 = vmatprep.mubr.f32.mxu0 0.0
    %1915 = vmatmul.mubr.f32.gmra.mrb[0].mxu0 %v1848
    %v1916 = vpop.f32.mrb[0].mxu0
    %v1917 = vadd.f32 %v391, %v1916
    %v1918 = vpop.f32.mrb[0].mxu0
    %1919 = vdwg.mxu0
    %v1920 = vld [vmem:[#allocation2 + $0xe] sm:$0x3]
    %v1921 = vadd.f32 %v1920, %v1845
    %v1922 = vxor.u32 %v1921, 2147483648
    %v1923 = vmul.f32 %v1922, 1.442695
    %v1924 = vpow.pop %v1923
    %v1925 = vadd.f32 %v1924, 1.0
    %v1926 = vrcp.pop %v1925
    %v1927 = vmul.f32 1.0, %v1926
    %1929 = vrot.lane.b32.xlu0 %v1845, 64
    %v1930 = vpop.permute.xlu0 %1929
    %v1932 = vmul.f32 %v1927, %v1930
    %1934 = vrot.lane.b32.xlu0 %v1932, 64
    %v1935 = vpop.permute.xlu0 %1934
    %v1937 = vadd.f32 %v1920, %v1935
    %v1938 = vtanh.pop %v1937
    %v1939 = vsub.f32 1.0, %v1927
    %1941 = vrot.lane.b32.xlu0 %v1938, 96
    %v1942 = vpop.permute.xlu0 %1941
    %v1944 = vmul.f32 %v1939, %v1942
    %v1945 = vmul.f32 %v1927, %v1738
    %v1946 = vadd.f32 %v1944, %v1945
    %v1947 = vld [vmem:[#allocation3] sm:$0x3]
    %v1948 = vadd.f32 %v1947, %v1917
    %v1949 = vxor.u32 %v1948, 2147483648
    %v1950 = vmul.f32 %v1949, 1.442695
    %v1951 = vpow.pop %v1950
    %v1952 = vadd.f32 %v1951, 1.0
    %v1953 = vrcp.pop %v1952
    %v1954 = vmul.f32 1.0, %v1953
    %1956 = vrot.lane.b32.xlu0 %v1917, 64
    %v1957 = vpop.permute.xlu0 %1956
    %v1959 = vmul.f32 %v1954, %v1957
    %1961 = vrot.lane.b32.xlu0 %v1959, 64
    %v1962 = vpop.permute.xlu0 %1961
    %v1964 = vadd.f32 %v1947, %v1962
    %v1965 = vtanh.pop %v1964
    %v1966 = vsub.f32 1.0, %v1954
    %1968 = vrot.lane.b32.xlu0 %v1965, 96
    %v1969 = vpop.permute.xlu0 %1968
    %v1971 = vmul.f32 %v1966, %v1969
    %v1972 = vmul.f32 %v1954, %v1765
    %v1973 = vadd.f32 %v1971, %v1972
    %1975 = vrot.lane.b32.xlu0 %v1946, 96
    %v1976 = vpop.permute.xlu0 %1975
    %1978 = vst.msk [vmem:[#allocation4 + $0xe] sm:$0x3] %vm521, %v1976
    %1980 = vrot.lane.b32.xlu0 %v1973, 96
    %v1981 = vpop.permute.xlu0 %1980
    %1983 = vst.msk [vmem:[#allocation5] sm:$0x3] %vm521, %v1981
    %v1984 = vld [vmem:[#allocation4] sm:$0xff]
    %v1985 = vld [vmem:[#allocation4 + $0x8] sm:$0xff]
    %v1986 = vld [vmem:[#allocation5] sm:$0xff]
    %v1987 = vld [vmem:[#allocation5 + $0x8] sm:$0xff]
    %v1988 = vld [vmem:[#allocation11] sm:$0xff]
    %v1989 = vld [vmem:[#allocation11 + $0x8] sm:$0xff]
    %v1990 = vld [vmem:[#allocation11 + $0x10] sm:$0xff]
    %v1991 = vld [vmem:[#allocation11 + $0x18] sm:$0xff]
    %v1992 = vld [vmem:[#allocation12] sm:$0xff]
    %v1993 = vld [vmem:[#allocation12 + $0x8] sm:$0xff]
    %v1994 = vld [vmem:[#allocation12 + $0x10] sm:$0xff]
    %v1995 = vld [vmem:[#allocation12 + $0x18] sm:$0xff]
    %v1997 = vsel %vm313, %v1986, 0
    %v2000 = vsel %vm313, %v1987, 0
    %2002 = vmatprep.subr.mxu0 0.0
    %2003 = vmatpush1.msra.mxu0 %v1992
    %2004 = vmatprep.subr.mxu0 0.0
    %2005 = vmatpush1.msra.mxu0 %v1993
    %2006 = vmatprep.subr.mxu0 0.0
    %2007 = vmatpush1.msra.mxu0 %v1994
    %2008 = vmatprep.subr.mxu0 0.0
    %2009 = vmatpush1.msra.mxu0 %v1995
    %2010 = vmatprep.subr.mxu0 0.0
    %2011 = vmatpush1.msra.mxu0 0.0
    %2012 = vmatprep.subr.mxu0 0.0
    %2013 = vmatpush1.msra.mxu0 0.0
    %2014 = vmatprep.subr.mxu0 0.0
    %2015 = vmatpush1.msra.mxu0 0.0
    %2016 = vmatprep.subr.mxu0 0.0
    %2017 = vmatpush1.msra.mxu0 0.0
    %2018 = vmatprep.subr.mxu0 0.0
    %2019 = vmatpush1.msra.mxu0 0.0
    %2020 = vmatprep.subr.mxu0 0.0
    %2021 = vmatpush1.msra.mxu0 0.0
    %2022 = vmatprep.subr.mxu0 0.0
    %2023 = vmatpush1.msra.mxu0 0.0
    %2024 = vmatprep.subr.mxu0 0.0
    %2025 = vmatpush1.msra.mxu0 0.0
    %2026 = vmatprep.subr.mxu0 0.0
    %2027 = vmatpush1.msra.mxu0 0.0
    %2028 = vmatprep.subr.mxu0 0.0
    %2029 = vmatpush1.msra.mxu0 0.0
    %2030 = vmatprep.subr.mxu0 0.0
    %2031 = vmatpush1.msra.mxu0 0.0
    %2032 = vmatprep.subr.mxu0 0.0
    %2033 = vmatpush1.msra.mxu0 0.0
    %2034 = vmatprep.subr.mxu0 0.0
    %2035 = vmatpush1.msra.mxu0 0.0
    %2036 = vmatprep.subr.mxu0 0.0
    %2037 = vmatpush1.msra.mxu0 0.0
    %2038 = vmatprep.subr.mxu0 0.0
    %2039 = vmatpush1.msra.mxu0 0.0
    %2040 = vmatprep.subr.mxu0 0.0
    %2041 = vmatpush1.msra.mxu0 0.0
    %2042 = vmatprep.subr.mxu0 0.0
    %2043 = vmatpush1.msra.mxu0 0.0
    %2044 = vmatprep.subr.mxu0 0.0
    %2045 = vmatpush1.msra.mxu0 0.0
    %2046 = vmatprep.subr.mxu0 0.0
    %2047 = vmatpush1.msra.mxu0 0.0
    %2048 = vmatprep.subr.mxu0 0.0
    %2049 = vmatpush1.msra.mxu0 0.0
    %2050 = vmatprep.subr.mxu0 0.0
    %2051 = vmatpush1.msra.mxu0 0.0
    %2052 = vmatprep.subr.mxu0 0.0
    %2053 = vmatpush1.msra.mxu0 0.0
    %2054 = vmatprep.subr.mxu0 0.0
    %2055 = vmatpush1.msra.mxu0 0.0
    %2056 = vmatprep.subr.mxu0 0.0
    %2057 = vmatpush1.msra.mxu0 0.0
    %2058 = vmatprep.subr.mxu0 0.0
    %2059 = vmatpush1.msra.mxu0 0.0
    %2060 = vmatprep.subr.mxu0 0.0
    %2061 = vmatpush1.msra.mxu0 0.0
    %2062 = vmatprep.subr.mxu0 0.0
    %2063 = vmatpush1.msra.mxu0 0.0
    %2064 = vmatprep.subr.mxu0 0.0
    %2065 = vmatpush1.msra.mxu0 0.0
    %2066 = vmatprep.mubr.f32.mxu0 0.0
    %2067 = vmatmul.mubr.f32.gmra.mrb[0].mxu0 %v1997
    %v2068 = vpop.f32.mrb[0].mxu0
    %v2069 = vadd.f32 0.0, %v2068
    %v2070 = vpop.f32.mrb[0].mxu0
    %2071 = vmatprep.mubr.f32.mxu0 0.0
    %2072 = vmatmul.mubr.f32.gmra.mrb[0].mxu0 %v2000
    %v2073 = vpop.f32.mrb[0].mxu0
    %v2074 = vadd.f32 0.0, %v2073
    %v2075 = vpop.f32.mrb[0].mxu0
    %2076 = vdwg.mxu0
    %v2078 = vsel %vm313, %v1984, 0
    %v2081 = vsel %vm313, %v1985, 0
    %2083 = vmatprep.subr.mxu0 0.0
    %2084 = vmatpush1.msra.mxu0 %v1988
    %2085 = vmatprep.subr.mxu0 0.0
    %2086 = vmatpush1.msra.mxu0 %v1989
    %2087 = vmatprep.subr.mxu0 0.0
    %2088 = vmatpush1.msra.mxu0 %v1990
    %2089 = vmatprep.subr.mxu0 0.0
    %2090 = vmatpush1.msra.mxu0 %v1991
    %2091 = vmatprep.subr.mxu0 0.0
    %2092 = vmatpush1.msra.mxu0 0.0
    %2093 = vmatprep.subr.mxu0 0.0
    %2094 = vmatpush1.msra.mxu0 0.0
    %2095 = vmatprep.subr.mxu0 0.0
    %2096 = vmatpush1.msra.mxu0 0.0
    %2097 = vmatprep.subr.mxu0 0.0
    %2098 = vmatpush1.msra.mxu0 0.0
    %2099 = vmatprep.subr.mxu0 0.0
    %2100 = vmatpush1.msra.mxu0 0.0
    %2101 = vmatprep.subr.mxu0 0.0
    %2102 = vmatpush1.msra.mxu0 0.0
    %2103 = vmatprep.subr.mxu0 0.0
    %2104 = vmatpush1.msra.mxu0 0.0
    %2105 = vmatprep.subr.mxu0 0.0
    %2106 = vmatpush1.msra.mxu0 0.0
    %2107 = vmatprep.subr.mxu0 0.0
    %2108 = vmatpush1.msra.mxu0 0.0
    %2109 = vmatprep.subr.mxu0 0.0
    %2110 = vmatpush1.msra.mxu0 0.0
    %2111 = vmatprep.subr.mxu0 0.0
    %2112 = vmatpush1.msra.mxu0 0.0
    %2113 = vmatprep.subr.mxu0 0.0
    %2114 = vmatpush1.msra.mxu0 0.0
    %2115 = vmatprep.subr.mxu0 0.0
    %2116 = vmatpush1.msra.mxu0 0.0
    %2117 = vmatprep.subr.mxu0 0.0
    %2118 = vmatpush1.msra.mxu0 0.0
    %2119 = vmatprep.subr.mxu0 0.0
    %2120 = vmatpush1.msra.mxu0 0.0
    %2121 = vmatprep.subr.mxu0 0.0
    %2122 = vmatpush1.msra.mxu0 0.0
    %2123 = vmatprep.subr.mxu0 0.0
    %2124 = vmatpush1.msra.mxu0 0.0
    %2125 = vmatprep.subr.mxu0 0.0
    %2126 = vmatpush1.msra.mxu0 0.0
    %2127 = vmatprep.subr.mxu0 0.0
    %2128 = vmatpush1.msra.mxu0 0.0
    %2129 = vmatprep.subr.mxu0 0.0
    %2130 = vmatpush1.msra.mxu0 0.0
    %2131 = vmatprep.subr.mxu0 0.0
    %2132 = vmatpush1.msra.mxu0 0.0
    %2133 = vmatprep.subr.mxu0 0.0
    %2134 = vmatpush1.msra.mxu0 0.0
    %2135 = vmatprep.subr.mxu0 0.0
    %2136 = vmatpush1.msra.mxu0 0.0
    %2137 = vmatprep.subr.mxu0 0.0
    %2138 = vmatpush1.msra.mxu0 0.0
    %2139 = vmatprep.subr.mxu0 0.0
    %2140 = vmatpush1.msra.mxu0 0.0
    %2141 = vmatprep.subr.mxu0 0.0
    %2142 = vmatpush1.msra.mxu0 0.0
    %2143 = vmatprep.subr.mxu0 0.0
    %2144 = vmatpush1.msra.mxu0 0.0
    %2145 = vmatprep.subr.mxu0 0.0
    %2146 = vmatpush1.msra.mxu0 0.0
    %2147 = vmatprep.mubr.f32.mxu0 0.0
    %2148 = vmatmul.mubr.f32.gmra.mrb[0].mxu0 %v2078
    %v2149 = vpop.f32.mrb[0].mxu0
    %v2150 = vadd.f32 %v2069, %v2149
    %v2151 = vpop.f32.mrb[0].mxu0
    %2152 = vmatprep.mubr.f32.mxu0 0.0
    %2153 = vmatmul.mubr.f32.gmra.mrb[0].mxu0 %v2081
    %v2154 = vpop.f32.mrb[0].mxu0
    %v2155 = vadd.f32 %v2074, %v2154
    %v2156 = vpop.f32.mrb[0].mxu0
    %2157 = vdwg.mxu0
    %v2158 = vld [vmem:[%s8] sm:$0x1]
    %v2160 = vlaneseq
    %v2161 = vshrl.u32 %v2160, 7
    %v2162 = vsub.s32 0, %v2161
    %v2163 = vrot.slane %v2158, %v2162
    %v2165 = vadd.f32 %v2150, %v2163
    %v2166 = vadd.f32 %v2155, %v2163
    %2167 = vst.msk [vmem:[#allocation2] sm:$0xff] %vm204, %v2165
    %2168 = vst.msk [vmem:[#allocation2 + $0x8] sm:$0xff] %vm204, %v2166
    %s2169 = scalar_lea.vmem [#allocation11], 32
    %v2170 = vld [vmem:[%s2169] sm:$0xff]
    %v2171 = vld [vmem:[%s2169 + $0x8] sm:$0xff]
    %v2172 = vld [vmem:[%s2169 + $0x10] sm:$0xff]
    %v2173 = vld [vmem:[%s2169 + $0x18] sm:$0xff]
    %s2174 = scalar_lea.vmem [#allocation12], 32
    %v2175 = vld [vmem:[%s2174] sm:$0xff]
    %v2176 = vld [vmem:[%s2174 + $0x8] sm:$0xff]
    %v2177 = vld [vmem:[%s2174 + $0x10] sm:$0xff]
    %v2178 = vld [vmem:[%s2174 + $0x18] sm:$0xff]
    %2179 = vmatprep.subr.mxu0 0.0
    %2180 = vmatpush1.msra.mxu0 %v2175
    %2181 = vmatprep.subr.mxu0 0.0
    %2182 = vmatpush1.msra.mxu0 %v2176
    %2183 = vmatprep.subr.mxu0 0.0
    %2184 = vmatpush1.msra.mxu0 %v2177
    %2185 = vmatprep.subr.mxu0 0.0
    %2186 = vmatpush1.msra.mxu0 %v2178
    %2187 = vmatprep.subr.mxu0 0.0
    %2188 = vmatpush1.msra.mxu0 0.0
    %2189 = vmatprep.subr.mxu0 0.0
    %2190 = vmatpush1.msra.mxu0 0.0
    %2191 = vmatprep.subr.mxu0 0.0
    %2192 = vmatpush1.msra.mxu0 0.0
    %2193 = vmatprep.subr.mxu0 0.0
    %2194 = vmatpush1.msra.mxu0 0.0
    %2195 = vmatprep.subr.mxu0 0.0
    %2196 = vmatpush1.msra.mxu0 0.0
    %2197 = vmatprep.subr.mxu0 0.0
    %2198 = vmatpush1.msra.mxu0 0.0
    %2199 = vmatprep.subr.mxu0 0.0
    %2200 = vmatpush1.msra.mxu0 0.0
    %2201 = vmatprep.subr.mxu0 0.0
    %2202 = vmatpush1.msra.mxu0 0.0
    %2203 = vmatprep.subr.mxu0 0.0
    %2204 = vmatpush1.msra.mxu0 0.0
    %2205 = vmatprep.subr.mxu0 0.0
    %2206 = vmatpush1.msra.mxu0 0.0
    %2207 = vmatprep.subr.mxu0 0.0
    %2208 = vmatpush1.msra.mxu0 0.0
    %2209 = vmatprep.subr.mxu0 0.0
    %2210 = vmatpush1.msra.mxu0 0.0
    %2211 = vmatprep.subr.mxu0 0.0
    %2212 = vmatpush1.msra.mxu0 0.0
    %2213 = vmatprep.subr.mxu0 0.0
    %2214 = vmatpush1.msra.mxu0 0.0
    %2215 = vmatprep.subr.mxu0 0.0
    %2216 = vmatpush1.msra.mxu0 0.0
    %2217 = vmatprep.subr.mxu0 0.0
    %2218 = vmatpush1.msra.mxu0 0.0
    %2219 = vmatprep.subr.mxu0 0.0
    %2220 = vmatpush1.msra.mxu0 0.0
    %2221 = vmatprep.subr.mxu0 0.0
    %2222 = vmatpush1.msra.mxu0 0.0
    %2223 = vmatprep.subr.mxu0 0.0
    %2224 = vmatpush1.msra.mxu0 0.0
    %2225 = vmatprep.subr.mxu0 0.0
    %2226 = vmatpush1.msra.mxu0 0.0
    %2227 = vmatprep.subr.mxu0 0.0
    %2228 = vmatpush1.msra.mxu0 0.0
    %2229 = vmatprep.subr.mxu0 0.0
    %2230 = vmatpush1.msra.mxu0 0.0
    %2231 = vmatprep.subr.mxu0 0.0
    %2232 = vmatpush1.msra.mxu0 0.0
    %2233 = vmatprep.subr.mxu0 0.0
    %2234 = vmatpush1.msra.mxu0 0.0
    %2235 = vmatprep.subr.mxu0 0.0
    %2236 = vmatpush1.msra.mxu0 0.0
    %2237 = vmatprep.subr.mxu0 0.0
    %2238 = vmatpush1.msra.mxu0 0.0
    %2239 = vmatprep.subr.mxu0 0.0
    %2240 = vmatpush1.msra.mxu0 0.0
    %2241 = vmatprep.subr.mxu0 0.0
    %2242 = vmatpush1.msra.mxu0 0.0
    %2243 = vmatprep.mubr.f32.mxu0 0.0
    %2244 = vmatmul.mubr.f32.gmra.mrb[0].mxu0 %v1997
    %v2245 = vpop.f32.mrb[0].mxu0
    %v2246 = vadd.f32 0.0, %v2245
    %v2247 = vpop.f32.mrb[0].mxu0
    %2248 = vmatprep.mubr.f32.mxu0 0.0
    %2249 = vmatmul.mubr.f32.gmra.mrb[0].mxu0 %v2000
    %v2250 = vpop.f32.mrb[0].mxu0
    %v2251 = vadd.f32 0.0, %v2250
    %v2252 = vpop.f32.mrb[0].mxu0
    %2253 = vdwg.mxu0
    %2254 = vmatprep.subr.mxu0 0.0
    %2255 = vmatpush1.msra.mxu0 %v2170
    %2256 = vmatprep.subr.mxu0 0.0
    %2257 = vmatpush1.msra.mxu0 %v2171
    %2258 = vmatprep.subr.mxu0 0.0
    %2259 = vmatpush1.msra.mxu0 %v2172
    %2260 = vmatprep.subr.mxu0 0.0
    %2261 = vmatpush1.msra.mxu0 %v2173
    %2262 = vmatprep.subr.mxu0 0.0
    %2263 = vmatpush1.msra.mxu0 0.0
    %2264 = vmatprep.subr.mxu0 0.0
    %2265 = vmatpush1.msra.mxu0 0.0
    %2266 = vmatprep.subr.mxu0 0.0
    %2267 = vmatpush1.msra.mxu0 0.0
    %2268 = vmatprep.subr.mxu0 0.0
    %2269 = vmatpush1.msra.mxu0 0.0
    %2270 = vmatprep.subr.mxu0 0.0
    %2271 = vmatpush1.msra.mxu0 0.0
    %2272 = vmatprep.subr.mxu0 0.0
    %2273 = vmatpush1.msra.mxu0 0.0
    %2274 = vmatprep.subr.mxu0 0.0
    %2275 = vmatpush1.msra.mxu0 0.0
    %2276 = vmatprep.subr.mxu0 0.0
    %2277 = vmatpush1.msra.mxu0 0.0
    %2278 = vmatprep.subr.mxu0 0.0
    %2279 = vmatpush1.msra.mxu0 0.0
    %2280 = vmatprep.subr.mxu0 0.0
    %2281 = vmatpush1.msra.mxu0 0.0
    %2282 = vmatprep.subr.mxu0 0.0
    %2283 = vmatpush1.msra.mxu0 0.0
    %2284 = vmatprep.subr.mxu0 0.0
    %2285 = vmatpush1.msra.mxu0 0.0
    %2286 = vmatprep.subr.mxu0 0.0
    %2287 = vmatpush1.msra.mxu0 0.0
    %2288 = vmatprep.subr.mxu0 0.0
    %2289 = vmatpush1.msra.mxu0 0.0
    %2290 = vmatprep.subr.mxu0 0.0
    %2291 = vmatpush1.msra.mxu0 0.0
    %2292 = vmatprep.subr.mxu0 0.0
    %2293 = vmatpush1.msra.mxu0 0.0
    %2294 = vmatprep.subr.mxu0 0.0
    %2295 = vmatpush1.msra.mxu0 0.0
    %2296 = vmatprep.subr.mxu0 0.0
    %2297 = vmatpush1.msra.mxu0 0.0
    %2298 = vmatprep.subr.mxu0 0.0
    %2299 = vmatpush1.msra.mxu0 0.0
    %2300 = vmatprep.subr.mxu0 0.0
    %2301 = vmatpush1.msra.mxu0 0.0
    %2302 = vmatprep.subr.mxu0 0.0
    %2303 = vmatpush1.msra.mxu0 0.0
    %2304 = vmatprep.subr.mxu0 0.0
    %2305 = vmatpush1.msra.mxu0 0.0
    %2306 = vmatprep.subr.mxu0 0.0
    %2307 = vmatpush1.msra.mxu0 0.0
    %2308 = vmatprep.subr.mxu0 0.0
    %2309 = vmatpush1.msra.mxu0 0.0
    %2310 = vmatprep.subr.mxu0 0.0
    %2311 = vmatpush1.msra.mxu0 0.0
    %2312 = vmatprep.subr.mxu0 0.0
    %2313 = vmatpush1.msra.mxu0 0.0
    %2314 = vmatprep.subr.mxu0 0.0
    %2315 = vmatpush1.msra.mxu0 0.0
    %2316 = vmatprep.subr.mxu0 0.0
    %2317 = vmatpush1.msra.mxu0 0.0
    %2318 = vmatprep.mubr.f32.mxu0 0.0
    %2319 = vmatmul.mubr.f32.gmra.mrb[0].mxu0 %v2078
    %v2320 = vpop.f32.mrb[0].mxu0
    %v2321 = vadd.f32 %v2246, %v2320
    %v2322 = vpop.f32.mrb[0].mxu0
    %2323 = vmatprep.mubr.f32.mxu0 0.0
    %2324 = vmatmul.mubr.f32.gmra.mrb[0].mxu0 %v2081
    %v2325 = vpop.f32.mrb[0].mxu0
    %v2326 = vadd.f32 %v2251, %v2325
    %v2327 = vpop.f32.mrb[0].mxu0
    %2328 = vdwg.mxu0
    %s2329 = scalar_lea.vmem %s8, 1
    %v2330 = vld [vmem:[%s2329] sm:$0x1]
    %v2332 = vlaneseq
    %v2333 = vshrl.u32 %v2332, 7
    %v2334 = vsub.s32 0, %v2333
    %v2335 = vrot.slane %v2330, %v2334
    %v2337 = vadd.f32 %v2321, %v2335
    %v2338 = vadd.f32 %v2326, %v2335
    %2339 = vst.msk [vmem:[#allocation3] sm:$0xff] %vm204, %v2337
    %2340 = vst.msk [vmem:[#allocation3 + $0x8] sm:$0xff] %vm204, %v2338
    %v2341 = vld [vmem:[#allocation14] sm:$0xff]
    %v2342 = vld [vmem:[#allocation14 + $0x8] sm:$0xff]
    %v2343 = vld [vmem:[#allocation14 + $0x10] sm:$0xff]
    %v2344 = vld [vmem:[#allocation14 + $0x18] sm:$0xff]
    %v2345 = vld [vmem:[%s9] sm:$0x1]
    %s2346 = scalar_lea.vmem [#allocation14], 32
    %v2347 = vld [vmem:[%s2346] sm:$0xff]
    %v2348 = vld [vmem:[%s2346 + $0x8] sm:$0xff]
    %v2349 = vld [vmem:[%s2346 + $0x10] sm:$0xff]
    %v2350 = vld [vmem:[%s2346 + $0x18] sm:$0xff]
    %s2351 = scalar_lea.vmem %s9, 1
    %v2352 = vld [vmem:[%s2351] sm:$0x1]
    %v2354 = vlaneseq
    %v2355 = vshrl.u32 %v2354, 7
    %v2356 = vsub.s32 0, %v2355
    %v2357 = vrot.slane %v2345, %v2356
    %2359 = vmatprep.subr.mxu0 0.0
    %2360 = vmatpush1.msra.mxu0 %v2341
    %2361 = vmatprep.subr.mxu0 0.0
    %2362 = vmatpush1.msra.mxu0 %v2342
    %2363 = vmatprep.subr.mxu0 0.0
    %2364 = vmatpush1.msra.mxu0 %v2343
    %2365 = vmatprep.subr.mxu0 0.0
    %2366 = vmatpush1.msra.mxu0 %v2344
    %2367 = vmatprep.subr.mxu0 0.0
    %2368 = vmatpush1.msra.mxu0 0.0
    %2369 = vmatprep.subr.mxu0 0.0
    %2370 = vmatpush1.msra.mxu0 0.0
    %2371 = vmatprep.subr.mxu0 0.0
    %2372 = vmatpush1.msra.mxu0 0.0
    %2373 = vmatprep.subr.mxu0 0.0
    %2374 = vmatpush1.msra.mxu0 0.0
    %2375 = vmatprep.subr.mxu0 0.0
    %2376 = vmatpush1.msra.mxu0 0.0
    %2377 = vmatprep.subr.mxu0 0.0
    %2378 = vmatpush1.msra.mxu0 0.0
    %2379 = vmatprep.subr.mxu0 0.0
    %2380 = vmatpush1.msra.mxu0 0.0
    %2381 = vmatprep.subr.mxu0 0.0
    %2382 = vmatpush1.msra.mxu0 0.0
    %2383 = vmatprep.subr.mxu0 0.0
    %2384 = vmatpush1.msra.mxu0 0.0
    %2385 = vmatprep.subr.mxu0 0.0
    %2386 = vmatpush1.msra.mxu0 0.0
    %2387 = vmatprep.subr.mxu0 0.0
    %2388 = vmatpush1.msra.mxu0 0.0
    %2389 = vmatprep.subr.mxu0 0.0
    %2390 = vmatpush1.msra.mxu0 0.0
    %2391 = vmatprep.subr.mxu0 0.0
    %2392 = vmatpush1.msra.mxu0 0.0
    %2393 = vmatprep.subr.mxu0 0.0
    %2394 = vmatpush1.msra.mxu0 0.0
    %2395 = vmatprep.subr.mxu0 0.0
    %2396 = vmatpush1.msra.mxu0 0.0
    %2397 = vmatprep.subr.mxu0 0.0
    %2398 = vmatpush1.msra.mxu0 0.0
    %2399 = vmatprep.subr.mxu0 0.0
    %2400 = vmatpush1.msra.mxu0 0.0
    %2401 = vmatprep.subr.mxu0 0.0
    %2402 = vmatpush1.msra.mxu0 0.0
    %2403 = vmatprep.subr.mxu0 0.0
    %2404 = vmatpush1.msra.mxu0 0.0
    %2405 = vmatprep.subr.mxu0 0.0
    %2406 = vmatpush1.msra.mxu0 0.0
    %2407 = vmatprep.subr.mxu0 0.0
    %2408 = vmatpush1.msra.mxu0 0.0
    %2409 = vmatprep.subr.mxu0 0.0
    %2410 = vmatpush1.msra.mxu0 0.0
    %2411 = vmatprep.subr.mxu0 0.0
    %2412 = vmatpush1.msra.mxu0 0.0
    %2413 = vmatprep.subr.mxu0 0.0
    %2414 = vmatpush1.msra.mxu0 0.0
    %2415 = vmatprep.subr.mxu0 0.0
    %2416 = vmatpush1.msra.mxu0 0.0
    %2417 = vmatprep.subr.mxu0 0.0
    %2418 = vmatpush1.msra.mxu0 0.0
    %2419 = vmatprep.subr.mxu0 0.0
    %2420 = vmatpush1.msra.mxu0 0.0
    %2421 = vmatprep.subr.mxu0 0.0
    %2422 = vmatpush1.msra.mxu0 0.0
    %2423 = vmatprep.mubr.f32.mxu0 0.0
    %2424 = vmatmul.mubr.f32.gmra.mrb[0].mxu0 %v315
    %v2425 = vpop.f32.mrb[0].mxu0
    %v2426 = vadd.f32 %v2357, %v2425
    %v2427 = vpop.f32.mrb[0].mxu0
    %2428 = vdwg.mxu0
    %v2430 = vlaneseq
    %v2431 = vshrl.u32 %v2430, 7
    %v2432 = vsub.s32 0, %v2431
    %v2433 = vrot.slane %v2352, %v2432
    %2435 = vmatprep.subr.mxu0 0.0
    %2436 = vmatpush1.msra.mxu0 %v2347
    %2437 = vmatprep.subr.mxu0 0.0
    %2438 = vmatpush1.msra.mxu0 %v2348
    %2439 = vmatprep.subr.mxu0 0.0
    %2440 = vmatpush1.msra.mxu0 %v2349
    %2441 = vmatprep.subr.mxu0 0.0
    %2442 = vmatpush1.msra.mxu0 %v2350
    %2443 = vmatprep.subr.mxu0 0.0
    %2444 = vmatpush1.msra.mxu0 0.0
    %2445 = vmatprep.subr.mxu0 0.0
    %2446 = vmatpush1.msra.mxu0 0.0
    %2447 = vmatprep.subr.mxu0 0.0
    %2448 = vmatpush1.msra.mxu0 0.0
    %2449 = vmatprep.subr.mxu0 0.0
    %2450 = vmatpush1.msra.mxu0 0.0
    %2451 = vmatprep.subr.mxu0 0.0
    %2452 = vmatpush1.msra.mxu0 0.0
    %2453 = vmatprep.subr.mxu0 0.0
    %2454 = vmatpush1.msra.mxu0 0.0
    %2455 = vmatprep.subr.mxu0 0.0
    %2456 = vmatpush1.msra.mxu0 0.0
    %2457 = vmatprep.subr.mxu0 0.0
    %2458 = vmatpush1.msra.mxu0 0.0
    %2459 = vmatprep.subr.mxu0 0.0
    %2460 = vmatpush1.msra.mxu0 0.0
    %2461 = vmatprep.subr.mxu0 0.0
    %2462 = vmatpush1.msra.mxu0 0.0
    %2463 = vmatprep.subr.mxu0 0.0
    %2464 = vmatpush1.msra.mxu0 0.0
    %2465 = vmatprep.subr.mxu0 0.0
    %2466 = vmatpush1.msra.mxu0 0.0
    %2467 = vmatprep.subr.mxu0 0.0
    %2468 = vmatpush1.msra.mxu0 0.0
    %2469 = vmatprep.subr.mxu0 0.0
    %2470 = vmatpush1.msra.mxu0 0.0
    %2471 = vmatprep.subr.mxu0 0.0
    %2472 = vmatpush1.msra.mxu0 0.0
    %2473 = vmatprep.subr.mxu0 0.0
    %2474 = vmatpush1.msra.mxu0 0.0
    %2475 = vmatprep.subr.mxu0 0.0
    %2476 = vmatpush1.msra.mxu0 0.0
    %2477 = vmatprep.subr.mxu0 0.0
    %2478 = vmatpush1.msra.mxu0 0.0
    %2479 = vmatprep.subr.mxu0 0.0
    %2480 = vmatpush1.msra.mxu0 0.0
    %2481 = vmatprep.subr.mxu0 0.0
    %2482 = vmatpush1.msra.mxu0 0.0
    %2483 = vmatprep.subr.mxu0 0.0
    %2484 = vmatpush1.msra.mxu0 0.0
    %2485 = vmatprep.subr.mxu0 0.0
    %2486 = vmatpush1.msra.mxu0 0.0
    %2487 = vmatprep.subr.mxu0 0.0
    %2488 = vmatpush1.msra.mxu0 0.0
    %2489 = vmatprep.subr.mxu0 0.0
    %2490 = vmatpush1.msra.mxu0 0.0
    %2491 = vmatprep.subr.mxu0 0.0
    %2492 = vmatpush1.msra.mxu0 0.0
    %2493 = vmatprep.subr.mxu0 0.0
    %2494 = vmatpush1.msra.mxu0 0.0
    %2495 = vmatprep.subr.mxu0 0.0
    %2496 = vmatpush1.msra.mxu0 0.0
    %2497 = vmatprep.subr.mxu0 0.0
    %2498 = vmatpush1.msra.mxu0 0.0
    %2499 = vmatprep.mubr.f32.mxu0 0.0
    %2500 = vmatmul.mubr.f32.gmra.mrb[0].mxu0 %v315
    %v2501 = vpop.f32.mrb[0].mxu0
    %v2502 = vadd.f32 %v2433, %v2501
    %v2503 = vpop.f32.mrb[0].mxu0
    %2504 = vdwg.mxu0
    %v2505 = vld [vmem:[#allocation2] sm:$0x3]
    %v2506 = vadd.f32 %v2505, %v2426
    %v2507 = vxor.u32 %v2506, 2147483648
    %v2508 = vmul.f32 %v2507, 1.442695
    %v2509 = vpow.pop %v2508
    %v2510 = vadd.f32 %v2509, 1.0
    %v2511 = vrcp.pop %v2510
    %v2512 = vmul.f32 1.0, %v2511
    %2514 = vrot.lane.b32.xlu0 %v2426, 64
    %v2515 = vpop.permute.xlu0 %2514
    %v2517 = vmul.f32 %v2512, %v2515
    %2519 = vrot.lane.b32.xlu0 %v2517, 64
    %v2520 = vpop.permute.xlu0 %2519
    %v2522 = vadd.f32 %v2505, %v2520
    %v2523 = vtanh.pop %v2522
    %v2524 = vsub.f32 1.0, %v2512
    %2526 = vrot.lane.b32.xlu0 %v2523, 96
    %v2527 = vpop.permute.xlu0 %2526
    %v2529 = vmul.f32 %v2524, %v2527
    %v2530 = vmul.f32 %v2512, 0.0
    %v2531 = vadd.f32 %v2529, %v2530
    %v2532 = vld [vmem:[#allocation3 + $0xe] sm:$0x3]
    %v2533 = vadd.f32 %v2532, %v2502
    %v2534 = vxor.u32 %v2533, 2147483648
    %v2535 = vmul.f32 %v2534, 1.442695
    %v2536 = vpow.pop %v2535
    %v2537 = vadd.f32 %v2536, 1.0
    %v2538 = vrcp.pop %v2537
    %v2539 = vmul.f32 1.0, %v2538
    %2541 = vrot.lane.b32.xlu0 %v2502, 64
    %v2542 = vpop.permute.xlu0 %2541
    %v2544 = vmul.f32 %v2539, %v2542
    %2546 = vrot.lane.b32.xlu0 %v2544, 64
    %v2547 = vpop.permute.xlu0 %2546
    %v2549 = vadd.f32 %v2532, %v2547
    %v2550 = vtanh.pop %v2549
    %v2551 = vsub.f32 1.0, %v2539
    %2553 = vrot.lane.b32.xlu0 %v2550, 96
    %v2554 = vpop.permute.xlu0 %2553
    %v2556 = vmul.f32 %v2551, %v2554
    %v2557 = vmul.f32 %v2539, 0.0
    %v2558 = vadd.f32 %v2556, %v2557
    %2560 = vrot.lane.b32.xlu0 %v2531, 96
    %v2561 = vpop.permute.xlu0 %2560
    %2563 = vst.msk [vmem:[#allocation4] sm:$0x3] %vm521, %v2561
    %2565 = vrot.lane.b32.xlu0 %v2558, 96
    %v2566 = vpop.permute.xlu0 %2565
    %2568 = vst.msk [vmem:[#allocation5 + $0xe] sm:$0x3] %vm521, %v2566
    %v2569 = vsel %vm313, %v2561, 0
    %2571 = vmatprep.subr.mxu0 0.0
    %2572 = vmatpush1.msra.mxu0 %v2341
    %2573 = vmatprep.subr.mxu0 0.0
    %2574 = vmatpush1.msra.mxu0 %v2342
    %2575 = vmatprep.subr.mxu0 0.0
    %2576 = vmatpush1.msra.mxu0 %v2343
    %2577 = vmatprep.subr.mxu0 0.0
    %2578 = vmatpush1.msra.mxu0 %v2344
    %2579 = vmatprep.subr.mxu0 0.0
    %2580 = vmatpush1.msra.mxu0 0.0
    %2581 = vmatprep.subr.mxu0 0.0
    %2582 = vmatpush1.msra.mxu0 0.0
    %2583 = vmatprep.subr.mxu0 0.0
    %2584 = vmatpush1.msra.mxu0 0.0
    %2585 = vmatprep.subr.mxu0 0.0
    %2586 = vmatpush1.msra.mxu0 0.0
    %2587 = vmatprep.subr.mxu0 0.0
    %2588 = vmatpush1.msra.mxu0 0.0
    %2589 = vmatprep.subr.mxu0 0.0
    %2590 = vmatpush1.msra.mxu0 0.0
    %2591 = vmatprep.subr.mxu0 0.0
    %2592 = vmatpush1.msra.mxu0 0.0
    %2593 = vmatprep.subr.mxu0 0.0
    %2594 = vmatpush1.msra.mxu0 0.0
    %2595 = vmatprep.subr.mxu0 0.0
    %2596 = vmatpush1.msra.mxu0 0.0
    %2597 = vmatprep.subr.mxu0 0.0
    %2598 = vmatpush1.msra.mxu0 0.0
    %2599 = vmatprep.subr.mxu0 0.0
    %2600 = vmatpush1.msra.mxu0 0.0
    %2601 = vmatprep.subr.mxu0 0.0
    %2602 = vmatpush1.msra.mxu0 0.0
    %2603 = vmatprep.subr.mxu0 0.0
    %2604 = vmatpush1.msra.mxu0 0.0
    %2605 = vmatprep.subr.mxu0 0.0
    %2606 = vmatpush1.msra.mxu0 0.0
    %2607 = vmatprep.subr.mxu0 0.0
    %2608 = vmatpush1.msra.mxu0 0.0
    %2609 = vmatprep.subr.mxu0 0.0
    %2610 = vmatpush1.msra.mxu0 0.0
    %2611 = vmatprep.subr.mxu0 0.0
    %2612 = vmatpush1.msra.mxu0 0.0
    %2613 = vmatprep.subr.mxu0 0.0
    %2614 = vmatpush1.msra.mxu0 0.0
    %2615 = vmatprep.subr.mxu0 0.0
    %2616 = vmatpush1.msra.mxu0 0.0
    %2617 = vmatprep.subr.mxu0 0.0
    %2618 = vmatpush1.msra.mxu0 0.0
    %2619 = vmatprep.subr.mxu0 0.0
    %2620 = vmatpush1.msra.mxu0 0.0
    %2621 = vmatprep.subr.mxu0 0.0
    %2622 = vmatpush1.msra.mxu0 0.0
    %2623 = vmatprep.subr.mxu0 0.0
    %2624 = vmatpush1.msra.mxu0 0.0
    %2625 = vmatprep.subr.mxu0 0.0
    %2626 = vmatpush1.msra.mxu0 0.0
    %2627 = vmatprep.subr.mxu0 0.0
    %2628 = vmatpush1.msra.mxu0 0.0
    %2629 = vmatprep.subr.mxu0 0.0
    %2630 = vmatpush1.msra.mxu0 0.0
    %2631 = vmatprep.subr.mxu0 0.0
    %2632 = vmatpush1.msra.mxu0 0.0
    %2633 = vmatprep.subr.mxu0 0.0
    %2634 = vmatpush1.msra.mxu0 0.0
    %2635 = vmatprep.mubr.f32.mxu0 0.0
    %2636 = vmatmul.mubr.f32.gmra.mrb[0].mxu0 %v2569
    %v2637 = vpop.f32.mrb[0].mxu0
    %v2638 = vadd.f32 %v2357, %v2637
    %v2639 = vpop.f32.mrb[0].mxu0
    %2640 = vdwg.mxu0
    %v2641 = vsel %vm313, %v2566, 0
    %2643 = vmatprep.subr.mxu0 0.0
    %2644 = vmatpush1.msra.mxu0 %v2347
    %2645 = vmatprep.subr.mxu0 0.0
    %2646 = vmatpush1.msra.mxu0 %v2348
    %2647 = vmatprep.subr.mxu0 0.0
    %2648 = vmatpush1.msra.mxu0 %v2349
    %2649 = vmatprep.subr.mxu0 0.0
    %2650 = vmatpush1.msra.mxu0 %v2350
    %2651 = vmatprep.subr.mxu0 0.0
    %2652 = vmatpush1.msra.mxu0 0.0
    %2653 = vmatprep.subr.mxu0 0.0
    %2654 = vmatpush1.msra.mxu0 0.0
    %2655 = vmatprep.subr.mxu0 0.0
    %2656 = vmatpush1.msra.mxu0 0.0
    %2657 = vmatprep.subr.mxu0 0.0
    %2658 = vmatpush1.msra.mxu0 0.0
    %2659 = vmatprep.subr.mxu0 0.0
    %2660 = vmatpush1.msra.mxu0 0.0
    %2661 = vmatprep.subr.mxu0 0.0
    %2662 = vmatpush1.msra.mxu0 0.0
    %2663 = vmatprep.subr.mxu0 0.0
    %2664 = vmatpush1.msra.mxu0 0.0
    %2665 = vmatprep.subr.mxu0 0.0
    %2666 = vmatpush1.msra.mxu0 0.0
    %2667 = vmatprep.subr.mxu0 0.0
    %2668 = vmatpush1.msra.mxu0 0.0
    %2669 = vmatprep.subr.mxu0 0.0
    %2670 = vmatpush1.msra.mxu0 0.0
    %2671 = vmatprep.subr.mxu0 0.0
    %2672 = vmatpush1.msra.mxu0 0.0
    %2673 = vmatprep.subr.mxu0 0.0
    %2674 = vmatpush1.msra.mxu0 0.0
    %2675 = vmatprep.subr.mxu0 0.0
    %2676 = vmatpush1.msra.mxu0 0.0
    %2677 = vmatprep.subr.mxu0 0.0
    %2678 = vmatpush1.msra.mxu0 0.0
    %2679 = vmatprep.subr.mxu0 0.0
    %2680 = vmatpush1.msra.mxu0 0.0
    %2681 = vmatprep.subr.mxu0 0.0
    %2682 = vmatpush1.msra.mxu0 0.0
    %2683 = vmatprep.subr.mxu0 0.0
    %2684 = vmatpush1.msra.mxu0 0.0
    %2685 = vmatprep.subr.mxu0 0.0
    %2686 = vmatpush1.msra.mxu0 0.0
    %2687 = vmatprep.subr.mxu0 0.0
    %2688 = vmatpush1.msra.mxu0 0.0
    %2689 = vmatprep.subr.mxu0 0.0
    %2690 = vmatpush1.msra.mxu0 0.0
    %2691 = vmatprep.subr.mxu0 0.0
    %2692 = vmatpush1.msra.mxu0 0.0
    %2693 = vmatprep.subr.mxu0 0.0
    %2694 = vmatpush1.msra.mxu0 0.0
    %2695 = vmatprep.subr.mxu0 0.0
    %2696 = vmatpush1.msra.mxu0 0.0
    %2697 = vmatprep.subr.mxu0 0.0
    %2698 = vmatpush1.msra.mxu0 0.0
    %2699 = vmatprep.subr.mxu0 0.0
    %2700 = vmatpush1.msra.mxu0 0.0
    %2701 = vmatprep.subr.mxu0 0.0
    %2702 = vmatpush1.msra.mxu0 0.0
    %2703 = vmatprep.subr.mxu0 0.0
    %2704 = vmatpush1.msra.mxu0 0.0
    %2705 = vmatprep.subr.mxu0 0.0
    %2706 = vmatpush1.msra.mxu0 0.0
    %2707 = vmatprep.mubr.f32.mxu0 0.0
    %2708 = vmatmul.mubr.f32.gmra.mrb[0].mxu0 %v2641
    %v2709 = vpop.f32.mrb[0].mxu0
    %v2710 = vadd.f32 %v2433, %v2709
    %v2711 = vpop.f32.mrb[0].mxu0
    %2712 = vdwg.mxu0
    %v2713 = vld [vmem:[#allocation2 + $0x2] sm:$0x3]
    %v2714 = vadd.f32 %v2713, %v2638
    %v2715 = vxor.u32 %v2714, 2147483648
    %v2716 = vmul.f32 %v2715, 1.442695
    %v2717 = vpow.pop %v2716
    %v2718 = vadd.f32 %v2717, 1.0
    %v2719 = vrcp.pop %v2718
    %v2720 = vmul.f32 1.0, %v2719
    %2722 = vrot.lane.b32.xlu0 %v2638, 64
    %v2723 = vpop.permute.xlu0 %2722
    %v2725 = vmul.f32 %v2720, %v2723
    %2727 = vrot.lane.b32.xlu0 %v2725, 64
    %v2728 = vpop.permute.xlu0 %2727
    %v2730 = vadd.f32 %v2713, %v2728
    %v2731 = vtanh.pop %v2730
    %v2732 = vsub.f32 1.0, %v2720
    %2734 = vrot.lane.b32.xlu0 %v2731, 96
    %v2735 = vpop.permute.xlu0 %2734
    %v2737 = vmul.f32 %v2732, %v2735
    %v2738 = vmul.f32 %v2720, %v2531
    %v2739 = vadd.f32 %v2737, %v2738
    %v2740 = vld [vmem:[#allocation3 + $0xc] sm:$0x3]
    %v2741 = vadd.f32 %v2740, %v2710
    %v2742 = vxor.u32 %v2741, 2147483648
    %v2743 = vmul.f32 %v2742, 1.442695
    %v2744 = vpow.pop %v2743
    %v2745 = vadd.f32 %v2744, 1.0
    %v2746 = vrcp.pop %v2745
    %v2747 = vmul.f32 1.0, %v2746
    %2749 = vrot.lane.b32.xlu0 %v2710, 64
    %v2750 = vpop.permute.xlu0 %2749
    %v2752 = vmul.f32 %v2747, %v2750
    %2754 = vrot.lane.b32.xlu0 %v2752, 64
    %v2755 = vpop.permute.xlu0 %2754
    %v2757 = vadd.f32 %v2740, %v2755
    %v2758 = vtanh.pop %v2757
    %v2759 = vsub.f32 1.0, %v2747
    %2761 = vrot.lane.b32.xlu0 %v2758, 96
    %v2762 = vpop.permute.xlu0 %2761
    %v2764 = vmul.f32 %v2759, %v2762
    %v2765 = vmul.f32 %v2747, %v2558
    %v2766 = vadd.f32 %v2764, %v2765
    %2768 = vrot.lane.b32.xlu0 %v2739, 96
    %v2769 = vpop.permute.xlu0 %2768
    %2771 = vst.msk [vmem:[#allocation4 + $0x2] sm:$0x3] %vm521, %v2769
    %2773 = vrot.lane.b32.xlu0 %v2766, 96
    %v2774 = vpop.permute.xlu0 %2773
    %2776 = vst.msk [vmem:[#allocation5 + $0xc] sm:$0x3] %vm521, %v2774
    %v2777 = vsel %vm313, %v2769, 0
    %2779 = vmatprep.subr.mxu0 0.0
    %2780 = vmatpush1.msra.mxu0 %v2341
    %2781 = vmatprep.subr.mxu0 0.0
    %2782 = vmatpush1.msra.mxu0 %v2342
    %2783 = vmatprep.subr.mxu0 0.0
    %2784 = vmatpush1.msra.mxu0 %v2343
    %2785 = vmatprep.subr.mxu0 0.0
    %2786 = vmatpush1.msra.mxu0 %v2344
    %2787 = vmatprep.subr.mxu0 0.0
    %2788 = vmatpush1.msra.mxu0 0.0
    %2789 = vmatprep.subr.mxu0 0.0
    %2790 = vmatpush1.msra.mxu0 0.0
    %2791 = vmatprep.subr.mxu0 0.0
    %2792 = vmatpush1.msra.mxu0 0.0
    %2793 = vmatprep.subr.mxu0 0.0
    %2794 = vmatpush1.msra.mxu0 0.0
    %2795 = vmatprep.subr.mxu0 0.0
    %2796 = vmatpush1.msra.mxu0 0.0
    %2797 = vmatprep.subr.mxu0 0.0
    %2798 = vmatpush1.msra.mxu0 0.0
    %2799 = vmatprep.subr.mxu0 0.0
    %2800 = vmatpush1.msra.mxu0 0.0
    %2801 = vmatprep.subr.mxu0 0.0
    %2802 = vmatpush1.msra.mxu0 0.0
    %2803 = vmatprep.subr.mxu0 0.0
    %2804 = vmatpush1.msra.mxu0 0.0
    %2805 = vmatprep.subr.mxu0 0.0
    %2806 = vmatpush1.msra.mxu0 0.0
    %2807 = vmatprep.subr.mxu0 0.0
    %2808 = vmatpush1.msra.mxu0 0.0
    %2809 = vmatprep.subr.mxu0 0.0
    %2810 = vmatpush1.msra.mxu0 0.0
    %2811 = vmatprep.subr.mxu0 0.0
    %2812 = vmatpush1.msra.mxu0 0.0
    %2813 = vmatprep.subr.mxu0 0.0
    %2814 = vmatpush1.msra.mxu0 0.0
    %2815 = vmatprep.subr.mxu0 0.0
    %2816 = vmatpush1.msra.mxu0 0.0
    %2817 = vmatprep.subr.mxu0 0.0
    %2818 = vmatpush1.msra.mxu0 0.0
    %2819 = vmatprep.subr.mxu0 0.0
    %2820 = vmatpush1.msra.mxu0 0.0
    %2821 = vmatprep.subr.mxu0 0.0
    %2822 = vmatpush1.msra.mxu0 0.0
    %2823 = vmatprep.subr.mxu0 0.0
    %2824 = vmatpush1.msra.mxu0 0.0
    %2825 = vmatprep.subr.mxu0 0.0
    %2826 = vmatpush1.msra.mxu0 0.0
    %2827 = vmatprep.subr.mxu0 0.0
    %2828 = vmatpush1.msra.mxu0 0.0
    %2829 = vmatprep.subr.mxu0 0.0
    %2830 = vmatpush1.msra.mxu0 0.0
    %2831 = vmatprep.subr.mxu0 0.0
    %2832 = vmatpush1.msra.mxu0 0.0
    %2833 = vmatprep.subr.mxu0 0.0
    %2834 = vmatpush1.msra.mxu0 0.0
    %2835 = vmatprep.subr.mxu0 0.0
    %2836 = vmatpush1.msra.mxu0 0.0
    %2837 = vmatprep.subr.mxu0 0.0
    %2838 = vmatpush1.msra.mxu0 0.0
    %2839 = vmatprep.subr.mxu0 0.0
    %2840 = vmatpush1.msra.mxu0 0.0
    %2841 = vmatprep.subr.mxu0 0.0
    %2842 = vmatpush1.msra.mxu0 0.0
    %2843 = vmatprep.mubr.f32.mxu0 0.0
    %2844 = vmatmul.mubr.f32.gmra.mrb[0].mxu0 %v2777
    %v2845 = vpop.f32.mrb[0].mxu0
    %v2846 = vadd.f32 %v2357, %v2845
    %v2847 = vpop.f32.mrb[0].mxu0
    %2848 = vdwg.mxu0
    %v2849 = vsel %vm313, %v2774, 0
    %2851 = vmatprep.subr.mxu0 0.0
    %2852 = vmatpush1.msra.mxu0 %v2347
    %2853 = vmatprep.subr.mxu0 0.0
    %2854 = vmatpush1.msra.mxu0 %v2348
    %2855 = vmatprep.subr.mxu0 0.0
    %2856 = vmatpush1.msra.mxu0 %v2349
    %2857 = vmatprep.subr.mxu0 0.0
    %2858 = vmatpush1.msra.mxu0 %v2350
    %2859 = vmatprep.subr.mxu0 0.0
    %2860 = vmatpush1.msra.mxu0 0.0
    %2861 = vmatprep.subr.mxu0 0.0
    %2862 = vmatpush1.msra.mxu0 0.0
    %2863 = vmatprep.subr.mxu0 0.0
    %2864 = vmatpush1.msra.mxu0 0.0
    %2865 = vmatprep.subr.mxu0 0.0
    %2866 = vmatpush1.msra.mxu0 0.0
    %2867 = vmatprep.subr.mxu0 0.0
    %2868 = vmatpush1.msra.mxu0 0.0
    %2869 = vmatprep.subr.mxu0 0.0
    %2870 = vmatpush1.msra.mxu0 0.0
    %2871 = vmatprep.subr.mxu0 0.0
    %2872 = vmatpush1.msra.mxu0 0.0
    %2873 = vmatprep.subr.mxu0 0.0
    %2874 = vmatpush1.msra.mxu0 0.0
    %2875 = vmatprep.subr.mxu0 0.0
    %2876 = vmatpush1.msra.mxu0 0.0
    %2877 = vmatprep.subr.mxu0 0.0
    %2878 = vmatpush1.msra.mxu0 0.0
    %2879 = vmatprep.subr.mxu0 0.0
    %2880 = vmatpush1.msra.mxu0 0.0
    %2881 = vmatprep.subr.mxu0 0.0
    %2882 = vmatpush1.msra.mxu0 0.0
    %2883 = vmatprep.subr.mxu0 0.0
    %2884 = vmatpush1.msra.mxu0 0.0
    %2885 = vmatprep.subr.mxu0 0.0
    %2886 = vmatpush1.msra.mxu0 0.0
    %2887 = vmatprep.subr.mxu0 0.0
    %2888 = vmatpush1.msra.mxu0 0.0
    %2889 = vmatprep.subr.mxu0 0.0
    %2890 = vmatpush1.msra.mxu0 0.0
    %2891 = vmatprep.subr.mxu0 0.0
    %2892 = vmatpush1.msra.mxu0 0.0
    %2893 = vmatprep.subr.mxu0 0.0
    %2894 = vmatpush1.msra.mxu0 0.0
    %2895 = vmatprep.subr.mxu0 0.0
    %2896 = vmatpush1.msra.mxu0 0.0
    %2897 = vmatprep.subr.mxu0 0.0
    %2898 = vmatpush1.msra.mxu0 0.0
    %2899 = vmatprep.subr.mxu0 0.0
    %2900 = vmatpush1.msra.mxu0 0.0
    %2901 = vmatprep.subr.mxu0 0.0
    %2902 = vmatpush1.msra.mxu0 0.0
    %2903 = vmatprep.subr.mxu0 0.0
    %2904 = vmatpush1.msra.mxu0 0.0
    %2905 = vmatprep.subr.mxu0 0.0
    %2906 = vmatpush1.msra.mxu0 0.0
    %2907 = vmatprep.subr.mxu0 0.0
    %2908 = vmatpush1.msra.mxu0 0.0
    %2909 = vmatprep.subr.mxu0 0.0
    %2910 = vmatpush1.msra.mxu0 0.0
    %2911 = vmatprep.subr.mxu0 0.0
    %2912 = vmatpush1.msra.mxu0 0.0
    %2913 = vmatprep.subr.mxu0 0.0
    %2914 = vmatpush1.msra.mxu0 0.0
    %2915 = vmatprep.mubr.f32.mxu0 0.0
    %2916 = vmatmul.mubr.f32.gmra.mrb[0].mxu0 %v2849
    %v2917 = vpop.f32.mrb[0].mxu0
    %v2918 = vadd.f32 %v2433, %v2917
    %v2919 = vpop.f32.mrb[0].mxu0
    %2920 = vdwg.mxu0
    %v2921 = vld [vmem:[#allocation2 + $0x4] sm:$0x3]
    %v2922 = vadd.f32 %v2921, %v2846
    %v2923 = vxor.u32 %v2922, 2147483648
    %v2924 = vmul.f32 %v2923, 1.442695
    %v2925 = vpow.pop %v2924
    %v2926 = vadd.f32 %v2925, 1.0
    %v2927 = vrcp.pop %v2926
    %v2928 = vmul.f32 1.0, %v2927
    %2930 = vrot.lane.b32.xlu0 %v2846, 64
    %v2931 = vpop.permute.xlu0 %2930
    %v2933 = vmul.f32 %v2928, %v2931
    %2935 = vrot.lane.b32.xlu0 %v2933, 64
    %v2936 = vpop.permute.xlu0 %2935
    %v2938 = vadd.f32 %v2921, %v2936
    %v2939 = vtanh.pop %v2938
    %v2940 = vsub.f32 1.0, %v2928
    %2942 = vrot.lane.b32.xlu0 %v2939, 96
    %v2943 = vpop.permute.xlu0 %2942
    %v2945 = vmul.f32 %v2940, %v2943
    %v2946 = vmul.f32 %v2928, %v2739
    %v2947 = vadd.f32 %v2945, %v2946
    %v2948 = vld [vmem:[#allocation3 + $0xa] sm:$0x3]
    %v2949 = vadd.f32 %v2948, %v2918
    %v2950 = vxor.u32 %v2949, 2147483648
    %v2951 = vmul.f32 %v2950, 1.442695
    %v2952 = vpow.pop %v2951
    %v2953 = vadd.f32 %v2952, 1.0
    %v2954 = vrcp.pop %v2953
    %v2955 = vmul.f32 1.0, %v2954
    %2957 = vrot.lane.b32.xlu0 %v2918, 64
    %v2958 = vpop.permute.xlu0 %2957
    %v2960 = vmul.f32 %v2955, %v2958
    %2962 = vrot.lane.b32.xlu0 %v2960, 64
    %v2963 = vpop.permute.xlu0 %2962
    %v2965 = vadd.f32 %v2948, %v2963
    %v2966 = vtanh.pop %v2965
    %v2967 = vsub.f32 1.0, %v2955
    %2969 = vrot.lane.b32.xlu0 %v2966, 96
    %v2970 = vpop.permute.xlu0 %2969
    %v2972 = vmul.f32 %v2967, %v2970
    %v2973 = vmul.f32 %v2955, %v2766
    %v2974 = vadd.f32 %v2972, %v2973
    %2976 = vrot.lane.b32.xlu0 %v2947, 96
    %v2977 = vpop.permute.xlu0 %2976
    %2979 = vst.msk [vmem:[#allocation4 + $0x4] sm:$0x3] %vm521, %v2977
    %2981 = vrot.lane.b32.xlu0 %v2974, 96
    %v2982 = vpop.permute.xlu0 %2981
    %2984 = vst.msk [vmem:[#allocation5 + $0xa] sm:$0x3] %vm521, %v2982
    %v2985 = vsel %vm313, %v2977, 0
    %2987 = vmatprep.subr.mxu0 0.0
    %2988 = vmatpush1.msra.mxu0 %v2341
    %2989 = vmatprep.subr.mxu0 0.0
    %2990 = vmatpush1.msra.mxu0 %v2342
    %2991 = vmatprep.subr.mxu0 0.0
    %2992 = vmatpush1.msra.mxu0 %v2343
    %2993 = vmatprep.subr.mxu0 0.0
    %2994 = vmatpush1.msra.mxu0 %v2344
    %2995 = vmatprep.subr.mxu0 0.0
    %2996 = vmatpush1.msra.mxu0 0.0
    %2997 = vmatprep.subr.mxu0 0.0
    %2998 = vmatpush1.msra.mxu0 0.0
    %2999 = vmatprep.subr.mxu0 0.0
    %3000 = vmatpush1.msra.mxu0 0.0
    %3001 = vmatprep.subr.mxu0 0.0
    %3002 = vmatpush1.msra.mxu0 0.0
    %3003 = vmatprep.subr.mxu0 0.0
    %3004 = vmatpush1.msra.mxu0 0.0
    %3005 = vmatprep.subr.mxu0 0.0
    %3006 = vmatpush1.msra.mxu0 0.0
    %3007 = vmatprep.subr.mxu0 0.0
    %3008 = vmatpush1.msra.mxu0 0.0
    %3009 = vmatprep.subr.mxu0 0.0
    %3010 = vmatpush1.msra.mxu0 0.0
    %3011 = vmatprep.subr.mxu0 0.0
    %3012 = vmatpush1.msra.mxu0 0.0
    %3013 = vmatprep.subr.mxu0 0.0
    %3014 = vmatpush1.msra.mxu0 0.0
    %3015 = vmatprep.subr.mxu0 0.0
    %3016 = vmatpush1.msra.mxu0 0.0
    %3017 = vmatprep.subr.mxu0 0.0
    %3018 = vmatpush1.msra.mxu0 0.0
    %3019 = vmatprep.subr.mxu0 0.0
    %3020 = vmatpush1.msra.mxu0 0.0
    %3021 = vmatprep.subr.mxu0 0.0
    %3022 = vmatpush1.msra.mxu0 0.0
    %3023 = vmatprep.subr.mxu0 0.0
    %3024 = vmatpush1.msra.mxu0 0.0
    %3025 = vmatprep.subr.mxu0 0.0
    %3026 = vmatpush1.msra.mxu0 0.0
    %3027 = vmatprep.subr.mxu0 0.0
    %3028 = vmatpush1.msra.mxu0 0.0
    %3029 = vmatprep.subr.mxu0 0.0
    %3030 = vmatpush1.msra.mxu0 0.0
    %3031 = vmatprep.subr.mxu0 0.0
    %3032 = vmatpush1.msra.mxu0 0.0
    %3033 = vmatprep.subr.mxu0 0.0
    %3034 = vmatpush1.msra.mxu0 0.0
    %3035 = vmatprep.subr.mxu0 0.0
    %3036 = vmatpush1.msra.mxu0 0.0
    %3037 = vmatprep.subr.mxu0 0.0
    %3038 = vmatpush1.msra.mxu0 0.0
    %3039 = vmatprep.subr.mxu0 0.0
    %3040 = vmatpush1.msra.mxu0 0.0
    %3041 = vmatprep.subr.mxu0 0.0
    %3042 = vmatpush1.msra.mxu0 0.0
    %3043 = vmatprep.subr.mxu0 0.0
    %3044 = vmatpush1.msra.mxu0 0.0
    %3045 = vmatprep.subr.mxu0 0.0
    %3046 = vmatpush1.msra.mxu0 0.0
    %3047 = vmatprep.subr.mxu0 0.0
    %3048 = vmatpush1.msra.mxu0 0.0
    %3049 = vmatprep.subr.mxu0 0.0
    %3050 = vmatpush1.msra.mxu0 0.0
    %3051 = vmatprep.mubr.f32.mxu0 0.0
    %3052 = vmatmul.mubr.f32.gmra.mrb[0].mxu0 %v2985
    %v3053 = vpop.f32.mrb[0].mxu0
    %v3054 = vadd.f32 %v2357, %v3053
    %v3055 = vpop.f32.mrb[0].mxu0
    %3056 = vdwg.mxu0
    %v3057 = vsel %vm313, %v2982, 0
    %3059 = vmatprep.subr.mxu0 0.0
    %3060 = vmatpush1.msra.mxu0 %v2347
    %3061 = vmatprep.subr.mxu0 0.0
    %3062 = vmatpush1.msra.mxu0 %v2348
    %3063 = vmatprep.subr.mxu0 0.0
    %3064 = vmatpush1.msra.mxu0 %v2349
    %3065 = vmatprep.subr.mxu0 0.0
    %3066 = vmatpush1.msra.mxu0 %v2350
    %3067 = vmatprep.subr.mxu0 0.0
    %3068 = vmatpush1.msra.mxu0 0.0
    %3069 = vmatprep.subr.mxu0 0.0
    %3070 = vmatpush1.msra.mxu0 0.0
    %3071 = vmatprep.subr.mxu0 0.0
    %3072 = vmatpush1.msra.mxu0 0.0
    %3073 = vmatprep.subr.mxu0 0.0
    %3074 = vmatpush1.msra.mxu0 0.0
    %3075 = vmatprep.subr.mxu0 0.0
    %3076 = vmatpush1.msra.mxu0 0.0
    %3077 = vmatprep.subr.mxu0 0.0
    %3078 = vmatpush1.msra.mxu0 0.0
    %3079 = vmatprep.subr.mxu0 0.0
    %3080 = vmatpush1.msra.mxu0 0.0
    %3081 = vmatprep.subr.mxu0 0.0
    %3082 = vmatpush1.msra.mxu0 0.0
    %3083 = vmatprep.subr.mxu0 0.0
    %3084 = vmatpush1.msra.mxu0 0.0
    %3085 = vmatprep.subr.mxu0 0.0
    %3086 = vmatpush1.msra.mxu0 0.0
    %3087 = vmatprep.subr.mxu0 0.0
    %3088 = vmatpush1.msra.mxu0 0.0
    %3089 = vmatprep.subr.mxu0 0.0
    %3090 = vmatpush1.msra.mxu0 0.0
    %3091 = vmatprep.subr.mxu0 0.0
    %3092 = vmatpush1.msra.mxu0 0.0
    %3093 = vmatprep.subr.mxu0 0.0
    %3094 = vmatpush1.msra.mxu0 0.0
    %3095 = vmatprep.subr.mxu0 0.0
    %3096 = vmatpush1.msra.mxu0 0.0
    %3097 = vmatprep.subr.mxu0 0.0
    %3098 = vmatpush1.msra.mxu0 0.0
    %3099 = vmatprep.subr.mxu0 0.0
    %3100 = vmatpush1.msra.mxu0 0.0
    %3101 = vmatprep.subr.mxu0 0.0
    %3102 = vmatpush1.msra.mxu0 0.0
    %3103 = vmatprep.subr.mxu0 0.0
    %3104 = vmatpush1.msra.mxu0 0.0
    %3105 = vmatprep.subr.mxu0 0.0
    %3106 = vmatpush1.msra.mxu0 0.0
    %3107 = vmatprep.subr.mxu0 0.0
    %3108 = vmatpush1.msra.mxu0 0.0
    %3109 = vmatprep.subr.mxu0 0.0
    %3110 = vmatpush1.msra.mxu0 0.0
    %3111 = vmatprep.subr.mxu0 0.0
    %3112 = vmatpush1.msra.mxu0 0.0
    %3113 = vmatprep.subr.mxu0 0.0
    %3114 = vmatpush1.msra.mxu0 0.0
    %3115 = vmatprep.subr.mxu0 0.0
    %3116 = vmatpush1.msra.mxu0 0.0
    %3117 = vmatprep.subr.mxu0 0.0
    %3118 = vmatpush1.msra.mxu0 0.0
    %3119 = vmatprep.subr.mxu0 0.0
    %3120 = vmatpush1.msra.mxu0 0.0
    %3121 = vmatprep.subr.mxu0 0.0
    %3122 = vmatpush1.msra.mxu0 0.0
    %3123 = vmatprep.mubr.f32.mxu0 0.0
    %3124 = vmatmul.mubr.f32.gmra.mrb[0].mxu0 %v3057
    %v3125 = vpop.f32.mrb[0].mxu0
    %v3126 = vadd.f32 %v2433, %v3125
    %v3127 = vpop.f32.mrb[0].mxu0
    %3128 = vdwg.mxu0
    %v3129 = vld [vmem:[#allocation2 + $0x6] sm:$0x3]
    %v3130 = vadd.f32 %v3129, %v3054
    %v3131 = vxor.u32 %v3130, 2147483648
    %v3132 = vmul.f32 %v3131, 1.442695
    %v3133 = vpow.pop %v3132
    %v3134 = vadd.f32 %v3133, 1.0
    %v3135 = vrcp.pop %v3134
    %v3136 = vmul.f32 1.0, %v3135
    %3138 = vrot.lane.b32.xlu0 %v3054, 64
    %v3139 = vpop.permute.xlu0 %3138
    %v3141 = vmul.f32 %v3136, %v3139
    %3143 = vrot.lane.b32.xlu0 %v3141, 64
    %v3144 = vpop.permute.xlu0 %3143
    %v3146 = vadd.f32 %v3129, %v3144
    %v3147 = vtanh.pop %v3146
    %v3148 = vsub.f32 1.0, %v3136
    %3150 = vrot.lane.b32.xlu0 %v3147, 96
    %v3151 = vpop.permute.xlu0 %3150
    %v3153 = vmul.f32 %v3148, %v3151
    %v3154 = vmul.f32 %v3136, %v2947
    %v3155 = vadd.f32 %v3153, %v3154
    %v3156 = vld [vmem:[#allocation3 + $0x8] sm:$0x3]
    %v3157 = vadd.f32 %v3156, %v3126
    %v3158 = vxor.u32 %v3157, 2147483648
    %v3159 = vmul.f32 %v3158, 1.442695
    %v3160 = vpow.pop %v3159
    %v3161 = vadd.f32 %v3160, 1.0
    %v3162 = vrcp.pop %v3161
    %v3163 = vmul.f32 1.0, %v3162
    %3165 = vrot.lane.b32.xlu0 %v3126, 64
    %v3166 = vpop.permute.xlu0 %3165
    %v3168 = vmul.f32 %v3163, %v3166
    %3170 = vrot.lane.b32.xlu0 %v3168, 64
    %v3171 = vpop.permute.xlu0 %3170
    %v3173 = vadd.f32 %v3156, %v3171
    %v3174 = vtanh.pop %v3173
    %v3175 = vsub.f32 1.0, %v3163
    %3177 = vrot.lane.b32.xlu0 %v3174, 96
    %v3178 = vpop.permute.xlu0 %3177
    %v3180 = vmul.f32 %v3175, %v3178
    %v3181 = vmul.f32 %v3163, %v2974
    %v3182 = vadd.f32 %v3180, %v3181
    %3184 = vrot.lane.b32.xlu0 %v3155, 96
    %v3185 = vpop.permute.xlu0 %3184
    %3187 = vst.msk [vmem:[#allocation4 + $0x6] sm:$0x3] %vm521, %v3185
    %3189 = vrot.lane.b32.xlu0 %v3182, 96
    %v3190 = vpop.permute.xlu0 %3189
    %3192 = vst.msk [vmem:[#allocation5 + $0x8] sm:$0x3] %vm521, %v3190
    %v3193 = vsel %vm313, %v3185, 0
    %3195 = vmatprep.subr.mxu0 0.0
    %3196 = vmatpush1.msra.mxu0 %v2341
    %3197 = vmatprep.subr.mxu0 0.0
    %3198 = vmatpush1.msra.mxu0 %v2342
    %3199 = vmatprep.subr.mxu0 0.0
    %3200 = vmatpush1.msra.mxu0 %v2343
    %3201 = vmatprep.subr.mxu0 0.0
    %3202 = vmatpush1.msra.mxu0 %v2344
    %3203 = vmatprep.subr.mxu0 0.0
    %3204 = vmatpush1.msra.mxu0 0.0
    %3205 = vmatprep.subr.mxu0 0.0
    %3206 = vmatpush1.msra.mxu0 0.0
    %3207 = vmatprep.subr.mxu0 0.0
    %3208 = vmatpush1.msra.mxu0 0.0
    %3209 = vmatprep.subr.mxu0 0.0
    %3210 = vmatpush1.msra.mxu0 0.0
    %3211 = vmatprep.subr.mxu0 0.0
    %3212 = vmatpush1.msra.mxu0 0.0
    %3213 = vmatprep.subr.mxu0 0.0
    %3214 = vmatpush1.msra.mxu0 0.0
    %3215 = vmatprep.subr.mxu0 0.0
    %3216 = vmatpush1.msra.mxu0 0.0
    %3217 = vmatprep.subr.mxu0 0.0
    %3218 = vmatpush1.msra.mxu0 0.0
    %3219 = vmatprep.subr.mxu0 0.0
    %3220 = vmatpush1.msra.mxu0 0.0
    %3221 = vmatprep.subr.mxu0 0.0
    %3222 = vmatpush1.msra.mxu0 0.0
    %3223 = vmatprep.subr.mxu0 0.0
    %3224 = vmatpush1.msra.mxu0 0.0
    %3225 = vmatprep.subr.mxu0 0.0
    %3226 = vmatpush1.msra.mxu0 0.0
    %3227 = vmatprep.subr.mxu0 0.0
    %3228 = vmatpush1.msra.mxu0 0.0
    %3229 = vmatprep.subr.mxu0 0.0
    %3230 = vmatpush1.msra.mxu0 0.0
    %3231 = vmatprep.subr.mxu0 0.0
    %3232 = vmatpush1.msra.mxu0 0.0
    %3233 = vmatprep.subr.mxu0 0.0
    %3234 = vmatpush1.msra.mxu0 0.0
    %3235 = vmatprep.subr.mxu0 0.0
    %3236 = vmatpush1.msra.mxu0 0.0
    %3237 = vmatprep.subr.mxu0 0.0
    %3238 = vmatpush1.msra.mxu0 0.0
    %3239 = vmatprep.subr.mxu0 0.0
    %3240 = vmatpush1.msra.mxu0 0.0
    %3241 = vmatprep.subr.mxu0 0.0
    %3242 = vmatpush1.msra.mxu0 0.0
    %3243 = vmatprep.subr.mxu0 0.0
    %3244 = vmatpush1.msra.mxu0 0.0
    %3245 = vmatprep.subr.mxu0 0.0
    %3246 = vmatpush1.msra.mxu0 0.0
    %3247 = vmatprep.subr.mxu0 0.0
    %3248 = vmatpush1.msra.mxu0 0.0
    %3249 = vmatprep.subr.mxu0 0.0
    %3250 = vmatpush1.msra.mxu0 0.0
    %3251 = vmatprep.subr.mxu0 0.0
    %3252 = vmatpush1.msra.mxu0 0.0
    %3253 = vmatprep.subr.mxu0 0.0
    %3254 = vmatpush1.msra.mxu0 0.0
    %3255 = vmatprep.subr.mxu0 0.0
    %3256 = vmatpush1.msra.mxu0 0.0
    %3257 = vmatprep.subr.mxu0 0.0
    %3258 = vmatpush1.msra.mxu0 0.0
    %3259 = vmatprep.mubr.f32.mxu0 0.0
    %3260 = vmatmul.mubr.f32.gmra.mrb[0].mxu0 %v3193
    %v3261 = vpop.f32.mrb[0].mxu0
    %v3262 = vadd.f32 %v2357, %v3261
    %v3263 = vpop.f32.mrb[0].mxu0
    %3264 = vdwg.mxu0
    %v3265 = vsel %vm313, %v3190, 0
    %3267 = vmatprep.subr.mxu0 0.0
    %3268 = vmatpush1.msra.mxu0 %v2347
    %3269 = vmatprep.subr.mxu0 0.0
    %3270 = vmatpush1.msra.mxu0 %v2348
    %3271 = vmatprep.subr.mxu0 0.0
    %3272 = vmatpush1.msra.mxu0 %v2349
    %3273 = vmatprep.subr.mxu0 0.0
    %3274 = vmatpush1.msra.mxu0 %v2350
    %3275 = vmatprep.subr.mxu0 0.0
    %3276 = vmatpush1.msra.mxu0 0.0
    %3277 = vmatprep.subr.mxu0 0.0
    %3278 = vmatpush1.msra.mxu0 0.0
    %3279 = vmatprep.subr.mxu0 0.0
    %3280 = vmatpush1.msra.mxu0 0.0
    %3281 = vmatprep.subr.mxu0 0.0
    %3282 = vmatpush1.msra.mxu0 0.0
    %3283 = vmatprep.subr.mxu0 0.0
    %3284 = vmatpush1.msra.mxu0 0.0
    %3285 = vmatprep.subr.mxu0 0.0
    %3286 = vmatpush1.msra.mxu0 0.0
    %3287 = vmatprep.subr.mxu0 0.0
    %3288 = vmatpush1.msra.mxu0 0.0
    %3289 = vmatprep.subr.mxu0 0.0
    %3290 = vmatpush1.msra.mxu0 0.0
    %3291 = vmatprep.subr.mxu0 0.0
    %3292 = vmatpush1.msra.mxu0 0.0
    %3293 = vmatprep.subr.mxu0 0.0
    %3294 = vmatpush1.msra.mxu0 0.0
    %3295 = vmatprep.subr.mxu0 0.0
    %3296 = vmatpush1.msra.mxu0 0.0
    %3297 = vmatprep.subr.mxu0 0.0
    %3298 = vmatpush1.msra.mxu0 0.0
    %3299 = vmatprep.subr.mxu0 0.0
    %3300 = vmatpush1.msra.mxu0 0.0
    %3301 = vmatprep.subr.mxu0 0.0
    %3302 = vmatpush1.msra.mxu0 0.0
    %3303 = vmatprep.subr.mxu0 0.0
    %3304 = vmatpush1.msra.mxu0 0.0
    %3305 = vmatprep.subr.mxu0 0.0
    %3306 = vmatpush1.msra.mxu0 0.0
    %3307 = vmatprep.subr.mxu0 0.0
    %3308 = vmatpush1.msra.mxu0 0.0
    %3309 = vmatprep.subr.mxu0 0.0
    %3310 = vmatpush1.msra.mxu0 0.0
    %3311 = vmatprep.subr.mxu0 0.0
    %3312 = vmatpush1.msra.mxu0 0.0
    %3313 = vmatprep.subr.mxu0 0.0
    %3314 = vmatpush1.msra.mxu0 0.0
    %3315 = vmatprep.subr.mxu0 0.0
    %3316 = vmatpush1.msra.mxu0 0.0
    %3317 = vmatprep.subr.mxu0 0.0
    %3318 = vmatpush1.msra.mxu0 0.0
    %3319 = vmatprep.subr.mxu0 0.0
    %3320 = vmatpush1.msra.mxu0 0.0
    %3321 = vmatprep.subr.mxu0 0.0
    %3322 = vmatpush1.msra.mxu0 0.0
    %3323 = vmatprep.subr.mxu0 0.0
    %3324 = vmatpush1.msra.mxu0 0.0
    %3325 = vmatprep.subr.mxu0 0.0
    %3326 = vmatpush1.msra.mxu0 0.0
    %3327 = vmatprep.subr.mxu0 0.0
    %3328 = vmatpush1.msra.mxu0 0.0
    %3329 = vmatprep.subr.mxu0 0.0
    %3330 = vmatpush1.msra.mxu0 0.0
    %3331 = vmatprep.mubr.f32.mxu0 0.0
    %3332 = vmatmul.mubr.f32.gmra.mrb[0].mxu0 %v3265
    %v3333 = vpop.f32.mrb[0].mxu0
    %v3334 = vadd.f32 %v2433, %v3333
    %v3335 = vpop.f32.mrb[0].mxu0
    %3336 = vdwg.mxu0
    %v3337 = vld [vmem:[#allocation2 + $0x8] sm:$0x3]
    %v3338 = vadd.f32 %v3337, %v3262
    %v3339 = vxor.u32 %v3338, 2147483648
    %v3340 = vmul.f32 %v3339, 1.442695
    %v3341 = vpow.pop %v3340
    %v3342 = vadd.f32 %v3341, 1.0
    %v3343 = vrcp.pop %v3342
    %v3344 = vmul.f32 1.0, %v3343
    %3346 = vrot.lane.b32.xlu0 %v3262, 64
    %v3347 = vpop.permute.xlu0 %3346
    %v3349 = vmul.f32 %v3344, %v3347
    %3351 = vrot.lane.b32.xlu0 %v3349, 64
    %v3352 = vpop.permute.xlu0 %3351
    %v3354 = vadd.f32 %v3337, %v3352
    %v3355 = vtanh.pop %v3354
    %v3356 = vsub.f32 1.0, %v3344
    %3358 = vrot.lane.b32.xlu0 %v3355, 96
    %v3359 = vpop.permute.xlu0 %3358
    %v3361 = vmul.f32 %v3356, %v3359
    %v3362 = vmul.f32 %v3344, %v3155
    %v3363 = vadd.f32 %v3361, %v3362
    %v3364 = vld [vmem:[#allocation3 + $0x6] sm:$0x3]
    %v3365 = vadd.f32 %v3364, %v3334
    %v3366 = vxor.u32 %v3365, 2147483648
    %v3367 = vmul.f32 %v3366, 1.442695
    %v3368 = vpow.pop %v3367
    %v3369 = vadd.f32 %v3368, 1.0
    %v3370 = vrcp.pop %v3369
    %v3371 = vmul.f32 1.0, %v3370
    %3373 = vrot.lane.b32.xlu0 %v3334, 64
    %v3374 = vpop.permute.xlu0 %3373
    %v3376 = vmul.f32 %v3371, %v3374
    %3378 = vrot.lane.b32.xlu0 %v3376, 64
    %v3379 = vpop.permute.xlu0 %3378
    %v3381 = vadd.f32 %v3364, %v3379
    %v3382 = vtanh.pop %v3381
    %v3383 = vsub.f32 1.0, %v3371
    %3385 = vrot.lane.b32.xlu0 %v3382, 96
    %v3386 = vpop.permute.xlu0 %3385
    %v3388 = vmul.f32 %v3383, %v3386
    %v3389 = vmul.f32 %v3371, %v3182
    %v3390 = vadd.f32 %v3388, %v3389
    %3392 = vrot.lane.b32.xlu0 %v3363, 96
    %v3393 = vpop.permute.xlu0 %3392
    %3395 = vst.msk [vmem:[#allocation4 + $0x8] sm:$0x3] %vm521, %v3393
    %3397 = vrot.lane.b32.xlu0 %v3390, 96
    %v3398 = vpop.permute.xlu0 %3397
    %3400 = vst.msk [vmem:[#allocation5 + $0x6] sm:$0x3] %vm521, %v3398
    %v3401 = vsel %vm313, %v3393, 0
    %3403 = vmatprep.subr.mxu0 0.0
    %3404 = vmatpush1.msra.mxu0 %v2341
    %3405 = vmatprep.subr.mxu0 0.0
    %3406 = vmatpush1.msra.mxu0 %v2342
    %3407 = vmatprep.subr.mxu0 0.0
    %3408 = vmatpush1.msra.mxu0 %v2343
    %3409 = vmatprep.subr.mxu0 0.0
    %3410 = vmatpush1.msra.mxu0 %v2344
    %3411 = vmatprep.subr.mxu0 0.0
    %3412 = vmatpush1.msra.mxu0 0.0
    %3413 = vmatprep.subr.mxu0 0.0
    %3414 = vmatpush1.msra.mxu0 0.0
    %3415 = vmatprep.subr.mxu0 0.0
    %3416 = vmatpush1.msra.mxu0 0.0
    %3417 = vmatprep.subr.mxu0 0.0
    %3418 = vmatpush1.msra.mxu0 0.0
    %3419 = vmatprep.subr.mxu0 0.0
    %3420 = vmatpush1.msra.mxu0 0.0
    %3421 = vmatprep.subr.mxu0 0.0
    %3422 = vmatpush1.msra.mxu0 0.0
    %3423 = vmatprep.subr.mxu0 0.0
    %3424 = vmatpush1.msra.mxu0 0.0
    %3425 = vmatprep.subr.mxu0 0.0
    %3426 = vmatpush1.msra.mxu0 0.0
    %3427 = vmatprep.subr.mxu0 0.0
    %3428 = vmatpush1.msra.mxu0 0.0
    %3429 = vmatprep.subr.mxu0 0.0
    %3430 = vmatpush1.msra.mxu0 0.0
    %3431 = vmatprep.subr.mxu0 0.0
    %3432 = vmatpush1.msra.mxu0 0.0
    %3433 = vmatprep.subr.mxu0 0.0
    %3434 = vmatpush1.msra.mxu0 0.0
    %3435 = vmatprep.subr.mxu0 0.0
    %3436 = vmatpush1.msra.mxu0 0.0
    %3437 = vmatprep.subr.mxu0 0.0
    %3438 = vmatpush1.msra.mxu0 0.0
    %3439 = vmatprep.subr.mxu0 0.0
    %3440 = vmatpush1.msra.mxu0 0.0
    %3441 = vmatprep.subr.mxu0 0.0
    %3442 = vmatpush1.msra.mxu0 0.0
    %3443 = vmatprep.subr.mxu0 0.0
    %3444 = vmatpush1.msra.mxu0 0.0
    %3445 = vmatprep.subr.mxu0 0.0
    %3446 = vmatpush1.msra.mxu0 0.0
    %3447 = vmatprep.subr.mxu0 0.0
    %3448 = vmatpush1.msra.mxu0 0.0
    %3449 = vmatprep.subr.mxu0 0.0
    %3450 = vmatpush1.msra.mxu0 0.0
    %3451 = vmatprep.subr.mxu0 0.0
    %3452 = vmatpush1.msra.mxu0 0.0
    %3453 = vmatprep.subr.mxu0 0.0
    %3454 = vmatpush1.msra.mxu0 0.0
    %3455 = vmatprep.subr.mxu0 0.0
    %3456 = vmatpush1.msra.mxu0 0.0
    %3457 = vmatprep.subr.mxu0 0.0
    %3458 = vmatpush1.msra.mxu0 0.0
    %3459 = vmatprep.subr.mxu0 0.0
    %3460 = vmatpush1.msra.mxu0 0.0
    %3461 = vmatprep.subr.mxu0 0.0
    %3462 = vmatpush1.msra.mxu0 0.0
    %3463 = vmatprep.subr.mxu0 0.0
    %3464 = vmatpush1.msra.mxu0 0.0
    %3465 = vmatprep.subr.mxu0 0.0
    %3466 = vmatpush1.msra.mxu0 0.0
    %3467 = vmatprep.mubr.f32.mxu0 0.0
    %3468 = vmatmul.mubr.f32.gmra.mrb[0].mxu0 %v3401
    %v3469 = vpop.f32.mrb[0].mxu0
    %v3470 = vadd.f32 %v2357, %v3469
    %v3471 = vpop.f32.mrb[0].mxu0
    %3472 = vdwg.mxu0
    %v3473 = vsel %vm313, %v3398, 0
    %3475 = vmatprep.subr.mxu0 0.0
    %3476 = vmatpush1.msra.mxu0 %v2347
    %3477 = vmatprep.subr.mxu0 0.0
    %3478 = vmatpush1.msra.mxu0 %v2348
    %3479 = vmatprep.subr.mxu0 0.0
    %3480 = vmatpush1.msra.mxu0 %v2349
    %3481 = vmatprep.subr.mxu0 0.0
    %3482 = vmatpush1.msra.mxu0 %v2350
    %3483 = vmatprep.subr.mxu0 0.0
    %3484 = vmatpush1.msra.mxu0 0.0
    %3485 = vmatprep.subr.mxu0 0.0
    %3486 = vmatpush1.msra.mxu0 0.0
    %3487 = vmatprep.subr.mxu0 0.0
    %3488 = vmatpush1.msra.mxu0 0.0
    %3489 = vmatprep.subr.mxu0 0.0
    %3490 = vmatpush1.msra.mxu0 0.0
    %3491 = vmatprep.subr.mxu0 0.0
    %3492 = vmatpush1.msra.mxu0 0.0
    %3493 = vmatprep.subr.mxu0 0.0
    %3494 = vmatpush1.msra.mxu0 0.0
    %3495 = vmatprep.subr.mxu0 0.0
    %3496 = vmatpush1.msra.mxu0 0.0
    %3497 = vmatprep.subr.mxu0 0.0
    %3498 = vmatpush1.msra.mxu0 0.0
    %3499 = vmatprep.subr.mxu0 0.0
    %3500 = vmatpush1.msra.mxu0 0.0
    %3501 = vmatprep.subr.mxu0 0.0
    %3502 = vmatpush1.msra.mxu0 0.0
    %3503 = vmatprep.subr.mxu0 0.0
    %3504 = vmatpush1.msra.mxu0 0.0
    %3505 = vmatprep.subr.mxu0 0.0
    %3506 = vmatpush1.msra.mxu0 0.0
    %3507 = vmatprep.subr.mxu0 0.0
    %3508 = vmatpush1.msra.mxu0 0.0
    %3509 = vmatprep.subr.mxu0 0.0
    %3510 = vmatpush1.msra.mxu0 0.0
    %3511 = vmatprep.subr.mxu0 0.0
    %3512 = vmatpush1.msra.mxu0 0.0
    %3513 = vmatprep.subr.mxu0 0.0
    %3514 = vmatpush1.msra.mxu0 0.0
    %3515 = vmatprep.subr.mxu0 0.0
    %3516 = vmatpush1.msra.mxu0 0.0
    %3517 = vmatprep.subr.mxu0 0.0
    %3518 = vmatpush1.msra.mxu0 0.0
    %3519 = vmatprep.subr.mxu0 0.0
    %3520 = vmatpush1.msra.mxu0 0.0
    %3521 = vmatprep.subr.mxu0 0.0
    %3522 = vmatpush1.msra.mxu0 0.0
    %3523 = vmatprep.subr.mxu0 0.0
    %3524 = vmatpush1.msra.mxu0 0.0
    %3525 = vmatprep.subr.mxu0 0.0
    %3526 = vmatpush1.msra.mxu0 0.0
    %3527 = vmatprep.subr.mxu0 0.0
    %3528 = vmatpush1.msra.mxu0 0.0
    %3529 = vmatprep.subr.mxu0 0.0
    %3530 = vmatpush1.msra.mxu0 0.0
    %3531 = vmatprep.subr.mxu0 0.0
    %3532 = vmatpush1.msra.mxu0 0.0
    %3533 = vmatprep.subr.mxu0 0.0
    %3534 = vmatpush1.msra.mxu0 0.0
    %3535 = vmatprep.subr.mxu0 0.0
    %3536 = vmatpush1.msra.mxu0 0.0
    %3537 = vmatprep.subr.mxu0 0.0
    %3538 = vmatpush1.msra.mxu0 0.0
    %3539 = vmatprep.mubr.f32.mxu0 0.0
    %3540 = vmatmul.mubr.f32.gmra.mrb[0].mxu0 %v3473
    %v3541 = vpop.f32.mrb[0].mxu0
    %v3542 = vadd.f32 %v2433, %v3541
    %v3543 = vpop.f32.mrb[0].mxu0
    %3544 = vdwg.mxu0
    %v3545 = vld [vmem:[#allocation2 + $0xa] sm:$0x3]
    %v3546 = vadd.f32 %v3545, %v3470
    %v3547 = vxor.u32 %v3546, 2147483648
    %v3548 = vmul.f32 %v3547, 1.442695
    %v3549 = vpow.pop %v3548
    %v3550 = vadd.f32 %v3549, 1.0
    %v3551 = vrcp.pop %v3550
    %v3552 = vmul.f32 1.0, %v3551
    %3554 = vrot.lane.b32.xlu0 %v3470, 64
    %v3555 = vpop.permute.xlu0 %3554
    %v3557 = vmul.f32 %v3552, %v3555
    %3559 = vrot.lane.b32.xlu0 %v3557, 64
    %v3560 = vpop.permute.xlu0 %3559
    %v3562 = vadd.f32 %v3545, %v3560
    %v3563 = vtanh.pop %v3562
    %v3564 = vsub.f32 1.0, %v3552
    %3566 = vrot.lane.b32.xlu0 %v3563, 96
    %v3567 = vpop.permute.xlu0 %3566
    %v3569 = vmul.f32 %v3564, %v3567
    %v3570 = vmul.f32 %v3552, %v3363
    %v3571 = vadd.f32 %v3569, %v3570
    %v3572 = vld [vmem:[#allocation3 + $0x4] sm:$0x3]
    %v3573 = vadd.f32 %v3572, %v3542
    %v3574 = vxor.u32 %v3573, 2147483648
    %v3575 = vmul.f32 %v3574, 1.442695
    %v3576 = vpow.pop %v3575
    %v3577 = vadd.f32 %v3576, 1.0
    %v3578 = vrcp.pop %v3577
    %v3579 = vmul.f32 1.0, %v3578
    %3581 = vrot.lane.b32.xlu0 %v3542, 64
    %v3582 = vpop.permute.xlu0 %3581
    %v3584 = vmul.f32 %v3579, %v3582
    %3586 = vrot.lane.b32.xlu0 %v3584, 64
    %v3587 = vpop.permute.xlu0 %3586
    %v3589 = vadd.f32 %v3572, %v3587
    %v3590 = vtanh.pop %v3589
    %v3591 = vsub.f32 1.0, %v3579
    %3593 = vrot.lane.b32.xlu0 %v3590, 96
    %v3594 = vpop.permute.xlu0 %3593
    %v3596 = vmul.f32 %v3591, %v3594
    %v3597 = vmul.f32 %v3579, %v3390
    %v3598 = vadd.f32 %v3596, %v3597
    %3600 = vrot.lane.b32.xlu0 %v3571, 96
    %v3601 = vpop.permute.xlu0 %3600
    %3603 = vst.msk [vmem:[#allocation4 + $0xa] sm:$0x3] %vm521, %v3601
    %3605 = vrot.lane.b32.xlu0 %v3598, 96
    %v3606 = vpop.permute.xlu0 %3605
    %3608 = vst.msk [vmem:[#allocation5 + $0x4] sm:$0x3] %vm521, %v3606
    %v3609 = vsel %vm313, %v3601, 0
    %3611 = vmatprep.subr.mxu0 0.0
    %3612 = vmatpush1.msra.mxu0 %v2341
    %3613 = vmatprep.subr.mxu0 0.0
    %3614 = vmatpush1.msra.mxu0 %v2342
    %3615 = vmatprep.subr.mxu0 0.0
    %3616 = vmatpush1.msra.mxu0 %v2343
    %3617 = vmatprep.subr.mxu0 0.0
    %3618 = vmatpush1.msra.mxu0 %v2344
    %3619 = vmatprep.subr.mxu0 0.0
    %3620 = vmatpush1.msra.mxu0 0.0
    %3621 = vmatprep.subr.mxu0 0.0
    %3622 = vmatpush1.msra.mxu0 0.0
    %3623 = vmatprep.subr.mxu0 0.0
    %3624 = vmatpush1.msra.mxu0 0.0
    %3625 = vmatprep.subr.mxu0 0.0
    %3626 = vmatpush1.msra.mxu0 0.0
    %3627 = vmatprep.subr.mxu0 0.0
    %3628 = vmatpush1.msra.mxu0 0.0
    %3629 = vmatprep.subr.mxu0 0.0
    %3630 = vmatpush1.msra.mxu0 0.0
    %3631 = vmatprep.subr.mxu0 0.0
    %3632 = vmatpush1.msra.mxu0 0.0
    %3633 = vmatprep.subr.mxu0 0.0
    %3634 = vmatpush1.msra.mxu0 0.0
    %3635 = vmatprep.subr.mxu0 0.0
    %3636 = vmatpush1.msra.mxu0 0.0
    %3637 = vmatprep.subr.mxu0 0.0
    %3638 = vmatpush1.msra.mxu0 0.0
    %3639 = vmatprep.subr.mxu0 0.0
    %3640 = vmatpush1.msra.mxu0 0.0
    %3641 = vmatprep.subr.mxu0 0.0
    %3642 = vmatpush1.msra.mxu0 0.0
    %3643 = vmatprep.subr.mxu0 0.0
    %3644 = vmatpush1.msra.mxu0 0.0
    %3645 = vmatprep.subr.mxu0 0.0
    %3646 = vmatpush1.msra.mxu0 0.0
    %3647 = vmatprep.subr.mxu0 0.0
    %3648 = vmatpush1.msra.mxu0 0.0
    %3649 = vmatprep.subr.mxu0 0.0
    %3650 = vmatpush1.msra.mxu0 0.0
    %3651 = vmatprep.subr.mxu0 0.0
    %3652 = vmatpush1.msra.mxu0 0.0
    %3653 = vmatprep.subr.mxu0 0.0
    %3654 = vmatpush1.msra.mxu0 0.0
    %3655 = vmatprep.subr.mxu0 0.0
    %3656 = vmatpush1.msra.mxu0 0.0
    %3657 = vmatprep.subr.mxu0 0.0
    %3658 = vmatpush1.msra.mxu0 0.0
    %3659 = vmatprep.subr.mxu0 0.0
    %3660 = vmatpush1.msra.mxu0 0.0
    %3661 = vmatprep.subr.mxu0 0.0
    %3662 = vmatpush1.msra.mxu0 0.0
    %3663 = vmatprep.subr.mxu0 0.0
    %3664 = vmatpush1.msra.mxu0 0.0
    %3665 = vmatprep.subr.mxu0 0.0
    %3666 = vmatpush1.msra.mxu0 0.0
    %3667 = vmatprep.subr.mxu0 0.0
    %3668 = vmatpush1.msra.mxu0 0.0
    %3669 = vmatprep.subr.mxu0 0.0
    %3670 = vmatpush1.msra.mxu0 0.0
    %3671 = vmatprep.subr.mxu0 0.0
    %3672 = vmatpush1.msra.mxu0 0.0
    %3673 = vmatprep.subr.mxu0 0.0
    %3674 = vmatpush1.msra.mxu0 0.0
    %3675 = vmatprep.mubr.f32.mxu0 0.0
    %3676 = vmatmul.mubr.f32.gmra.mrb[0].mxu0 %v3609
    %v3677 = vpop.f32.mrb[0].mxu0
    %v3678 = vadd.f32 %v2357, %v3677
    %v3679 = vpop.f32.mrb[0].mxu0
    %3680 = vdwg.mxu0
    %v3681 = vsel %vm313, %v3606, 0
    %3683 = vmatprep.subr.mxu0 0.0
    %3684 = vmatpush1.msra.mxu0 %v2347
    %3685 = vmatprep.subr.mxu0 0.0
    %3686 = vmatpush1.msra.mxu0 %v2348
    %3687 = vmatprep.subr.mxu0 0.0
    %3688 = vmatpush1.msra.mxu0 %v2349
    %3689 = vmatprep.subr.mxu0 0.0
    %3690 = vmatpush1.msra.mxu0 %v2350
    %3691 = vmatprep.subr.mxu0 0.0
    %3692 = vmatpush1.msra.mxu0 0.0
    %3693 = vmatprep.subr.mxu0 0.0
    %3694 = vmatpush1.msra.mxu0 0.0
    %3695 = vmatprep.subr.mxu0 0.0
    %3696 = vmatpush1.msra.mxu0 0.0
    %3697 = vmatprep.subr.mxu0 0.0
    %3698 = vmatpush1.msra.mxu0 0.0
    %3699 = vmatprep.subr.mxu0 0.0
    %3700 = vmatpush1.msra.mxu0 0.0
    %3701 = vmatprep.subr.mxu0 0.0
    %3702 = vmatpush1.msra.mxu0 0.0
    %3703 = vmatprep.subr.mxu0 0.0
    %3704 = vmatpush1.msra.mxu0 0.0
    %3705 = vmatprep.subr.mxu0 0.0
    %3706 = vmatpush1.msra.mxu0 0.0
    %3707 = vmatprep.subr.mxu0 0.0
    %3708 = vmatpush1.msra.mxu0 0.0
    %3709 = vmatprep.subr.mxu0 0.0
    %3710 = vmatpush1.msra.mxu0 0.0
    %3711 = vmatprep.subr.mxu0 0.0
    %3712 = vmatpush1.msra.mxu0 0.0
    %3713 = vmatprep.subr.mxu0 0.0
    %3714 = vmatpush1.msra.mxu0 0.0
    %3715 = vmatprep.subr.mxu0 0.0
    %3716 = vmatpush1.msra.mxu0 0.0
    %3717 = vmatprep.subr.mxu0 0.0
    %3718 = vmatpush1.msra.mxu0 0.0
    %3719 = vmatprep.subr.mxu0 0.0
    %3720 = vmatpush1.msra.mxu0 0.0
    %3721 = vmatprep.subr.mxu0 0.0
    %3722 = vmatpush1.msra.mxu0 0.0
    %3723 = vmatprep.subr.mxu0 0.0
    %3724 = vmatpush1.msra.mxu0 0.0
    %3725 = vmatprep.subr.mxu0 0.0
    %3726 = vmatpush1.msra.mxu0 0.0
    %3727 = vmatprep.subr.mxu0 0.0
    %3728 = vmatpush1.msra.mxu0 0.0
    %3729 = vmatprep.subr.mxu0 0.0
    %3730 = vmatpush1.msra.mxu0 0.0
    %3731 = vmatprep.subr.mxu0 0.0
    %3732 = vmatpush1.msra.mxu0 0.0
    %3733 = vmatprep.subr.mxu0 0.0
    %3734 = vmatpush1.msra.mxu0 0.0
    %3735 = vmatprep.subr.mxu0 0.0
    %3736 = vmatpush1.msra.mxu0 0.0
    %3737 = vmatprep.subr.mxu0 0.0
    %3738 = vmatpush1.msra.mxu0 0.0
    %3739 = vmatprep.subr.mxu0 0.0
    %3740 = vmatpush1.msra.mxu0 0.0
    %3741 = vmatprep.subr.mxu0 0.0
    %3742 = vmatpush1.msra.mxu0 0.0
    %3743 = vmatprep.subr.mxu0 0.0
    %3744 = vmatpush1.msra.mxu0 0.0
    %3745 = vmatprep.subr.mxu0 0.0
    %3746 = vmatpush1.msra.mxu0 0.0
    %3747 = vmatprep.mubr.f32.mxu0 0.0
    %3748 = vmatmul.mubr.f32.gmra.mrb[0].mxu0 %v3681
    %v3749 = vpop.f32.mrb[0].mxu0
    %v3750 = vadd.f32 %v2433, %v3749
    %v3751 = vpop.f32.mrb[0].mxu0
    %3752 = vdwg.mxu0
    %v3753 = vld [vmem:[#allocation2 + $0xc] sm:$0x3]
    %v3754 = vadd.f32 %v3753, %v3678
    %v3755 = vxor.u32 %v3754, 2147483648
    %v3756 = vmul.f32 %v3755, 1.442695
    %v3757 = vpow.pop %v3756
    %v3758 = vadd.f32 %v3757, 1.0
    %v3759 = vrcp.pop %v3758
    %v3760 = vmul.f32 1.0, %v3759
    %3762 = vrot.lane.b32.xlu0 %v3678, 64
    %v3763 = vpop.permute.xlu0 %3762
    %v3765 = vmul.f32 %v3760, %v3763
    %3767 = vrot.lane.b32.xlu0 %v3765, 64
    %v3768 = vpop.permute.xlu0 %3767
    %v3770 = vadd.f32 %v3753, %v3768
    %v3771 = vtanh.pop %v3770
    %v3772 = vsub.f32 1.0, %v3760
    %3774 = vrot.lane.b32.xlu0 %v3771, 96
    %v3775 = vpop.permute.xlu0 %3774
    %v3777 = vmul.f32 %v3772, %v3775
    %v3778 = vmul.f32 %v3760, %v3571
    %v3779 = vadd.f32 %v3777, %v3778
    %v3780 = vld [vmem:[#allocation3 + $0x2] sm:$0x3]
    %v3781 = vadd.f32 %v3780, %v3750
    %v3782 = vxor.u32 %v3781, 2147483648
    %v3783 = vmul.f32 %v3782, 1.442695
    %v3784 = vpow.pop %v3783
    %v3785 = vadd.f32 %v3784, 1.0
    %v3786 = vrcp.pop %v3785
    %v3787 = vmul.f32 1.0, %v3786
    %3789 = vrot.lane.b32.xlu0 %v3750, 64
    %v3790 = vpop.permute.xlu0 %3789
    %v3792 = vmul.f32 %v3787, %v3790
    %3794 = vrot.lane.b32.xlu0 %v3792, 64
    %v3795 = vpop.permute.xlu0 %3794
    %v3797 = vadd.f32 %v3780, %v3795
    %v3798 = vtanh.pop %v3797
    %v3799 = vsub.f32 1.0, %v3787
    %3801 = vrot.lane.b32.xlu0 %v3798, 96
    %v3802 = vpop.permute.xlu0 %3801
    %v3804 = vmul.f32 %v3799, %v3802
    %v3805 = vmul.f32 %v3787, %v3598
    %v3806 = vadd.f32 %v3804, %v3805
    %3808 = vrot.lane.b32.xlu0 %v3779, 96
    %v3809 = vpop.permute.xlu0 %3808
    %3811 = vst.msk [vmem:[#allocation4 + $0xc] sm:$0x3] %vm521, %v3809
    %3813 = vrot.lane.b32.xlu0 %v3806, 96
    %v3814 = vpop.permute.xlu0 %3813
    %3816 = vst.msk [vmem:[#allocation5 + $0x2] sm:$0x3] %vm521, %v3814
    %v3817 = vsel %vm313, %v3809, 0
    %3819 = vmatprep.subr.mxu0 0.0
    %3820 = vmatpush1.msra.mxu0 %v2341
    %3821 = vmatprep.subr.mxu0 0.0
    %3822 = vmatpush1.msra.mxu0 %v2342
    %3823 = vmatprep.subr.mxu0 0.0
    %3824 = vmatpush1.msra.mxu0 %v2343
    %3825 = vmatprep.subr.mxu0 0.0
    %3826 = vmatpush1.msra.mxu0 %v2344
    %3827 = vmatprep.subr.mxu0 0.0
    %3828 = vmatpush1.msra.mxu0 0.0
    %3829 = vmatprep.subr.mxu0 0.0
    %3830 = vmatpush1.msra.mxu0 0.0
    %3831 = vmatprep.subr.mxu0 0.0
    %3832 = vmatpush1.msra.mxu0 0.0
    %3833 = vmatprep.subr.mxu0 0.0
    %3834 = vmatpush1.msra.mxu0 0.0
    %3835 = vmatprep.subr.mxu0 0.0
    %3836 = vmatpush1.msra.mxu0 0.0
    %3837 = vmatprep.subr.mxu0 0.0
    %3838 = vmatpush1.msra.mxu0 0.0
    %3839 = vmatprep.subr.mxu0 0.0
    %3840 = vmatpush1.msra.mxu0 0.0
    %3841 = vmatprep.subr.mxu0 0.0
    %3842 = vmatpush1.msra.mxu0 0.0
    %3843 = vmatprep.subr.mxu0 0.0
    %3844 = vmatpush1.msra.mxu0 0.0
    %3845 = vmatprep.subr.mxu0 0.0
    %3846 = vmatpush1.msra.mxu0 0.0
    %3847 = vmatprep.subr.mxu0 0.0
    %3848 = vmatpush1.msra.mxu0 0.0
    %3849 = vmatprep.subr.mxu0 0.0
    %3850 = vmatpush1.msra.mxu0 0.0
    %3851 = vmatprep.subr.mxu0 0.0
    %3852 = vmatpush1.msra.mxu0 0.0
    %3853 = vmatprep.subr.mxu0 0.0
    %3854 = vmatpush1.msra.mxu0 0.0
    %3855 = vmatprep.subr.mxu0 0.0
    %3856 = vmatpush1.msra.mxu0 0.0
    %3857 = vmatprep.subr.mxu0 0.0
    %3858 = vmatpush1.msra.mxu0 0.0
    %3859 = vmatprep.subr.mxu0 0.0
    %3860 = vmatpush1.msra.mxu0 0.0
    %3861 = vmatprep.subr.mxu0 0.0
    %3862 = vmatpush1.msra.mxu0 0.0
    %3863 = vmatprep.subr.mxu0 0.0
    %3864 = vmatpush1.msra.mxu0 0.0
    %3865 = vmatprep.subr.mxu0 0.0
    %3866 = vmatpush1.msra.mxu0 0.0
    %3867 = vmatprep.subr.mxu0 0.0
    %3868 = vmatpush1.msra.mxu0 0.0
    %3869 = vmatprep.subr.mxu0 0.0
    %3870 = vmatpush1.msra.mxu0 0.0
    %3871 = vmatprep.subr.mxu0 0.0
    %3872 = vmatpush1.msra.mxu0 0.0
    %3873 = vmatprep.subr.mxu0 0.0
    %3874 = vmatpush1.msra.mxu0 0.0
    %3875 = vmatprep.subr.mxu0 0.0
    %3876 = vmatpush1.msra.mxu0 0.0
    %3877 = vmatprep.subr.mxu0 0.0
    %3878 = vmatpush1.msra.mxu0 0.0
    %3879 = vmatprep.subr.mxu0 0.0
    %3880 = vmatpush1.msra.mxu0 0.0
    %3881 = vmatprep.subr.mxu0 0.0
    %3882 = vmatpush1.msra.mxu0 0.0
    %3883 = vmatprep.mubr.f32.mxu0 0.0
    %3884 = vmatmul.mubr.f32.gmra.mrb[0].mxu0 %v3817
    %v3885 = vpop.f32.mrb[0].mxu0
    %v3886 = vadd.f32 %v2357, %v3885
    %v3887 = vpop.f32.mrb[0].mxu0
    %3888 = vdwg.mxu0
    %v3889 = vsel %vm313, %v3814, 0
    %3891 = vmatprep.subr.mxu0 0.0
    %3892 = vmatpush1.msra.mxu0 %v2347
    %3893 = vmatprep.subr.mxu0 0.0
    %3894 = vmatpush1.msra.mxu0 %v2348
    %3895 = vmatprep.subr.mxu0 0.0
    %3896 = vmatpush1.msra.mxu0 %v2349
    %3897 = vmatprep.subr.mxu0 0.0
    %3898 = vmatpush1.msra.mxu0 %v2350
    %3899 = vmatprep.subr.mxu0 0.0
    %3900 = vmatpush1.msra.mxu0 0.0
    %3901 = vmatprep.subr.mxu0 0.0
    %3902 = vmatpush1.msra.mxu0 0.0
    %3903 = vmatprep.subr.mxu0 0.0
    %3904 = vmatpush1.msra.mxu0 0.0
    %3905 = vmatprep.subr.mxu0 0.0
    %3906 = vmatpush1.msra.mxu0 0.0
    %3907 = vmatprep.subr.mxu0 0.0
    %3908 = vmatpush1.msra.mxu0 0.0
    %3909 = vmatprep.subr.mxu0 0.0
    %3910 = vmatpush1.msra.mxu0 0.0
    %3911 = vmatprep.subr.mxu0 0.0
    %3912 = vmatpush1.msra.mxu0 0.0
    %3913 = vmatprep.subr.mxu0 0.0
    %3914 = vmatpush1.msra.mxu0 0.0
    %3915 = vmatprep.subr.mxu0 0.0
    %3916 = vmatpush1.msra.mxu0 0.0
    %3917 = vmatprep.subr.mxu0 0.0
    %3918 = vmatpush1.msra.mxu0 0.0
    %3919 = vmatprep.subr.mxu0 0.0
    %3920 = vmatpush1.msra.mxu0 0.0
    %3921 = vmatprep.subr.mxu0 0.0
    %3922 = vmatpush1.msra.mxu0 0.0
    %3923 = vmatprep.subr.mxu0 0.0
    %3924 = vmatpush1.msra.mxu0 0.0
    %3925 = vmatprep.subr.mxu0 0.0
    %3926 = vmatpush1.msra.mxu0 0.0
    %3927 = vmatprep.subr.mxu0 0.0
    %3928 = vmatpush1.msra.mxu0 0.0
    %3929 = vmatprep.subr.mxu0 0.0
    %3930 = vmatpush1.msra.mxu0 0.0
    %3931 = vmatprep.subr.mxu0 0.0
    %3932 = vmatpush1.msra.mxu0 0.0
    %3933 = vmatprep.subr.mxu0 0.0
    %3934 = vmatpush1.msra.mxu0 0.0
    %3935 = vmatprep.subr.mxu0 0.0
    %3936 = vmatpush1.msra.mxu0 0.0
    %3937 = vmatprep.subr.mxu0 0.0
    %3938 = vmatpush1.msra.mxu0 0.0
    %3939 = vmatprep.subr.mxu0 0.0
    %3940 = vmatpush1.msra.mxu0 0.0
    %3941 = vmatprep.subr.mxu0 0.0
    %3942 = vmatpush1.msra.mxu0 0.0
    %3943 = vmatprep.subr.mxu0 0.0
    %3944 = vmatpush1.msra.mxu0 0.0
    %3945 = vmatprep.subr.mxu0 0.0
    %3946 = vmatpush1.msra.mxu0 0.0
    %3947 = vmatprep.subr.mxu0 0.0
    %3948 = vmatpush1.msra.mxu0 0.0
    %3949 = vmatprep.subr.mxu0 0.0
    %3950 = vmatpush1.msra.mxu0 0.0
    %3951 = vmatprep.subr.mxu0 0.0
    %3952 = vmatpush1.msra.mxu0 0.0
    %3953 = vmatprep.subr.mxu0 0.0
    %3954 = vmatpush1.msra.mxu0 0.0
    %3955 = vmatprep.mubr.f32.mxu0 0.0
    %3956 = vmatmul.mubr.f32.gmra.mrb[0].mxu0 %v3889
    %v3957 = vpop.f32.mrb[0].mxu0
    %v3958 = vadd.f32 %v2433, %v3957
    %v3959 = vpop.f32.mrb[0].mxu0
    %3960 = vdwg.mxu0
    %v3961 = vld [vmem:[#allocation2 + $0xe] sm:$0x3]
    %v3962 = vadd.f32 %v3961, %v3886
    %v3963 = vxor.u32 %v3962, 2147483648
    %v3964 = vmul.f32 %v3963, 1.442695
    %v3965 = vpow.pop %v3964
    %v3966 = vadd.f32 %v3965, 1.0
    %v3967 = vrcp.pop %v3966
    %v3968 = vmul.f32 1.0, %v3967
    %3970 = vrot.lane.b32.xlu0 %v3886, 64
    %v3971 = vpop.permute.xlu0 %3970
    %v3973 = vmul.f32 %v3968, %v3971
    %3975 = vrot.lane.b32.xlu0 %v3973, 64
    %v3976 = vpop.permute.xlu0 %3975
    %v3978 = vadd.f32 %v3961, %v3976
    %v3979 = vtanh.pop %v3978
    %v3980 = vsub.f32 1.0, %v3968
    %3982 = vrot.lane.b32.xlu0 %v3979, 96
    %v3983 = vpop.permute.xlu0 %3982
    %v3985 = vmul.f32 %v3980, %v3983
    %v3986 = vmul.f32 %v3968, %v3779
    %v3987 = vadd.f32 %v3985, %v3986
    %v3988 = vld [vmem:[#allocation3] sm:$0x3]
    %v3989 = vadd.f32 %v3988, %v3958
    %v3990 = vxor.u32 %v3989, 2147483648
    %v3991 = vmul.f32 %v3990, 1.442695
    %v3992 = vpow.pop %v3991
    %v3993 = vadd.f32 %v3992, 1.0
    %v3994 = vrcp.pop %v3993
    %v3995 = vmul.f32 1.0, %v3994
    %3997 = vrot.lane.b32.xlu0 %v3958, 64
    %v3998 = vpop.permute.xlu0 %3997
    %v4000 = vmul.f32 %v3995, %v3998
    %4002 = vrot.lane.b32.xlu0 %v4000, 64
    %v4003 = vpop.permute.xlu0 %4002
    %v4005 = vadd.f32 %v3988, %v4003
    %v4006 = vtanh.pop %v4005
    %v4007 = vsub.f32 1.0, %v3995
    %4009 = vrot.lane.b32.xlu0 %v4006, 96
    %v4010 = vpop.permute.xlu0 %4009
    %v4012 = vmul.f32 %v4007, %v4010
    %v4013 = vmul.f32 %v3995, %v3806
    %v4014 = vadd.f32 %v4012, %v4013
    %4016 = vrot.lane.b32.xlu0 %v3987, 96
    %v4017 = vpop.permute.xlu0 %4016
    %4019 = vst.msk [vmem:[#allocation4 + $0xe] sm:$0x3] %vm521, %v4017
    %4021 = vrot.lane.b32.xlu0 %v4014, 96
    %v4022 = vpop.permute.xlu0 %4021
    %4024 = vst.msk [vmem:[#allocation5] sm:$0x3] %vm521, %v4022
    %v4025 = vld [vmem:[#allocation4] sm:$0xff]
    %v4026 = vld [vmem:[#allocation4 + $0x8] sm:$0xff]
    %v4027 = vld [vmem:[%s10] sm:$0xff]
    %v4028 = vld [vmem:[%s10 + $0x8] sm:$0xff]
    %v4029 = vld [vmem:[%s10 + $0x10] sm:$0xff]
    %v4030 = vld [vmem:[%s10 + $0x18] sm:$0xff]
    %v4031 = vld [vmem:[#allocation5] sm:$0xff]
    %v4032 = vld [vmem:[#allocation5 + $0x8] sm:$0xff]
    %s4033 = scalar_lea.vmem %s10, 32
    %v4034 = vld [vmem:[%s4033] sm:$0xff]
    %v4035 = vld [vmem:[%s4033 + $0x8] sm:$0xff]
    %v4036 = vld [vmem:[%s4033 + $0x10] sm:$0xff]
    %v4037 = vld [vmem:[%s4033 + $0x18] sm:$0xff]
    %v4039 = vsel %vm313, %v4031, 0
    %v4042 = vsel %vm313, %v4032, 0
    %4044 = vmatprep.subr.mxu0 0.0
    %4045 = vmatpush1.msra.mxu0 %v4034
    %4046 = vmatprep.subr.mxu0 0.0
    %4047 = vmatpush1.msra.mxu0 %v4035
    %4048 = vmatprep.subr.mxu0 0.0
    %4049 = vmatpush1.msra.mxu0 %v4036
    %4050 = vmatprep.subr.mxu0 0.0
    %4051 = vmatpush1.msra.mxu0 %v4037
    %4052 = vmatprep.subr.mxu0 0.0
    %4053 = vmatpush1.msra.mxu0 0.0
    %4054 = vmatprep.subr.mxu0 0.0
    %4055 = vmatpush1.msra.mxu0 0.0
    %4056 = vmatprep.subr.mxu0 0.0
    %4057 = vmatpush1.msra.mxu0 0.0
    %4058 = vmatprep.subr.mxu0 0.0
    %4059 = vmatpush1.msra.mxu0 0.0
    %4060 = vmatprep.subr.mxu0 0.0
    %4061 = vmatpush1.msra.mxu0 0.0
    %4062 = vmatprep.subr.mxu0 0.0
    %4063 = vmatpush1.msra.mxu0 0.0
    %4064 = vmatprep.subr.mxu0 0.0
    %4065 = vmatpush1.msra.mxu0 0.0
    %4066 = vmatprep.subr.mxu0 0.0
    %4067 = vmatpush1.msra.mxu0 0.0
    %4068 = vmatprep.subr.mxu0 0.0
    %4069 = vmatpush1.msra.mxu0 0.0
    %4070 = vmatprep.subr.mxu0 0.0
    %4071 = vmatpush1.msra.mxu0 0.0
    %4072 = vmatprep.subr.mxu0 0.0
    %4073 = vmatpush1.msra.mxu0 0.0
    %4074 = vmatprep.subr.mxu0 0.0
    %4075 = vmatpush1.msra.mxu0 0.0
    %4076 = vmatprep.subr.mxu0 0.0
    %4077 = vmatpush1.msra.mxu0 0.0
    %4078 = vmatprep.subr.mxu0 0.0
    %4079 = vmatpush1.msra.mxu0 0.0
    %4080 = vmatprep.subr.mxu0 0.0
    %4081 = vmatpush1.msra.mxu0 0.0
    %4082 = vmatprep.subr.mxu0 0.0
    %4083 = vmatpush1.msra.mxu0 0.0
    %4084 = vmatprep.subr.mxu0 0.0
    %4085 = vmatpush1.msra.mxu0 0.0
    %4086 = vmatprep.subr.mxu0 0.0
    %4087 = vmatpush1.msra.mxu0 0.0
    %4088 = vmatprep.subr.mxu0 0.0
    %4089 = vmatpush1.msra.mxu0 0.0
    %4090 = vmatprep.subr.mxu0 0.0
    %4091 = vmatpush1.msra.mxu0 0.0
    %4092 = vmatprep.subr.mxu0 0.0
    %4093 = vmatpush1.msra.mxu0 0.0
    %4094 = vmatprep.subr.mxu0 0.0
    %4095 = vmatpush1.msra.mxu0 0.0
    %4096 = vmatprep.subr.mxu0 0.0
    %4097 = vmatpush1.msra.mxu0 0.0
    %4098 = vmatprep.subr.mxu0 0.0
    %4099 = vmatpush1.msra.mxu0 0.0
    %4100 = vmatprep.subr.mxu0 0.0
    %4101 = vmatpush1.msra.mxu0 0.0
    %4102 = vmatprep.subr.mxu0 0.0
    %4103 = vmatpush1.msra.mxu0 0.0
    %4104 = vmatprep.subr.mxu0 0.0
    %4105 = vmatpush1.msra.mxu0 0.0
    %4106 = vmatprep.subr.mxu0 0.0
    %4107 = vmatpush1.msra.mxu0 0.0
    %4108 = vmatprep.mubr.f32.mxu0 0.0
    %4109 = vmatmul.mubr.f32.gmra.mrb[0].mxu0 %v4039
    %v4110 = vpop.f32.mrb[0].mxu0
    %v4111 = vadd.f32 0.0, %v4110
    %v4112 = vpop.f32.mrb[0].mxu0
    %4113 = vmatprep.mubr.f32.mxu0 0.0
    %4114 = vmatmul.mubr.f32.gmra.mrb[0].mxu0 %v4042
    %v4115 = vpop.f32.mrb[0].mxu0
    %v4116 = vadd.f32 0.0, %v4115
    %v4117 = vpop.f32.mrb[0].mxu0
    %4118 = vdwg.mxu0
    %v4120 = vsel %vm313, %v4025, 0
    %v4123 = vsel %vm313, %v4026, 0
    %4125 = vmatprep.subr.mxu0 0.0
    %4126 = vmatpush1.msra.mxu0 %v4027
    %4127 = vmatprep.subr.mxu0 0.0
    %4128 = vmatpush1.msra.mxu0 %v4028
    %4129 = vmatprep.subr.mxu0 0.0
    %4130 = vmatpush1.msra.mxu0 %v4029
    %4131 = vmatprep.subr.mxu0 0.0
    %4132 = vmatpush1.msra.mxu0 %v4030
    %4133 = vmatprep.subr.mxu0 0.0
    %4134 = vmatpush1.msra.mxu0 0.0
    %4135 = vmatprep.subr.mxu0 0.0
    %4136 = vmatpush1.msra.mxu0 0.0
    %4137 = vmatprep.subr.mxu0 0.0
    %4138 = vmatpush1.msra.mxu0 0.0
    %4139 = vmatprep.subr.mxu0 0.0
    %4140 = vmatpush1.msra.mxu0 0.0
    %4141 = vmatprep.subr.mxu0 0.0
    %4142 = vmatpush1.msra.mxu0 0.0
    %4143 = vmatprep.subr.mxu0 0.0
    %4144 = vmatpush1.msra.mxu0 0.0
    %4145 = vmatprep.subr.mxu0 0.0
    %4146 = vmatpush1.msra.mxu0 0.0
    %4147 = vmatprep.subr.mxu0 0.0
    %4148 = vmatpush1.msra.mxu0 0.0
    %4149 = vmatprep.subr.mxu0 0.0
    %4150 = vmatpush1.msra.mxu0 0.0
    %4151 = vmatprep.subr.mxu0 0.0
    %4152 = vmatpush1.msra.mxu0 0.0
    %4153 = vmatprep.subr.mxu0 0.0
    %4154 = vmatpush1.msra.mxu0 0.0
    %4155 = vmatprep.subr.mxu0 0.0
    %4156 = vmatpush1.msra.mxu0 0.0
    %4157 = vmatprep.subr.mxu0 0.0
    %4158 = vmatpush1.msra.mxu0 0.0
    %4159 = vmatprep.subr.mxu0 0.0
    %4160 = vmatpush1.msra.mxu0 0.0
    %4161 = vmatprep.subr.mxu0 0.0
    %4162 = vmatpush1.msra.mxu0 0.0
    %4163 = vmatprep.subr.mxu0 0.0
    %4164 = vmatpush1.msra.mxu0 0.0
    %4165 = vmatprep.subr.mxu0 0.0
    %4166 = vmatpush1.msra.mxu0 0.0
    %4167 = vmatprep.subr.mxu0 0.0
    %4168 = vmatpush1.msra.mxu0 0.0
    %4169 = vmatprep.subr.mxu0 0.0
    %4170 = vmatpush1.msra.mxu0 0.0
    %4171 = vmatprep.subr.mxu0 0.0
    %4172 = vmatpush1.msra.mxu0 0.0
    %4173 = vmatprep.subr.mxu0 0.0
    %4174 = vmatpush1.msra.mxu0 0.0
    %4175 = vmatprep.subr.mxu0 0.0
    %4176 = vmatpush1.msra.mxu0 0.0
    %4177 = vmatprep.subr.mxu0 0.0
    %4178 = vmatpush1.msra.mxu0 0.0
    %4179 = vmatprep.subr.mxu0 0.0
    %4180 = vmatpush1.msra.mxu0 0.0
    %4181 = vmatprep.subr.mxu0 0.0
    %4182 = vmatpush1.msra.mxu0 0.0
    %4183 = vmatprep.subr.mxu0 0.0
    %4184 = vmatpush1.msra.mxu0 0.0
    %4185 = vmatprep.subr.mxu0 0.0
    %4186 = vmatpush1.msra.mxu0 0.0
    %4187 = vmatprep.subr.mxu0 0.0
    %4188 = vmatpush1.msra.mxu0 0.0
    %4189 = vmatprep.mubr.f32.mxu0 0.0
    %4190 = vmatmul.mubr.f32.gmra.mrb[0].mxu0 %v4120
    %v4191 = vpop.f32.mrb[0].mxu0
    %v4192 = vadd.f32 %v4111, %v4191
    %v4193 = vpop.f32.mrb[0].mxu0
    %4194 = vmatprep.mubr.f32.mxu0 0.0
    %4195 = vmatmul.mubr.f32.gmra.mrb[0].mxu0 %v4123
    %v4196 = vpop.f32.mrb[0].mxu0
    %v4197 = vadd.f32 %v4116, %v4196
    %v4198 = vpop.f32.mrb[0].mxu0
    %4199 = vdwg.mxu0
    %v4200 = vld [vmem:[#allocation6] sm:$0x1]
    %v4202 = vlaneseq
    %v4203 = vshrl.u32 %v4202, 7
    %v4204 = vsub.s32 0, %v4203
    %v4205 = vrot.slane %v4200, %v4204
    %v4207 = vadd.f32 %v4192, %v4205
    %v4208 = vadd.f32 %v4197, %v4205
    %v4209 = vtanh.pop %v4207
    %v4210 = vtanh.pop %v4208
    %vm4211 = vcmask 7168
    %4212 = vst.msk [vmem:[%s12] sm:$0xff] %vm4211, %v4209
    %4213 = vst.msk [vmem:[%s12 + $0x8] sm:$0xff] %vm4211, %v4210
    // Predicated region
    $region70: #{tpu_custom_call.1} parent=1 // pred_check
      _
    $region71: #{tpu_custom_call.1} parent=1 // pred_check_branch
      %4215 = sbr.rel (0) target = $region73
    $region72: #{tpu_custom_call.1} parent=1 // pred_region
      _
    $region73: #{tpu_custom_call.1} parent=1 // pred_fallthru
      _
    // Predicated region
    $region74: #{tpu_custom_call.1} parent=1 // pred_check
      _
    $region75: #{tpu_custom_call.1} parent=1 // pred_check_branch
      %4217 = sbr.rel (0) target = $region77
    $region76: #{tpu_custom_call.1} parent=1 // pred_region
      _
    $region77: #{tpu_custom_call.1} parent=1 // pred_fallthru
      _
    %4218 = vsyncpa [#allocation8], 1
    %4219 = vsyncpa [#allocation10], 1
    %4220 = vsyncpa [#allocation13], 1

</llo_original>
